<compile_context>
chip_gen: v7x
topology: tpu7x:2x2x1
jax: 0.10.0
libtpu: 0.0.40
codegen_flags: <defaults>
</compile_context>

<pallas_src>
import functools

import jax
import jax.numpy as jnp
import numpy as np
from jax import lax
from jax.experimental import pallas as pl
from jax.experimental.pallas import tpu as pltpu

TOKEN2INT = {x: i for i, x in enumerate('().ACGUBEHIMSX')}
NUM_TOKENS = len(TOKEN2INT)  # 14

# Timesteps per grid step.  16 amortizes the ~0.35us/step grid overhead and,
# with bf16 gates + single-buffered Whh, fits v7x's 64 MiB VMEM at H=1024,B=32.
# TODO(synk): on v5e/v6e (128 MiB VMEM) T_CHUNK=32 + vmem_limit ~96 MiB is
# also viable; keep 16 as the portable default.
T_CHUNK = 16


# ----------------------------------------------------------------------------
# Pallas kernel: bidirectional LSTM recurrence over precomputed input gates,
# both directions interleaved in one grid step.
#
#   gates_f_ref : (T_CHUNK, B, 4H) bf16  precomputed  x@Wih_f + b_f  (fwd time)
#   gates_b_ref : (T_CHUNK, B, 4H) bf16  precomputed  x@Wih_b + b_b  (chunk
#                                        selected in REVERSE via index_map)
#   whh_hbm_ref : (2, H, 4H) bf16 in HBM (pl.ANY); DMA'd once into whh_vmem
#   hseq_f_ref  : (T_CHUNK, B, H) bf16   forward hidden-state sequence
#   hseq_b_ref  : (T_CHUNK, B, H) bf16   backward hidden-state sequence
#   scratch     : whh_vmem (2,H,4H) bf16, DMA sem, and f32 (B,H) carries
#                 (h_f, c_f, h_b, c_b) persisted across time chunks.
#
# grid = (num_chunks,): time is a sequential recurrence ("arbitrary").
# Forward walks each chunk 0..T-1; backward walks its (reversed) chunk T-1..0.
# All time indices are compile-time constants (Python-unrolled loop).
# ----------------------------------------------------------------------------
def bilstm_recurrent_kernel(gates_f_ref, gates_b_ref, whh_hbm_ref,
                            hseq_f_ref, hseq_b_ref,
                            whh_vmem, whh_sem, hf_scr, cf_scr, hb_scr, cb_scr):
    @pl.when(pl.program_id(0) == 0)
    def _():
        # One-time weight DMA into a single resident VMEM buffer (no second
        # pipeline buffer for the constant Whh block).
        cp = pltpu.make_async_copy(whh_hbm_ref, whh_vmem, whh_sem)
        cp.start()
        cp.wait()
        hf_scr[...] = jnp.zeros_like(hf_scr)
        cf_scr[...] = jnp.zeros_like(cf_scr)
        hb_scr[...] = jnp.zeros_like(hb_scr)
        cb_scr[...] = jnp.zeros_like(cb_scr)

    whh_f = whh_vmem[0]              # (H, 4H) bf16, VMEM-resident
    whh_b = whh_vmem[1]
    T = gates_f_ref.shape[0]         # T_CHUNK (static)
    H = hf_scr.shape[-1]

    def cell(pre, c_prev):
        # PyTorch gate order: i, f, g, o
        i_g = jax.nn.sigmoid(pre[:, 0 * H:1 * H])
        f_g = jax.nn.sigmoid(pre[:, 1 * H:2 * H])
        g_g = jnp.tanh(pre[:, 2 * H:3 * H])
        o_g = jax.nn.sigmoid(pre[:, 3 * H:4 * H])
        c_new = f_g * c_prev + i_g * g_g
        h_new = o_g * jnp.tanh(c_new)
        return h_new, c_new

    h_f, c_f = hf_scr[...], cf_scr[...]
    h_b, c_b = hb_scr[...], cb_scr[...]

    # Fully unrolled with STATIC time indices per iteration (direction branch
    # hoisted: fwd reads i, bwd reads T-1-i of its reversed chunk).  The two
    # chains are independent -> MXU pushes of one hide gate math of the other.
    for i in range(T):
        t_b = T - 1 - i
        pre_f = gates_f_ref[i].astype(jnp.float32) + jnp.dot(
            h_f.astype(whh_f.dtype), whh_f, preferred_element_type=jnp.float32)
        pre_b = gates_b_ref[t_b].astype(jnp.float32) + jnp.dot(
            h_b.astype(whh_b.dtype), whh_b, preferred_element_type=jnp.float32)
        h_f, c_f = cell(pre_f, c_f)
        h_b, c_b = cell(pre_b, c_b)
        hseq_f_ref[i] = h_f.astype(hseq_f_ref.dtype)
        hseq_b_ref[t_b] = h_b.astype(hseq_b_ref.dtype)

    hf_scr[...], cf_scr[...] = h_f, c_f
    hb_scr[...], cb_scr[...] = h_b, c_b


def bilstm_layer(x_or_pair, fwd_params, bwd_params):
    """One bidirectional LSTM layer.

    x_or_pair: either (L, B, Din) time-major input (first layer), or a tuple
               (h_fwd, h_bwd) of (L, B, H_prev) bf16 arrays from the previous
               bidirectional layer (concat avoided; projection split instead).
    each params tuple: (wih (Din, 4H), whh (H, 4H), b (4H,)), gate order i,f,g,o
    returns (h_fwd, h_bwd), each (L, B, H) bf16.
    """
    wih_f, whh_f, b_f = fwd_params
    wih_b, whh_b, b_b = bwd_params
    H = whh_f.shape[0]

    if isinstance(x_or_pair, tuple):
        hp_f, hp_b = x_or_pair
        L, B, Hp = hp_f.shape
        hp_f2d = hp_f.reshape(L * B, Hp)
        hp_b2d = hp_b.reshape(L * B, Hp)

        def proj(wih, b):
            # Equivalent to concat([h_f, h_b], -1) @ wih, without the concat.
            return (jnp.dot(hp_f2d, wih[:Hp].astype(jnp.bfloat16),
                            preferred_element_type=jnp.float32)
                    + jnp.dot(hp_b2d, wih[Hp:].astype(jnp.bfloat16),
                              preferred_element_type=jnp.float32)
                    + b)
    else:
        x_tm = x_or_pair
        L, B, Din = x_tm.shape
        x2d = x_tm.reshape(L * B, Din).astype(jnp.bfloat16)

        def proj(wih, b):
            # Hoisted input projection: one big bf16 MXU GEMM with M = L*B.
            return jnp.dot(x2d, wih.astype(jnp.bfloat16),
                           preferred_element_type=jnp.float32) + b

    L_pad = ((L + T_CHUNK - 1) // T_CHUNK) * T_CHUNK
    nc = L_pad // T_CHUNK

    def pad_gates(g):
        # bf16 gate stream (dominant HBM/VMEM tenant -> half the f32 bytes).
        g = g.reshape(L, B, 4 * H).astype(jnp.bfloat16)
        if L_pad > L:
            # Padding at the END.  The backward direction hits the pad first:
            # with zero pre-activations and h=c=0, the cell keeps h=c=0
            # (sigmoid(0)*0 terms), so its state is intact when it reaches the
            # real data.  The forward direction produces garbage h on padded
            # steps, but those outputs are sliced off and its state discarded.
            g = jnp.concatenate(
                [g, jnp.zeros((L_pad - L, B, 4 * H), g.dtype)], axis=0)
        return g

    gates_f = pad_gates(proj(wih_f, b_f))                     # (Lp, B, 4H) bf16
    gates_b = pad_gates(proj(wih_b, b_b))                     # (Lp, B, 4H) bf16
    whh = jnp.stack([whh_f, whh_b], axis=0).astype(jnp.bfloat16)  # (2, H, 4H)

    hseq_f, hseq_b = pl.pallas_call(
        bilstm_recurrent_kernel,
        out_shape=(jax.ShapeDtypeStruct((L_pad, B, H), jnp.bfloat16),
                   jax.ShapeDtypeStruct((L_pad, B, H), jnp.bfloat16)),
        grid_spec=pltpu.PrefetchScalarGridSpec(
            num_scalar_prefetch=0,
            grid=(nc,),
            in_specs=[
                # forward gates: chunk c
                pl.BlockSpec((T_CHUNK, B, 4 * H), lambda c: (c, 0, 0)),
                # backward gates: chunk nc-1-c (time reversal via index_map)
                pl.BlockSpec((T_CHUNK, B, 4 * H), lambda c: (nc - 1 - c, 0, 0)),
                # recurrent weights stay in HBM; DMA'd once into VMEM scratch
                pl.BlockSpec(memory_space=pl.ANY),
            ],
            out_specs=[
                pl.BlockSpec((T_CHUNK, B, H), lambda c: (c, 0, 0)),
                pl.BlockSpec((T_CHUNK, B, H), lambda c: (nc - 1 - c, 0, 0)),
            ],
            scratch_shapes=[
                pltpu.VMEM((2, H, 4 * H), jnp.bfloat16),   # resident Whh
                pltpu.SemaphoreType.DMA(()),               # weight-DMA sem
                pltpu.VMEM((B, H), jnp.float32),           # h_f
                pltpu.VMEM((B, H), jnp.float32),           # c_f
                pltpu.VMEM((B, H), jnp.float32),           # h_b
                pltpu.VMEM((B, H), jnp.float32),           # c_b
            ],
        ),
        compiler_params=pltpu.CompilerParams(
            # single grid axis = sequential time recurrence
            dimension_semantics=("arbitrary",),
            # Safe on all gens (v7x physical VMEM is 64 MiB).
            # TODO(synk): on v5e/v6e raise to ~96 MiB together with T_CHUNK=32.
            vmem_limit_bytes=48 * 1024 * 1024,
        ),
    )(gates_f, gates_b, whh)

    return hseq_f[:L], hseq_b[:L]        # each (L, B, H) bf16


# ----------------------------------------------------------------------------
# Model forward (glue + dense GEMMs in plain JAX, recurrence in Pallas)
# ----------------------------------------------------------------------------
def model_forward(seqs, params, *, pred_len, hidden_layers):
    # seqs: (B, L, 5); columns 0:3 are integer token ids, 3:5 are floats
    tok = seqs[:, :, 0:3].astype(jnp.int32)
    emb = params["embedding"][tok]                            # (B, L, 3, E)
    B, L = tok.shape[0], tok.shape[1]
    x = jnp.concatenate([emb.reshape(B, L, -1), seqs[:, :, 3:5]], axis=2)

    h = jnp.transpose(x, (1, 0, 2))                           # (L, B, D)
    for layer in range(hidden_layers):
        lp = params["lstm"][layer]
        h = bilstm_layer(h, lp["fwd"], lp["bwd"])             # (h_f, h_b) bf16
        # TODO(synk): nn.LSTM inter-layer dropout is training-only; identity here.

    h_f, h_b = h
    H = h_f.shape[-1]
    out_f = jnp.transpose(h_f, (1, 0, 2))[:, :pred_len].astype(jnp.float32)
    out_b = jnp.transpose(h_b, (1, 0, 2))[:, :pred_len].astype(jnp.float32)
    # Final 5-wide linear in plain jnp (lane width 5 would force masked stores
    # in a hand-rolled kernel); split to consume (h_f, h_b) without a concat.
    W = params["lin_w_t"]                                     # (2H, 5)
    y = (out_f.reshape(-1, H) @ W[:H]
         + out_b.reshape(-1, H) @ W[H:]
         + params["lin_b"])
    return y.reshape(B, pred_len, 5)


# ----------------------------------------------------------------------------
# Pure-JAX reference (f32 everywhere) for correctness check
# ----------------------------------------------------------------------------
def ref_lstm_dir(x_tm, wih, whh, b):
    L, B, _ = x_tm.shape
    H = whh.shape[0]

    def step(carry, x):
        h, c = carry
        pre = x @ wih + h @ whh + b
        i = jax.nn.sigmoid(pre[:, 0 * H:1 * H])
        f = jax.nn.sigmoid(pre[:, 1 * H:2 * H])
        g = jnp.tanh(pre[:, 2 * H:3 * H])
        o = jax.nn.sigmoid(pre[:, 3 * H:4 * H])
        c = f * c + i * g
        h = o * jnp.tanh(c)
        return (h, c), h

    (_, _), hs = lax.scan(
        step,
        (jnp.zeros((B, H), jnp.float32), jnp.zeros((B, H), jnp.float32)),
        x_tm)
    return hs


def ref_forward(seqs, params, *, pred_len, hidden_layers):
    tok = seqs[:, :, 0:3].astype(jnp.int32)
    emb = params["embedding"][tok]
    B, L = tok.shape[0], tok.shape[1]
    x = jnp.concatenate([emb.reshape(B, L, -1), seqs[:, :, 3:5]], axis=2)
    h = jnp.transpose(x, (1, 0, 2))
    for layer in range(hidden_layers):
        lp = params["lstm"][layer]
        h_f = ref_lstm_dir(h, *lp["fwd"])
        h_b = ref_lstm_dir(h[::-1], *lp["bwd"])[::-1]
        h = jnp.concatenate([h_f, h_b], axis=-1)
    out = jnp.transpose(h, (1, 0, 2))[:, :pred_len, :]
    y = out.reshape(-1, out.shape[-1]) @ params["lin_w_t"] + params["lin_b"]
    return y.reshape(B, pred_len, 5)


# ----------------------------------------------------------------------------
# Deterministic parameter construction (PyTorch gate order i, f, g, o)
# ----------------------------------------------------------------------------
def init_params(key, *, embed_dim, hidden_dim, hidden_layers):
    keys = jax.random.split(key, 3 + hidden_layers * 6)
    it = iter(keys)
    params = {}
    params["embedding"] = jax.random.normal(
        next(it), (NUM_TOKENS, embed_dim), jnp.float32)

    H = hidden_dim
    lstm_params = []
    in_dim = embed_dim * 3 + 2
    for _layer in range(hidden_layers):
        scale = 1.0 / np.sqrt(H)
        layer_p = {}
        for dname in ("fwd", "bwd"):
            wih = jax.random.uniform(next(it), (in_dim, 4 * H),
                                     jnp.float32, -scale, scale)
            whh = jax.random.uniform(next(it), (H, 4 * H),
                                     jnp.float32, -scale, scale)
            b = jax.random.uniform(next(it), (4 * H,),
                                   jnp.float32, -scale, scale)  # b_ih + b_hh
            layer_p[dname] = (wih, whh, b)
        lstm_params.append(layer_p)
        in_dim = 2 * H
    params["lstm"] = lstm_params

    params["lin_w_t"] = jax.random.uniform(
        next(it), (2 * H, 5), jnp.float32, -0.1, 0.1)
    params["lin_b"] = jax.random.uniform(
        next(it), (1, 5), jnp.float32, -0.1, 0.1)
    return params


if __name__ == "__main__":
    # Small shapes consistent with the module's forward pass
    B = 2            # batch
    SEQ_LEN = 8      # sequence length (module default 107)
    PRED_LEN = 6     # truncation length (module default 68)
    EMBED_DIM = 16   # embedding dim (module default 100)
    HIDDEN_DIM = 32  # LSTM hidden dim (module default 1024)
    HIDDEN_LAYERS = 2

    key = jax.random.PRNGKey(0)
    k_tok, k_feat, k_param = jax.random.split(key, 3)

    tokens = jax.random.randint(k_tok, (B, SEQ_LEN, 3), 0, NUM_TOKENS)
    feats = jax.random.normal(k_feat, (B, SEQ_LEN, 2), jnp.float32)
    seqs = jnp.concatenate([tokens.astype(jnp.float32), feats], axis=2)

    params = init_params(k_param, embed_dim=EMBED_DIM, hidden_dim=HIDDEN_DIM,
                         hidden_layers=HIDDEN_LAYERS)

    fwd = jax.jit(functools.partial(
        model_forward, pred_len=PRED_LEN, hidden_layers=HIDDEN_LAYERS))
    out = jax.block_until_ready(fwd(seqs, params))
    assert out.shape == (B, PRED_LEN, 5), out.shape

    ref = jax.block_until_ready(
        ref_forward(seqs, params, pred_len=PRED_LEN,
                    hidden_layers=HIDDEN_LAYERS))
    # bf16 projection / gate stream / recurrent weights / inter-layer hseq in
    # the kernel path vs an all-f32 reference -> looser tolerance.
    np.testing.assert_allclose(np.asarray(out), np.asarray(ref),
                               rtol=4e-2, atol=4e-2)

    print("KERNEL_OK")
</pallas_src>

<mosaic_0001>
module attributes {stable_mosaic.version = 11 : i64} {
  func.func @bilstm_recurrent_kernel(%arg0: i32, %arg1: memref<16x2x128xbf16, #tpu.memory_space<vmem>>, %arg2: memref<16x2x128xbf16, #tpu.memory_space<vmem>>, %arg3: memref<2x32x128xbf16, #tpu.memory_space<any>>, %arg4: memref<16x2x32xbf16, #tpu.memory_space<vmem>>, %arg5: memref<16x2x32xbf16, #tpu.memory_space<vmem>>, %arg6: memref<2x32x128xbf16, #tpu.memory_space<vmem>>, %arg7: memref<!tpu.dma_semaphore, #tpu.memory_space<semaphore_mem>>, %arg8: memref<2x32xf32, #tpu.memory_space<vmem>>, %arg9: memref<2x32xf32, #tpu.memory_space<vmem>>, %arg10: memref<2x32xf32, #tpu.memory_space<vmem>>, %arg11: memref<2x32xf32, #tpu.memory_space<vmem>>) attributes {dimension_semantics = [#tpu.dimension_semantics<arbitrary>], iteration_bounds = array<i64: 1>, scalar_prefetch = 0 : i64, scratch_operands = 6 : i64, tpu.core_type = #tpu.core_type<tc>, window_params = [{transform_indices = @transform_0, window_bounds = array<i64: 16, 2, 128>}, {transform_indices = @transform_1, window_bounds = array<i64: 16, 2, 128>}, {}, {transform_indices = @transform_3, window_bounds = array<i64: 16, 2, 32>}, {transform_indices = @transform_4, window_bounds = array<i64: 16, 2, 32>}]} {
    %c0_i32 = arith.constant 0 : i32
    %0 = arith.cmpi eq, %arg0, %c0_i32 : i32
    %1 = arith.extui %0 : i1 to i32
    %c0_i32_0 = arith.constant 0 : i32
    %2 = arith.cmpi ne, %1, %c0_i32_0 : i32
    scf.if %2 {
      tpu.enqueue_dma source(%arg3 : memref<2x32x128xbf16, #tpu.memory_space<any>>) target(%arg6 : memref<2x32x128xbf16, #tpu.memory_space<vmem>>) target_semaphore(%arg7 : memref<!tpu.dma_semaphore, #tpu.memory_space<semaphore_mem>>)
      tpu.wait_dma2 semaphore(%arg7 : memref<!tpu.dma_semaphore, #tpu.memory_space<semaphore_mem>>) src(%arg3 : memref<2x32x128xbf16, #tpu.memory_space<any>>) dst(%arg6 : memref<2x32x128xbf16, #tpu.memory_space<vmem>>)
      %cst_326 = arith.constant 0.000000e+00 : f32
      %1135 = vector.broadcast %cst_326 : f32 to vector<2x32xf32>
      %c0_327 = arith.constant 0 : index
      %c0_328 = arith.constant 0 : index
      %1136 = vector.load %arg8[%c0_327, %c0_328] : memref<2x32xf32, #tpu.memory_space<vmem>>, vector<2x32xf32>
      tpu.vector_store %arg8[%c0_327, %c0_328], %1135 {strides = array<i32>} : memref<2x32xf32, #tpu.memory_space<vmem>>, vector<2x32xf32>,
      %cst_329 = arith.constant 0.000000e+00 : f32
      %1137 = vector.broadcast %cst_329 : f32 to vector<2x32xf32>
      %c0_330 = arith.constant 0 : index
      %c0_331 = arith.constant 0 : index
      %1138 = vector.load %arg9[%c0_330, %c0_331] : memref<2x32xf32, #tpu.memory_space<vmem>>, vector<2x32xf32>
      tpu.vector_store %arg9[%c0_330, %c0_331], %1137 {strides = array<i32>} : memref<2x32xf32, #tpu.memory_space<vmem>>, vector<2x32xf32>,
      %cst_332 = arith.constant 0.000000e+00 : f32
      %1139 = vector.broadcast %cst_332 : f32 to vector<2x32xf32>
      %c0_333 = arith.constant 0 : index
      %c0_334 = arith.constant 0 : index
      %1140 = vector.load %arg10[%c0_333, %c0_334] : memref<2x32xf32, #tpu.memory_space<vmem>>, vector<2x32xf32>
      tpu.vector_store %arg10[%c0_333, %c0_334], %1139 {strides = array<i32>} : memref<2x32xf32, #tpu.memory_space<vmem>>, vector<2x32xf32>,
      %cst_335 = arith.constant 0.000000e+00 : f32
      %1141 = vector.broadcast %cst_335 : f32 to vector<2x32xf32>
      %c0_336 = arith.constant 0 : index
      %c0_337 = arith.constant 0 : index
      %1142 = vector.load %arg11[%c0_336, %c0_337] : memref<2x32xf32, #tpu.memory_space<vmem>>, vector<2x32xf32>
      tpu.vector_store %arg11[%c0_336, %c0_337], %1141 {strides = array<i32>} : memref<2x32xf32, #tpu.memory_space<vmem>>, vector<2x32xf32>,
    } else {
    }
    %c0 = arith.constant 0 : index
    %c0_1 = arith.constant 0 : index
    %c0_2 = arith.constant 0 : index
    %3 = vector.load %arg6[%c0, %c0_1, %c0_2] : memref<2x32x128xbf16, #tpu.memory_space<vmem>>, vector<1x32x128xbf16>
    %4 = vector.shape_cast %3 : vector<1x32x128xbf16> to vector<32x128xbf16>
    %c1 = arith.constant 1 : index
    %c0_3 = arith.constant 0 : index
    %c0_4 = arith.constant 0 : index
    %5 = vector.load %arg6[%c1, %c0_3, %c0_4] : memref<2x32x128xbf16, #tpu.memory_space<vmem>>, vector<1x32x128xbf16>
    %6 = vector.shape_cast %5 : vector<1x32x128xbf16> to vector<32x128xbf16>
    %c0_5 = arith.constant 0 : index
    %c0_6 = arith.constant 0 : index
    %7 = vector.load %arg8[%c0_5, %c0_6] : memref<2x32xf32, #tpu.memory_space<vmem>>, vector<2x32xf32>
    %c0_7 = arith.constant 0 : index
    %c0_8 = arith.constant 0 : index
    %8 = vector.load %arg9[%c0_7, %c0_8] : memref<2x32xf32, #tpu.memory_space<vmem>>, vector<2x32xf32>
    %c0_9 = arith.constant 0 : index
    %c0_10 = arith.constant 0 : index
    %9 = vector.load %arg10[%c0_9, %c0_10] : memref<2x32xf32, #tpu.memory_space<vmem>>, vector<2x32xf32>
    %c0_11 = arith.constant 0 : index
    %c0_12 = arith.constant 0 : index
    %10 = vector.load %arg11[%c0_11, %c0_12] : memref<2x32xf32, #tpu.memory_space<vmem>>, vector<2x32xf32>
    %c0_13 = arith.constant 0 : index
    %c0_14 = arith.constant 0 : index
    %c0_15 = arith.constant 0 : index
    %11 = vector.load %arg1[%c0_13, %c0_14, %c0_15] : memref<16x2x128xbf16, #tpu.memory_space<vmem>>, vector<1x2x128xbf16>
    %12 = vector.shape_cast %11 : vector<1x2x128xbf16> to vector<2x128xbf16>
    %13 = arith.extf %12 : vector<2x128xbf16> to vector<2x128xf32>
    %14 = arith.truncf %7 : vector<2x32xf32> to vector<2x32xbf16>
    %cst = arith.constant dense<0.000000e+00> : vector<2x128xf32>
    %15 = tpu.matmul %14, %4, %cst {dimension_numbers = #tpu.dot_dimension_numbers<[1], [0], [0], [1], [0, 0, 1, 1], [], []>} : vector<2x32xbf16>, vector<32x128xbf16>, vector<2x128xf32> -> vector<2x128xf32>
    %16 = arith.addf %13, %15 : vector<2x128xf32>
    %c15 = arith.constant 15 : index
    %c0_16 = arith.constant 0 : index
    %c0_17 = arith.constant 0 : index
    %17 = vector.load %arg2[%c15, %c0_16, %c0_17] : memref<16x2x128xbf16, #tpu.memory_space<vmem>>, vector<1x2x128xbf16>
    %18 = vector.shape_cast %17 : vector<1x2x128xbf16> to vector<2x128xbf16>
    %19 = arith.extf %18 : vector<2x128xbf16> to vector<2x128xf32>
    %20 = arith.truncf %9 : vector<2x32xf32> to vector<2x32xbf16>
    %cst_18 = arith.constant dense<0.000000e+00> : vector<2x128xf32>
    %21 = tpu.matmul %20, %6, %cst_18 {dimension_numbers = #tpu.dot_dimension_numbers<[1], [0], [0], [1], [0, 0, 1, 1], [], []>} : vector<2x32xbf16>, vector<32x128xbf16>, vector<2x128xf32> -> vector<2x128xf32>
    %22 = arith.addf %19, %21 : vector<2x128xf32>
    %23 = vector.extract_strided_slice %16 {offsets = [0, 0], sizes = [2, 32], strides = [1, 1]} : vector<2x128xf32> to vector<2x32xf32>
    %24 = arith.negf %23 : vector<2x32xf32>
    %25 = math.exp %24 : vector<2x32xf32>
    %cst_19 = arith.constant 1.000000e+00 : f32
    %26 = vector.broadcast %cst_19 : f32 to vector<2x32xf32>
    %27 = arith.addf %26, %25 : vector<2x32xf32>
    %28 = arith.divf %26, %27 : vector<2x32xf32>
    %29 = vector.extract_strided_slice %16 {offsets = [0, 32], sizes = [2, 32], strides = [1, 1]} : vector<2x128xf32> to vector<2x32xf32>
    %30 = arith.negf %29 : vector<2x32xf32>
    %31 = math.exp %30 : vector<2x32xf32>
    %cst_20 = arith.constant 1.000000e+00 : f32
    %32 = vector.broadcast %cst_20 : f32 to vector<2x32xf32>
    %33 = arith.addf %32, %31 : vector<2x32xf32>
    %34 = arith.divf %32, %33 : vector<2x32xf32>
    %35 = vector.extract_strided_slice %16 {offsets = [0, 64], sizes = [2, 32], strides = [1, 1]} : vector<2x128xf32> to vector<2x32xf32>
    %36 = math.tanh %35 : vector<2x32xf32>
    %37 = vector.extract_strided_slice %16 {offsets = [0, 96], sizes = [2, 32], strides = [1, 1]} : vector<2x128xf32> to vector<2x32xf32>
    %38 = arith.negf %37 : vector<2x32xf32>
    %39 = math.exp %38 : vector<2x32xf32>
    %cst_21 = arith.constant 1.000000e+00 : f32
    %40 = vector.broadcast %cst_21 : f32 to vector<2x32xf32>
    %41 = arith.addf %40, %39 : vector<2x32xf32>
    %42 = arith.divf %40, %41 : vector<2x32xf32>
    %43 = arith.mulf %34, %8 : vector<2x32xf32>
    %44 = arith.mulf %28, %36 : vector<2x32xf32>
    %45 = arith.addf %43, %44 : vector<2x32xf32>
    %46 = math.tanh %45 : vector<2x32xf32>
    %47 = arith.mulf %42, %46 : vector<2x32xf32>
    %48 = vector.extract_strided_slice %22 {offsets = [0, 0], sizes = [2, 32], strides = [1, 1]} : vector<2x128xf32> to vector<2x32xf32>
    %49 = arith.negf %48 : vector<2x32xf32>
    %50 = math.exp %49 : vector<2x32xf32>
    %cst_22 = arith.constant 1.000000e+00 : f32
    %51 = vector.broadcast %cst_22 : f32 to vector<2x32xf32>
    %52 = arith.addf %51, %50 : vector<2x32xf32>
    %53 = arith.divf %51, %52 : vector<2x32xf32>
    %54 = vector.extract_strided_slice %22 {offsets = [0, 32], sizes = [2, 32], strides = [1, 1]} : vector<2x128xf32> to vector<2x32xf32>
    %55 = arith.negf %54 : vector<2x32xf32>
    %56 = math.exp %55 : vector<2x32xf32>
    %cst_23 = arith.constant 1.000000e+00 : f32
    %57 = vector.broadcast %cst_23 : f32 to vector<2x32xf32>
    %58 = arith.addf %57, %56 : vector<2x32xf32>
    %59 = arith.divf %57, %58 : vector<2x32xf32>
    %60 = vector.extract_strided_slice %22 {offsets = [0, 64], sizes = [2, 32], strides = [1, 1]} : vector<2x128xf32> to vector<2x32xf32>
    %61 = math.tanh %60 : vector<2x32xf32>
    %62 = vector.extract_strided_slice %22 {offsets = [0, 96], sizes = [2, 32], strides = [1, 1]} : vector<2x128xf32> to vector<2x32xf32>
    %63 = arith.negf %62 : vector<2x32xf32>
    %64 = math.exp %63 : vector<2x32xf32>
    %cst_24 = arith.constant 1.000000e+00 : f32
    %65 = vector.broadcast %cst_24 : f32 to vector<2x32xf32>
    %66 = arith.addf %65, %64 : vector<2x32xf32>
    %67 = arith.divf %65, %66 : vector<2x32xf32>
    %68 = arith.mulf %59, %10 : vector<2x32xf32>
    %69 = arith.mulf %53, %61 : vector<2x32xf32>
    %70 = arith.addf %68, %69 : vector<2x32xf32>
    %71 = math.tanh %70 : vector<2x32xf32>
    %72 = arith.mulf %67, %71 : vector<2x32xf32>
    %73 = arith.truncf %47 : vector<2x32xf32> to vector<2x32xbf16>
    %c0_25 = arith.constant 0 : index
    %c0_26 = arith.constant 0 : index
    %c0_27 = arith.constant 0 : index
    %74 = vector.load %arg4[%c0_25, %c0_26, %c0_27] : memref<16x2x32xbf16, #tpu.memory_space<vmem>>, vector<1x2x32xbf16>
    %75 = vector.shape_cast %74 : vector<1x2x32xbf16> to vector<2x32xbf16>
    %76 = vector.shape_cast %73 : vector<2x32xbf16> to vector<1x2x32xbf16>
    tpu.vector_store %arg4[%c0_25, %c0_26, %c0_27], %76 {strides = array<i32>} : memref<16x2x32xbf16, #tpu.memory_space<vmem>>, vector<1x2x32xbf16>,
    %77 = arith.truncf %72 : vector<2x32xf32> to vector<2x32xbf16>
    %c15_28 = arith.constant 15 : index
    %c0_29 = arith.constant 0 : index
    %c0_30 = arith.constant 0 : index
    %78 = vector.load %arg5[%c15_28, %c0_29, %c0_30] : memref<16x2x32xbf16, #tpu.memory_space<vmem>>, vector<1x2x32xbf16>
    %79 = vector.shape_cast %78 : vector<1x2x32xbf16> to vector<2x32xbf16>
    %80 = vector.shape_cast %77 : vector<2x32xbf16> to vector<1x2x32xbf16>
    tpu.vector_store %arg5[%c15_28, %c0_29, %c0_30], %80 {strides = array<i32>} : memref<16x2x32xbf16, #tpu.memory_space<vmem>>, vector<1x2x32xbf16>,
    %c1_31 = arith.constant 1 : index
    %c0_32 = arith.constant 0 : index
    %c0_33 = arith.constant 0 : index
    %81 = vector.load %arg1[%c1_31, %c0_32, %c0_33] : memref<16x2x128xbf16, #tpu.memory_space<vmem>>, vector<1x2x128xbf16>
    %82 = vector.shape_cast %81 : vector<1x2x128xbf16> to vector<2x128xbf16>
    %83 = arith.extf %82 : vector<2x128xbf16> to vector<2x128xf32>
    %84 = arith.truncf %47 : vector<2x32xf32> to vector<2x32xbf16>
    %cst_34 = arith.constant dense<0.000000e+00> : vector<2x128xf32>
    %85 = tpu.matmul %84, %4, %cst_34 {dimension_numbers = #tpu.dot_dimension_numbers<[1], [0], [0], [1], [0, 0, 1, 1], [], []>} : vector<2x32xbf16>, vector<32x128xbf16>, vector<2x128xf32> -> vector<2x128xf32>
    %86 = arith.addf %83, %85 : vector<2x128xf32>
    %c14 = arith.constant 14 : index
    %c0_35 = arith.constant 0 : index
    %c0_36 = arith.constant 0 : index
    %87 = vector.load %arg2[%c14, %c0_35, %c0_36] : memref<16x2x128xbf16, #tpu.memory_space<vmem>>, vector<1x2x128xbf16>
    %88 = vector.shape_cast %87 : vector<1x2x128xbf16> to vector<2x128xbf16>
    %89 = arith.extf %88 : vector<2x128xbf16> to vector<2x128xf32>
    %90 = arith.truncf %72 : vector<2x32xf32> to vector<2x32xbf16>
    %cst_37 = arith.constant dense<0.000000e+00> : vector<2x128xf32>
    %91 = tpu.matmul %90, %6, %cst_37 {dimension_numbers = #tpu.dot_dimension_numbers<[1], [0], [0], [1], [0, 0, 1, 1], [], []>} : vector<2x32xbf16>, vector<32x128xbf16>, vector<2x128xf32> -> vector<2x128xf32>
    %92 = arith.addf %89, %91 : vector<2x128xf32>
    %93 = vector.extract_strided_slice %86 {offsets = [0, 0], sizes = [2, 32], strides = [1, 1]} : vector<2x128xf32> to vector<2x32xf32>
    %94 = arith.negf %93 : vector<2x32xf32>
    %95 = math.exp %94 : vector<2x32xf32>
    %cst_38 = arith.constant 1.000000e+00 : f32
    %96 = vector.broadcast %cst_38 : f32 to vector<2x32xf32>
    %97 = arith.addf %96, %95 : vector<2x32xf32>
    %98 = arith.divf %96, %97 : vector<2x32xf32>
    %99 = vector.extract_strided_slice %86 {offsets = [0, 32], sizes = [2, 32], strides = [1, 1]} : vector<2x128xf32> to vector<2x32xf32>
    %100 = arith.negf %99 : vector<2x32xf32>
    %101 = math.exp %100 : vector<2x32xf32>
    %cst_39 = arith.constant 1.000000e+00 : f32
    %102 = vector.broadcast %cst_39 : f32 to vector<2x32xf32>
    %103 = arith.addf %102, %101 : vector<2x32xf32>
    %104 = arith.divf %102, %103 : vector<2x32xf32>
    %105 = vector.extract_strided_slice %86 {offsets = [0, 64], sizes = [2, 32], strides = [1, 1]} : vector<2x128xf32> to vector<2x32xf32>
    %106 = math.tanh %105 : vector<2x32xf32>
    %107 = vector.extract_strided_slice %86 {offsets = [0, 96], sizes = [2, 32], strides = [1, 1]} : vector<2x128xf32> to vector<2x32xf32>
    %108 = arith.negf %107 : vector<2x32xf32>
    %109 = math.exp %108 : vector<2x32xf32>
    %cst_40 = arith.constant 1.000000e+00 : f32
    %110 = vector.broadcast %cst_40 : f32 to vector<2x32xf32>
    %111 = arith.addf %110, %109 : vector<2x32xf32>
    %112 = arith.divf %110, %111 : vector<2x32xf32>
    %113 = arith.mulf %104, %45 : vector<2x32xf32>
    %114 = arith.mulf %98, %106 : vector<2x32xf32>
    %115 = arith.addf %113, %114 : vector<2x32xf32>
    %116 = math.tanh %115 : vector<2x32xf32>
    %117 = arith.mulf %112, %116 : vector<2x32xf32>
    %118 = vector.extract_strided_slice %92 {offsets = [0, 0], sizes = [2, 32], strides = [1, 1]} : vector<2x128xf32> to vector<2x32xf32>
    %119 = arith.negf %118 : vector<2x32xf32>
    %120 = math.exp %119 : vector<2x32xf32>
    %cst_41 = arith.constant 1.000000e+00 : f32
    %121 = vector.broadcast %cst_41 : f32 to vector<2x32xf32>
    %122 = arith.addf %121, %120 : vector<2x32xf32>
    %123 = arith.divf %121, %122 : vector<2x32xf32>
    %124 = vector.extract_strided_slice %92 {offsets = [0, 32], sizes = [2, 32], strides = [1, 1]} : vector<2x128xf32> to vector<2x32xf32>
    %125 = arith.negf %124 : vector<2x32xf32>
    %126 = math.exp %125 : vector<2x32xf32>
    %cst_42 = arith.constant 1.000000e+00 : f32
    %127 = vector.broadcast %cst_42 : f32 to vector<2x32xf32>
    %128 = arith.addf %127, %126 : vector<2x32xf32>
    %129 = arith.divf %127, %128 : vector<2x32xf32>
    %130 = vector.extract_strided_slice %92 {offsets = [0, 64], sizes = [2, 32], strides = [1, 1]} : vector<2x128xf32> to vector<2x32xf32>
    %131 = math.tanh %130 : vector<2x32xf32>
    %132 = vector.extract_strided_slice %92 {offsets = [0, 96], sizes = [2, 32], strides = [1, 1]} : vector<2x128xf32> to vector<2x32xf32>
    %133 = arith.negf %132 : vector<2x32xf32>
    %134 = math.exp %133 : vector<2x32xf32>
    %cst_43 = arith.constant 1.000000e+00 : f32
    %135 = vector.broadcast %cst_43 : f32 to vector<2x32xf32>
    %136 = arith.addf %135, %134 : vector<2x32xf32>
    %137 = arith.divf %135, %136 : vector<2x32xf32>
    %138 = arith.mulf %129, %70 : vector<2x32xf32>
    %139 = arith.mulf %123, %131 : vector<2x32xf32>
    %140 = arith.addf %138, %139 : vector<2x32xf32>
    %141 = math.tanh %140 : vector<2x32xf32>
    %142 = arith.mulf %137, %141 : vector<2x32xf32>
    %143 = arith.truncf %117 : vector<2x32xf32> to vector<2x32xbf16>
    %c1_44 = arith.constant 1 : index
    %c0_45 = arith.constant 0 : index
    %c0_46 = arith.constant 0 : index
    %144 = vector.load %arg4[%c1_44, %c0_45, %c0_46] : memref<16x2x32xbf16, #tpu.memory_space<vmem>>, vector<1x2x32xbf16>
    %145 = vector.shape_cast %144 : vector<1x2x32xbf16> to vector<2x32xbf16>
    %146 = vector.shape_cast %143 : vector<2x32xbf16> to vector<1x2x32xbf16>
    tpu.vector_store %arg4[%c1_44, %c0_45, %c0_46], %146 {strides = array<i32>} : memref<16x2x32xbf16, #tpu.memory_space<vmem>>, vector<1x2x32xbf16>,
    %147 = arith.truncf %142 : vector<2x32xf32> to vector<2x32xbf16>
    %c14_47 = arith.constant 14 : index
    %c0_48 = arith.constant 0 : index
    %c0_49 = arith.constant 0 : index
    %148 = vector.load %arg5[%c14_47, %c0_48, %c0_49] : memref<16x2x32xbf16, #tpu.memory_space<vmem>>, vector<1x2x32xbf16>
    %149 = vector.shape_cast %148 : vector<1x2x32xbf16> to vector<2x32xbf16>
    %150 = vector.shape_cast %147 : vector<2x32xbf16> to vector<1x2x32xbf16>
    tpu.vector_store %arg5[%c14_47, %c0_48, %c0_49], %150 {strides = array<i32>} : memref<16x2x32xbf16, #tpu.memory_space<vmem>>, vector<1x2x32xbf16>,
    %c2 = arith.constant 2 : index
    %c0_50 = arith.constant 0 : index
    %c0_51 = arith.constant 0 : index
    %151 = vector.load %arg1[%c2, %c0_50, %c0_51] : memref<16x2x128xbf16, #tpu.memory_space<vmem>>, vector<1x2x128xbf16>
    %152 = vector.shape_cast %151 : vector<1x2x128xbf16> to vector<2x128xbf16>
    %153 = arith.extf %152 : vector<2x128xbf16> to vector<2x128xf32>
    %154 = arith.truncf %117 : vector<2x32xf32> to vector<2x32xbf16>
    %cst_52 = arith.constant dense<0.000000e+00> : vector<2x128xf32>
    %155 = tpu.matmul %154, %4, %cst_52 {dimension_numbers = #tpu.dot_dimension_numbers<[1], [0], [0], [1], [0, 0, 1, 1], [], []>} : vector<2x32xbf16>, vector<32x128xbf16>, vector<2x128xf32> -> vector<2x128xf32>
    %156 = arith.addf %153, %155 : vector<2x128xf32>
    %c13 = arith.constant 13 : index
    %c0_53 = arith.constant 0 : index
    %c0_54 = arith.constant 0 : index
    %157 = vector.load %arg2[%c13, %c0_53, %c0_54] : memref<16x2x128xbf16, #tpu.memory_space<vmem>>, vector<1x2x128xbf16>
    %158 = vector.shape_cast %157 : vector<1x2x128xbf16> to vector<2x128xbf16>
    %159 = arith.extf %158 : vector<2x128xbf16> to vector<2x128xf32>
    %160 = arith.truncf %142 : vector<2x32xf32> to vector<2x32xbf16>
    %cst_55 = arith.constant dense<0.000000e+00> : vector<2x128xf32>
    %161 = tpu.matmul %160, %6, %cst_55 {dimension_numbers = #tpu.dot_dimension_numbers<[1], [0], [0], [1], [0, 0, 1, 1], [], []>} : vector<2x32xbf16>, vector<32x128xbf16>, vector<2x128xf32> -> vector<2x128xf32>
    %162 = arith.addf %159, %161 : vector<2x128xf32>
    %163 = vector.extract_strided_slice %156 {offsets = [0, 0], sizes = [2, 32], strides = [1, 1]} : vector<2x128xf32> to vector<2x32xf32>
    %164 = arith.negf %163 : vector<2x32xf32>
    %165 = math.exp %164 : vector<2x32xf32>
    %cst_56 = arith.constant 1.000000e+00 : f32
    %166 = vector.broadcast %cst_56 : f32 to vector<2x32xf32>
    %167 = arith.addf %166, %165 : vector<2x32xf32>
    %168 = arith.divf %166, %167 : vector<2x32xf32>
    %169 = vector.extract_strided_slice %156 {offsets = [0, 32], sizes = [2, 32], strides = [1, 1]} : vector<2x128xf32> to vector<2x32xf32>
    %170 = arith.negf %169 : vector<2x32xf32>
    %171 = math.exp %170 : vector<2x32xf32>
    %cst_57 = arith.constant 1.000000e+00 : f32
    %172 = vector.broadcast %cst_57 : f32 to vector<2x32xf32>
    %173 = arith.addf %172, %171 : vector<2x32xf32>
    %174 = arith.divf %172, %173 : vector<2x32xf32>
    %175 = vector.extract_strided_slice %156 {offsets = [0, 64], sizes = [2, 32], strides = [1, 1]} : vector<2x128xf32> to vector<2x32xf32>
    %176 = math.tanh %175 : vector<2x32xf32>
    %177 = vector.extract_strided_slice %156 {offsets = [0, 96], sizes = [2, 32], strides = [1, 1]} : vector<2x128xf32> to vector<2x32xf32>
    %178 = arith.negf %177 : vector<2x32xf32>
    %179 = math.exp %178 : vector<2x32xf32>
    %cst_58 = arith.constant 1.000000e+00 : f32
    %180 = vector.broadcast %cst_58 : f32 to vector<2x32xf32>
    %181 = arith.addf %180, %179 : vector<2x32xf32>
    %182 = arith.divf %180, %181 : vector<2x32xf32>
    %183 = arith.mulf %174, %115 : vector<2x32xf32>
    %184 = arith.mulf %168, %176 : vector<2x32xf32>
    %185 = arith.addf %183, %184 : vector<2x32xf32>
    %186 = math.tanh %185 : vector<2x32xf32>
    %187 = arith.mulf %182, %186 : vector<2x32xf32>
    %188 = vector.extract_strided_slice %162 {offsets = [0, 0], sizes = [2, 32], strides = [1, 1]} : vector<2x128xf32> to vector<2x32xf32>
    %189 = arith.negf %188 : vector<2x32xf32>
    %190 = math.exp %189 : vector<2x32xf32>
    %cst_59 = arith.constant 1.000000e+00 : f32
    %191 = vector.broadcast %cst_59 : f32 to vector<2x32xf32>
    %192 = arith.addf %191, %190 : vector<2x32xf32>
    %193 = arith.divf %191, %192 : vector<2x32xf32>
    %194 = vector.extract_strided_slice %162 {offsets = [0, 32], sizes = [2, 32], strides = [1, 1]} : vector<2x128xf32> to vector<2x32xf32>
    %195 = arith.negf %194 : vector<2x32xf32>
    %196 = math.exp %195 : vector<2x32xf32>
    %cst_60 = arith.constant 1.000000e+00 : f32
    %197 = vector.broadcast %cst_60 : f32 to vector<2x32xf32>
    %198 = arith.addf %197, %196 : vector<2x32xf32>
    %199 = arith.divf %197, %198 : vector<2x32xf32>
    %200 = vector.extract_strided_slice %162 {offsets = [0, 64], sizes = [2, 32], strides = [1, 1]} : vector<2x128xf32> to vector<2x32xf32>
    %201 = math.tanh %200 : vector<2x32xf32>
    %202 = vector.extract_strided_slice %162 {offsets = [0, 96], sizes = [2, 32], strides = [1, 1]} : vector<2x128xf32> to vector<2x32xf32>
    %203 = arith.negf %202 : vector<2x32xf32>
    %204 = math.exp %203 : vector<2x32xf32>
    %cst_61 = arith.constant 1.000000e+00 : f32
    %205 = vector.broadcast %cst_61 : f32 to vector<2x32xf32>
    %206 = arith.addf %205, %204 : vector<2x32xf32>
    %207 = arith.divf %205, %206 : vector<2x32xf32>
    %208 = arith.mulf %199, %140 : vector<2x32xf32>
    %209 = arith.mulf %193, %201 : vector<2x32xf32>
    %210 = arith.addf %208, %209 : vector<2x32xf32>
    %211 = math.tanh %210 : vector<2x32xf32>
    %212 = arith.mulf %207, %211 : vector<2x32xf32>
    %213 = arith.truncf %187 : vector<2x32xf32> to vector<2x32xbf16>
    %c2_62 = arith.constant 2 : index
    %c0_63 = arith.constant 0 : index
    %c0_64 = arith.constant 0 : index
    %214 = vector.load %arg4[%c2_62, %c0_63, %c0_64] : memref<16x2x32xbf16, #tpu.memory_space<vmem>>, vector<1x2x32xbf16>
    %215 = vector.shape_cast %214 : vector<1x2x32xbf16> to vector<2x32xbf16>
    %216 = vector.shape_cast %213 : vector<2x32xbf16> to vector<1x2x32xbf16>
    tpu.vector_store %arg4[%c2_62, %c0_63, %c0_64], %216 {strides = array<i32>} : memref<16x2x32xbf16, #tpu.memory_space<vmem>>, vector<1x2x32xbf16>,
    %217 = arith.truncf %212 : vector<2x32xf32> to vector<2x32xbf16>
    %c13_65 = arith.constant 13 : index
    %c0_66 = arith.constant 0 : index
    %c0_67 = arith.constant 0 : index
    %218 = vector.load %arg5[%c13_65, %c0_66, %c0_67] : memref<16x2x32xbf16, #tpu.memory_space<vmem>>, vector<1x2x32xbf16>
    %219 = vector.shape_cast %218 : vector<1x2x32xbf16> to vector<2x32xbf16>
    %220 = vector.shape_cast %217 : vector<2x32xbf16> to vector<1x2x32xbf16>
    tpu.vector_store %arg5[%c13_65, %c0_66, %c0_67], %220 {strides = array<i32>} : memref<16x2x32xbf16, #tpu.memory_space<vmem>>, vector<1x2x32xbf16>,
    %c3 = arith.constant 3 : index
    %c0_68 = arith.constant 0 : index
    %c0_69 = arith.constant 0 : index
    %221 = vector.load %arg1[%c3, %c0_68, %c0_69] : memref<16x2x128xbf16, #tpu.memory_space<vmem>>, vector<1x2x128xbf16>
    %222 = vector.shape_cast %221 : vector<1x2x128xbf16> to vector<2x128xbf16>
    %223 = arith.extf %222 : vector<2x128xbf16> to vector<2x128xf32>
    %224 = arith.truncf %187 : vector<2x32xf32> to vector<2x32xbf16>
    %cst_70 = arith.constant dense<0.000000e+00> : vector<2x128xf32>
    %225 = tpu.matmul %224, %4, %cst_70 {dimension_numbers = #tpu.dot_dimension_numbers<[1], [0], [0], [1], [0, 0, 1, 1], [], []>} : vector<2x32xbf16>, vector<32x128xbf16>, vector<2x128xf32> -> vector<2x128xf32>
    %226 = arith.addf %223, %225 : vector<2x128xf32>
    %c12 = arith.constant 12 : index
    %c0_71 = arith.constant 0 : index
    %c0_72 = arith.constant 0 : index
    %227 = vector.load %arg2[%c12, %c0_71, %c0_72] : memref<16x2x128xbf16, #tpu.memory_space<vmem>>, vector<1x2x128xbf16>
    %228 = vector.shape_cast %227 : vector<1x2x128xbf16> to vector<2x128xbf16>
    %229 = arith.extf %228 : vector<2x128xbf16> to vector<2x128xf32>
    %230 = arith.truncf %212 : vector<2x32xf32> to vector<2x32xbf16>
    %cst_73 = arith.constant dense<0.000000e+00> : vector<2x128xf32>
    %231 = tpu.matmul %230, %6, %cst_73 {dimension_numbers = #tpu.dot_dimension_numbers<[1], [0], [0], [1], [0, 0, 1, 1], [], []>} : vector<2x32xbf16>, vector<32x128xbf16>, vector<2x128xf32> -> vector<2x128xf32>
    %232 = arith.addf %229, %231 : vector<2x128xf32>
    %233 = vector.extract_strided_slice %226 {offsets = [0, 0], sizes = [2, 32], strides = [1, 1]} : vector<2x128xf32> to vector<2x32xf32>
    %234 = arith.negf %233 : vector<2x32xf32>
    %235 = math.exp %234 : vector<2x32xf32>
    %cst_74 = arith.constant 1.000000e+00 : f32
    %236 = vector.broadcast %cst_74 : f32 to vector<2x32xf32>
    %237 = arith.addf %236, %235 : vector<2x32xf32>
    %238 = arith.divf %236, %237 : vector<2x32xf32>
    %239 = vector.extract_strided_slice %226 {offsets = [0, 32], sizes = [2, 32], strides = [1, 1]} : vector<2x128xf32> to vector<2x32xf32>
    %240 = arith.negf %239 : vector<2x32xf32>
    %241 = math.exp %240 : vector<2x32xf32>
    %cst_75 = arith.constant 1.000000e+00 : f32
    %242 = vector.broadcast %cst_75 : f32 to vector<2x32xf32>
    %243 = arith.addf %242, %241 : vector<2x32xf32>
    %244 = arith.divf %242, %243 : vector<2x32xf32>
    %245 = vector.extract_strided_slice %226 {offsets = [0, 64], sizes = [2, 32], strides = [1, 1]} : vector<2x128xf32> to vector<2x32xf32>
    %246 = math.tanh %245 : vector<2x32xf32>
    %247 = vector.extract_strided_slice %226 {offsets = [0, 96], sizes = [2, 32], strides = [1, 1]} : vector<2x128xf32> to vector<2x32xf32>
    %248 = arith.negf %247 : vector<2x32xf32>
    %249 = math.exp %248 : vector<2x32xf32>
    %cst_76 = arith.constant 1.000000e+00 : f32
    %250 = vector.broadcast %cst_76 : f32 to vector<2x32xf32>
    %251 = arith.addf %250, %249 : vector<2x32xf32>
    %252 = arith.divf %250, %251 : vector<2x32xf32>
    %253 = arith.mulf %244, %185 : vector<2x32xf32>
    %254 = arith.mulf %238, %246 : vector<2x32xf32>
    %255 = arith.addf %253, %254 : vector<2x32xf32>
    %256 = math.tanh %255 : vector<2x32xf32>
    %257 = arith.mulf %252, %256 : vector<2x32xf32>
    %258 = vector.extract_strided_slice %232 {offsets = [0, 0], sizes = [2, 32], strides = [1, 1]} : vector<2x128xf32> to vector<2x32xf32>
    %259 = arith.negf %258 : vector<2x32xf32>
    %260 = math.exp %259 : vector<2x32xf32>
    %cst_77 = arith.constant 1.000000e+00 : f32
    %261 = vector.broadcast %cst_77 : f32 to vector<2x32xf32>
    %262 = arith.addf %261, %260 : vector<2x32xf32>
    %263 = arith.divf %261, %262 : vector<2x32xf32>
    %264 = vector.extract_strided_slice %232 {offsets = [0, 32], sizes = [2, 32], strides = [1, 1]} : vector<2x128xf32> to vector<2x32xf32>
    %265 = arith.negf %264 : vector<2x32xf32>
    %266 = math.exp %265 : vector<2x32xf32>
    %cst_78 = arith.constant 1.000000e+00 : f32
    %267 = vector.broadcast %cst_78 : f32 to vector<2x32xf32>
    %268 = arith.addf %267, %266 : vector<2x32xf32>
    %269 = arith.divf %267, %268 : vector<2x32xf32>
    %270 = vector.extract_strided_slice %232 {offsets = [0, 64], sizes = [2, 32], strides = [1, 1]} : vector<2x128xf32> to vector<2x32xf32>
    %271 = math.tanh %270 : vector<2x32xf32>
    %272 = vector.extract_strided_slice %232 {offsets = [0, 96], sizes = [2, 32], strides = [1, 1]} : vector<2x128xf32> to vector<2x32xf32>
    %273 = arith.negf %272 : vector<2x32xf32>
    %274 = math.exp %273 : vector<2x32xf32>
    %cst_79 = arith.constant 1.000000e+00 : f32
    %275 = vector.broadcast %cst_79 : f32 to vector<2x32xf32>
    %276 = arith.addf %275, %274 : vector<2x32xf32>
    %277 = arith.divf %275, %276 : vector<2x32xf32>
    %278 = arith.mulf %269, %210 : vector<2x32xf32>
    %279 = arith.mulf %263, %271 : vector<2x32xf32>
    %280 = arith.addf %278, %279 : vector<2x32xf32>
    %281 = math.tanh %280 : vector<2x32xf32>
    %282 = arith.mulf %277, %281 : vector<2x32xf32>
    %283 = arith.truncf %257 : vector<2x32xf32> to vector<2x32xbf16>
    %c3_80 = arith.constant 3 : index
    %c0_81 = arith.constant 0 : index
    %c0_82 = arith.constant 0 : index
    %284 = vector.load %arg4[%c3_80, %c0_81, %c0_82] : memref<16x2x32xbf16, #tpu.memory_space<vmem>>, vector<1x2x32xbf16>
    %285 = vector.shape_cast %284 : vector<1x2x32xbf16> to vector<2x32xbf16>
    %286 = vector.shape_cast %283 : vector<2x32xbf16> to vector<1x2x32xbf16>
    tpu.vector_store %arg4[%c3_80, %c0_81, %c0_82], %286 {strides = array<i32>} : memref<16x2x32xbf16, #tpu.memory_space<vmem>>, vector<1x2x32xbf16>,
    %287 = arith.truncf %282 : vector<2x32xf32> to vector<2x32xbf16>
    %c12_83 = arith.constant 12 : index
    %c0_84 = arith.constant 0 : index
    %c0_85 = arith.constant 0 : index
    %288 = vector.load %arg5[%c12_83, %c0_84, %c0_85] : memref<16x2x32xbf16, #tpu.memory_space<vmem>>, vector<1x2x32xbf16>
    %289 = vector.shape_cast %288 : vector<1x2x32xbf16> to vector<2x32xbf16>
    %290 = vector.shape_cast %287 : vector<2x32xbf16> to vector<1x2x32xbf16>
    tpu.vector_store %arg5[%c12_83, %c0_84, %c0_85], %290 {strides = array<i32>} : memref<16x2x32xbf16, #tpu.memory_space<vmem>>, vector<1x2x32xbf16>,
    %c4 = arith.constant 4 : index
    %c0_86 = arith.constant 0 : index
    %c0_87 = arith.constant 0 : index
    %291 = vector.load %arg1[%c4, %c0_86, %c0_87] : memref<16x2x128xbf16, #tpu.memory_space<vmem>>, vector<1x2x128xbf16>
    %292 = vector.shape_cast %291 : vector<1x2x128xbf16> to vector<2x128xbf16>
    %293 = arith.extf %292 : vector<2x128xbf16> to vector<2x128xf32>
    %294 = arith.truncf %257 : vector<2x32xf32> to vector<2x32xbf16>
    %cst_88 = arith.constant dense<0.000000e+00> : vector<2x128xf32>
    %295 = tpu.matmul %294, %4, %cst_88 {dimension_numbers = #tpu.dot_dimension_numbers<[1], [0], [0], [1], [0, 0, 1, 1], [], []>} : vector<2x32xbf16>, vector<32x128xbf16>, vector<2x128xf32> -> vector<2x128xf32>
    %296 = arith.addf %293, %295 : vector<2x128xf32>
    %c11 = arith.constant 11 : index
    %c0_89 = arith.constant 0 : index
    %c0_90 = arith.constant 0 : index
    %297 = vector.load %arg2[%c11, %c0_89, %c0_90] : memref<16x2x128xbf16, #tpu.memory_space<vmem>>, vector<1x2x128xbf16>
    %298 = vector.shape_cast %297 : vector<1x2x128xbf16> to vector<2x128xbf16>
    %299 = arith.extf %298 : vector<2x128xbf16> to vector<2x128xf32>
    %300 = arith.truncf %282 : vector<2x32xf32> to vector<2x32xbf16>
    %cst_91 = arith.constant dense<0.000000e+00> : vector<2x128xf32>
    %301 = tpu.matmul %300, %6, %cst_91 {dimension_numbers = #tpu.dot_dimension_numbers<[1], [0], [0], [1], [0, 0, 1, 1], [], []>} : vector<2x32xbf16>, vector<32x128xbf16>, vector<2x128xf32> -> vector<2x128xf32>
    %302 = arith.addf %299, %301 : vector<2x128xf32>
    %303 = vector.extract_strided_slice %296 {offsets = [0, 0], sizes = [2, 32], strides = [1, 1]} : vector<2x128xf32> to vector<2x32xf32>
    %304 = arith.negf %303 : vector<2x32xf32>
    %305 = math.exp %304 : vector<2x32xf32>
    %cst_92 = arith.constant 1.000000e+00 : f32
    %306 = vector.broadcast %cst_92 : f32 to vector<2x32xf32>
    %307 = arith.addf %306, %305 : vector<2x32xf32>
    %308 = arith.divf %306, %307 : vector<2x32xf32>
    %309 = vector.extract_strided_slice %296 {offsets = [0, 32], sizes = [2, 32], strides = [1, 1]} : vector<2x128xf32> to vector<2x32xf32>
    %310 = arith.negf %309 : vector<2x32xf32>
    %311 = math.exp %310 : vector<2x32xf32>
    %cst_93 = arith.constant 1.000000e+00 : f32
    %312 = vector.broadcast %cst_93 : f32 to vector<2x32xf32>
    %313 = arith.addf %312, %311 : vector<2x32xf32>
    %314 = arith.divf %312, %313 : vector<2x32xf32>
    %315 = vector.extract_strided_slice %296 {offsets = [0, 64], sizes = [2, 32], strides = [1, 1]} : vector<2x128xf32> to vector<2x32xf32>
    %316 = math.tanh %315 : vector<2x32xf32>
    %317 = vector.extract_strided_slice %296 {offsets = [0, 96], sizes = [2, 32], strides = [1, 1]} : vector<2x128xf32> to vector<2x32xf32>
    %318 = arith.negf %317 : vector<2x32xf32>
    %319 = math.exp %318 : vector<2x32xf32>
    %cst_94 = arith.constant 1.000000e+00 : f32
    %320 = vector.broadcast %cst_94 : f32 to vector<2x32xf32>
    %321 = arith.addf %320, %319 : vector<2x32xf32>
    %322 = arith.divf %320, %321 : vector<2x32xf32>
    %323 = arith.mulf %314, %255 : vector<2x32xf32>
    %324 = arith.mulf %308, %316 : vector<2x32xf32>
    %325 = arith.addf %323, %324 : vector<2x32xf32>
    %326 = math.tanh %325 : vector<2x32xf32>
    %327 = arith.mulf %322, %326 : vector<2x32xf32>
    %328 = vector.extract_strided_slice %302 {offsets = [0, 0], sizes = [2, 32], strides = [1, 1]} : vector<2x128xf32> to vector<2x32xf32>
    %329 = arith.negf %328 : vector<2x32xf32>
    %330 = math.exp %329 : vector<2x32xf32>
    %cst_95 = arith.constant 1.000000e+00 : f32
    %331 = vector.broadcast %cst_95 : f32 to vector<2x32xf32>
    %332 = arith.addf %331, %330 : vector<2x32xf32>
    %333 = arith.divf %331, %332 : vector<2x32xf32>
    %334 = vector.extract_strided_slice %302 {offsets = [0, 32], sizes = [2, 32], strides = [1, 1]} : vector<2x128xf32> to vector<2x32xf32>
    %335 = arith.negf %334 : vector<2x32xf32>
    %336 = math.exp %335 : vector<2x32xf32>
    %cst_96 = arith.constant 1.000000e+00 : f32
    %337 = vector.broadcast %cst_96 : f32 to vector<2x32xf32>
    %338 = arith.addf %337, %336 : vector<2x32xf32>
    %339 = arith.divf %337, %338 : vector<2x32xf32>
    %340 = vector.extract_strided_slice %302 {offsets = [0, 64], sizes = [2, 32], strides = [1, 1]} : vector<2x128xf32> to vector<2x32xf32>
    %341 = math.tanh %340 : vector<2x32xf32>
    %342 = vector.extract_strided_slice %302 {offsets = [0, 96], sizes = [2, 32], strides = [1, 1]} : vector<2x128xf32> to vector<2x32xf32>
    %343 = arith.negf %342 : vector<2x32xf32>
    %344 = math.exp %343 : vector<2x32xf32>
    %cst_97 = arith.constant 1.000000e+00 : f32
    %345 = vector.broadcast %cst_97 : f32 to vector<2x32xf32>
    %346 = arith.addf %345, %344 : vector<2x32xf32>
    %347 = arith.divf %345, %346 : vector<2x32xf32>
    %348 = arith.mulf %339, %280 : vector<2x32xf32>
    %349 = arith.mulf %333, %341 : vector<2x32xf32>
    %350 = arith.addf %348, %349 : vector<2x32xf32>
    %351 = math.tanh %350 : vector<2x32xf32>
    %352 = arith.mulf %347, %351 : vector<2x32xf32>
    %353 = arith.truncf %327 : vector<2x32xf32> to vector<2x32xbf16>
    %c4_98 = arith.constant 4 : index
    %c0_99 = arith.constant 0 : index
    %c0_100 = arith.constant 0 : index
    %354 = vector.load %arg4[%c4_98, %c0_99, %c0_100] : memref<16x2x32xbf16, #tpu.memory_space<vmem>>, vector<1x2x32xbf16>
    %355 = vector.shape_cast %354 : vector<1x2x32xbf16> to vector<2x32xbf16>
    %356 = vector.shape_cast %353 : vector<2x32xbf16> to vector<1x2x32xbf16>
    tpu.vector_store %arg4[%c4_98, %c0_99, %c0_100], %356 {strides = array<i32>} : memref<16x2x32xbf16, #tpu.memory_space<vmem>>, vector<1x2x32xbf16>,
    %357 = arith.truncf %352 : vector<2x32xf32> to vector<2x32xbf16>
    %c11_101 = arith.constant 11 : index
    %c0_102 = arith.constant 0 : index
    %c0_103 = arith.constant 0 : index
    %358 = vector.load %arg5[%c11_101, %c0_102, %c0_103] : memref<16x2x32xbf16, #tpu.memory_space<vmem>>, vector<1x2x32xbf16>
    %359 = vector.shape_cast %358 : vector<1x2x32xbf16> to vector<2x32xbf16>
    %360 = vector.shape_cast %357 : vector<2x32xbf16> to vector<1x2x32xbf16>
    tpu.vector_store %arg5[%c11_101, %c0_102, %c0_103], %360 {strides = array<i32>} : memref<16x2x32xbf16, #tpu.memory_space<vmem>>, vector<1x2x32xbf16>,
    %c5 = arith.constant 5 : index
    %c0_104 = arith.constant 0 : index
    %c0_105 = arith.constant 0 : index
    %361 = vector.load %arg1[%c5, %c0_104, %c0_105] : memref<16x2x128xbf16, #tpu.memory_space<vmem>>, vector<1x2x128xbf16>
    %362 = vector.shape_cast %361 : vector<1x2x128xbf16> to vector<2x128xbf16>
    %363 = arith.extf %362 : vector<2x128xbf16> to vector<2x128xf32>
    %364 = arith.truncf %327 : vector<2x32xf32> to vector<2x32xbf16>
    %cst_106 = arith.constant dense<0.000000e+00> : vector<2x128xf32>
    %365 = tpu.matmul %364, %4, %cst_106 {dimension_numbers = #tpu.dot_dimension_numbers<[1], [0], [0], [1], [0, 0, 1, 1], [], []>} : vector<2x32xbf16>, vector<32x128xbf16>, vector<2x128xf32> -> vector<2x128xf32>
    %366 = arith.addf %363, %365 : vector<2x128xf32>
    %c10 = arith.constant 10 : index
    %c0_107 = arith.constant 0 : index
    %c0_108 = arith.constant 0 : index
    %367 = vector.load %arg2[%c10, %c0_107, %c0_108] : memref<16x2x128xbf16, #tpu.memory_space<vmem>>, vector<1x2x128xbf16>
    %368 = vector.shape_cast %367 : vector<1x2x128xbf16> to vector<2x128xbf16>
    %369 = arith.extf %368 : vector<2x128xbf16> to vector<2x128xf32>
    %370 = arith.truncf %352 : vector<2x32xf32> to vector<2x32xbf16>
    %cst_109 = arith.constant dense<0.000000e+00> : vector<2x128xf32>
    %371 = tpu.matmul %370, %6, %cst_109 {dimension_numbers = #tpu.dot_dimension_numbers<[1], [0], [0], [1], [0, 0, 1, 1], [], []>} : vector<2x32xbf16>, vector<32x128xbf16>, vector<2x128xf32> -> vector<2x128xf32>
    %372 = arith.addf %369, %371 : vector<2x128xf32>
    %373 = vector.extract_strided_slice %366 {offsets = [0, 0], sizes = [2, 32], strides = [1, 1]} : vector<2x128xf32> to vector<2x32xf32>
    %374 = arith.negf %373 : vector<2x32xf32>
    %375 = math.exp %374 : vector<2x32xf32>
    %cst_110 = arith.constant 1.000000e+00 : f32
    %376 = vector.broadcast %cst_110 : f32 to vector<2x32xf32>
    %377 = arith.addf %376, %375 : vector<2x32xf32>
    %378 = arith.divf %376, %377 : vector<2x32xf32>
    %379 = vector.extract_strided_slice %366 {offsets = [0, 32], sizes = [2, 32], strides = [1, 1]} : vector<2x128xf32> to vector<2x32xf32>
    %380 = arith.negf %379 : vector<2x32xf32>
    %381 = math.exp %380 : vector<2x32xf32>
    %cst_111 = arith.constant 1.000000e+00 : f32
    %382 = vector.broadcast %cst_111 : f32 to vector<2x32xf32>
    %383 = arith.addf %382, %381 : vector<2x32xf32>
    %384 = arith.divf %382, %383 : vector<2x32xf32>
    %385 = vector.extract_strided_slice %366 {offsets = [0, 64], sizes = [2, 32], strides = [1, 1]} : vector<2x128xf32> to vector<2x32xf32>
    %386 = math.tanh %385 : vector<2x32xf32>
    %387 = vector.extract_strided_slice %366 {offsets = [0, 96], sizes = [2, 32], strides = [1, 1]} : vector<2x128xf32> to vector<2x32xf32>
    %388 = arith.negf %387 : vector<2x32xf32>
    %389 = math.exp %388 : vector<2x32xf32>
    %cst_112 = arith.constant 1.000000e+00 : f32
    %390 = vector.broadcast %cst_112 : f32 to vector<2x32xf32>
    %391 = arith.addf %390, %389 : vector<2x32xf32>
    %392 = arith.divf %390, %391 : vector<2x32xf32>
    %393 = arith.mulf %384, %325 : vector<2x32xf32>
    %394 = arith.mulf %378, %386 : vector<2x32xf32>
    %395 = arith.addf %393, %394 : vector<2x32xf32>
    %396 = math.tanh %395 : vector<2x32xf32>
    %397 = arith.mulf %392, %396 : vector<2x32xf32>
    %398 = vector.extract_strided_slice %372 {offsets = [0, 0], sizes = [2, 32], strides = [1, 1]} : vector<2x128xf32> to vector<2x32xf32>
    %399 = arith.negf %398 : vector<2x32xf32>
    %400 = math.exp %399 : vector<2x32xf32>
    %cst_113 = arith.constant 1.000000e+00 : f32
    %401 = vector.broadcast %cst_113 : f32 to vector<2x32xf32>
    %402 = arith.addf %401, %400 : vector<2x32xf32>
    %403 = arith.divf %401, %402 : vector<2x32xf32>
    %404 = vector.extract_strided_slice %372 {offsets = [0, 32], sizes = [2, 32], strides = [1, 1]} : vector<2x128xf32> to vector<2x32xf32>
    %405 = arith.negf %404 : vector<2x32xf32>
    %406 = math.exp %405 : vector<2x32xf32>
    %cst_114 = arith.constant 1.000000e+00 : f32
    %407 = vector.broadcast %cst_114 : f32 to vector<2x32xf32>
    %408 = arith.addf %407, %406 : vector<2x32xf32>
    %409 = arith.divf %407, %408 : vector<2x32xf32>
    %410 = vector.extract_strided_slice %372 {offsets = [0, 64], sizes = [2, 32], strides = [1, 1]} : vector<2x128xf32> to vector<2x32xf32>
    %411 = math.tanh %410 : vector<2x32xf32>
    %412 = vector.extract_strided_slice %372 {offsets = [0, 96], sizes = [2, 32], strides = [1, 1]} : vector<2x128xf32> to vector<2x32xf32>
    %413 = arith.negf %412 : vector<2x32xf32>
    %414 = math.exp %413 : vector<2x32xf32>
    %cst_115 = arith.constant 1.000000e+00 : f32
    %415 = vector.broadcast %cst_115 : f32 to vector<2x32xf32>
    %416 = arith.addf %415, %414 : vector<2x32xf32>
    %417 = arith.divf %415, %416 : vector<2x32xf32>
    %418 = arith.mulf %409, %350 : vector<2x32xf32>
    %419 = arith.mulf %403, %411 : vector<2x32xf32>
    %420 = arith.addf %418, %419 : vector<2x32xf32>
    %421 = math.tanh %420 : vector<2x32xf32>
    %422 = arith.mulf %417, %421 : vector<2x32xf32>
    %423 = arith.truncf %397 : vector<2x32xf32> to vector<2x32xbf16>
    %c5_116 = arith.constant 5 : index
    %c0_117 = arith.constant 0 : index
    %c0_118 = arith.constant 0 : index
    %424 = vector.load %arg4[%c5_116, %c0_117, %c0_118] : memref<16x2x32xbf16, #tpu.memory_space<vmem>>, vector<1x2x32xbf16>
    %425 = vector.shape_cast %424 : vector<1x2x32xbf16> to vector<2x32xbf16>
    %426 = vector.shape_cast %423 : vector<2x32xbf16> to vector<1x2x32xbf16>
    tpu.vector_store %arg4[%c5_116, %c0_117, %c0_118], %426 {strides = array<i32>} : memref<16x2x32xbf16, #tpu.memory_space<vmem>>, vector<1x2x32xbf16>,
    %427 = arith.truncf %422 : vector<2x32xf32> to vector<2x32xbf16>
    %c10_119 = arith.constant 10 : index
    %c0_120 = arith.constant 0 : index
    %c0_121 = arith.constant 0 : index
    %428 = vector.load %arg5[%c10_119, %c0_120, %c0_121] : memref<16x2x32xbf16, #tpu.memory_space<vmem>>, vector<1x2x32xbf16>
    %429 = vector.shape_cast %428 : vector<1x2x32xbf16> to vector<2x32xbf16>
    %430 = vector.shape_cast %427 : vector<2x32xbf16> to vector<1x2x32xbf16>
    tpu.vector_store %arg5[%c10_119, %c0_120, %c0_121], %430 {strides = array<i32>} : memref<16x2x32xbf16, #tpu.memory_space<vmem>>, vector<1x2x32xbf16>,
    %c6 = arith.constant 6 : index
    %c0_122 = arith.constant 0 : index
    %c0_123 = arith.constant 0 : index
    %431 = vector.load %arg1[%c6, %c0_122, %c0_123] : memref<16x2x128xbf16, #tpu.memory_space<vmem>>, vector<1x2x128xbf16>
    %432 = vector.shape_cast %431 : vector<1x2x128xbf16> to vector<2x128xbf16>
    %433 = arith.extf %432 : vector<2x128xbf16> to vector<2x128xf32>
    %434 = arith.truncf %397 : vector<2x32xf32> to vector<2x32xbf16>
    %cst_124 = arith.constant dense<0.000000e+00> : vector<2x128xf32>
    %435 = tpu.matmul %434, %4, %cst_124 {dimension_numbers = #tpu.dot_dimension_numbers<[1], [0], [0], [1], [0, 0, 1, 1], [], []>} : vector<2x32xbf16>, vector<32x128xbf16>, vector<2x128xf32> -> vector<2x128xf32>
    %436 = arith.addf %433, %435 : vector<2x128xf32>
    %c9 = arith.constant 9 : index
    %c0_125 = arith.constant 0 : index
    %c0_126 = arith.constant 0 : index
    %437 = vector.load %arg2[%c9, %c0_125, %c0_126] : memref<16x2x128xbf16, #tpu.memory_space<vmem>>, vector<1x2x128xbf16>
    %438 = vector.shape_cast %437 : vector<1x2x128xbf16> to vector<2x128xbf16>
    %439 = arith.extf %438 : vector<2x128xbf16> to vector<2x128xf32>
    %440 = arith.truncf %422 : vector<2x32xf32> to vector<2x32xbf16>
    %cst_127 = arith.constant dense<0.000000e+00> : vector<2x128xf32>
    %441 = tpu.matmul %440, %6, %cst_127 {dimension_numbers = #tpu.dot_dimension_numbers<[1], [0], [0], [1], [0, 0, 1, 1], [], []>} : vector<2x32xbf16>, vector<32x128xbf16>, vector<2x128xf32> -> vector<2x128xf32>
    %442 = arith.addf %439, %441 : vector<2x128xf32>
    %443 = vector.extract_strided_slice %436 {offsets = [0, 0], sizes = [2, 32], strides = [1, 1]} : vector<2x128xf32> to vector<2x32xf32>
    %444 = arith.negf %443 : vector<2x32xf32>
    %445 = math.exp %444 : vector<2x32xf32>
    %cst_128 = arith.constant 1.000000e+00 : f32
    %446 = vector.broadcast %cst_128 : f32 to vector<2x32xf32>
    %447 = arith.addf %446, %445 : vector<2x32xf32>
    %448 = arith.divf %446, %447 : vector<2x32xf32>
    %449 = vector.extract_strided_slice %436 {offsets = [0, 32], sizes = [2, 32], strides = [1, 1]} : vector<2x128xf32> to vector<2x32xf32>
    %450 = arith.negf %449 : vector<2x32xf32>
    %451 = math.exp %450 : vector<2x32xf32>
    %cst_129 = arith.constant 1.000000e+00 : f32
    %452 = vector.broadcast %cst_129 : f32 to vector<2x32xf32>
    %453 = arith.addf %452, %451 : vector<2x32xf32>
    %454 = arith.divf %452, %453 : vector<2x32xf32>
    %455 = vector.extract_strided_slice %436 {offsets = [0, 64], sizes = [2, 32], strides = [1, 1]} : vector<2x128xf32> to vector<2x32xf32>
    %456 = math.tanh %455 : vector<2x32xf32>
    %457 = vector.extract_strided_slice %436 {offsets = [0, 96], sizes = [2, 32], strides = [1, 1]} : vector<2x128xf32> to vector<2x32xf32>
    %458 = arith.negf %457 : vector<2x32xf32>
    %459 = math.exp %458 : vector<2x32xf32>
    %cst_130 = arith.constant 1.000000e+00 : f32
    %460 = vector.broadcast %cst_130 : f32 to vector<2x32xf32>
    %461 = arith.addf %460, %459 : vector<2x32xf32>
    %462 = arith.divf %460, %461 : vector<2x32xf32>
    %463 = arith.mulf %454, %395 : vector<2x32xf32>
    %464 = arith.mulf %448, %456 : vector<2x32xf32>
    %465 = arith.addf %463, %464 : vector<2x32xf32>
    %466 = math.tanh %465 : vector<2x32xf32>
    %467 = arith.mulf %462, %466 : vector<2x32xf32>
    %468 = vector.extract_strided_slice %442 {offsets = [0, 0], sizes = [2, 32], strides = [1, 1]} : vector<2x128xf32> to vector<2x32xf32>
    %469 = arith.negf %468 : vector<2x32xf32>
    %470 = math.exp %469 : vector<2x32xf32>
    %cst_131 = arith.constant 1.000000e+00 : f32
    %471 = vector.broadcast %cst_131 : f32 to vector<2x32xf32>
    %472 = arith.addf %471, %470 : vector<2x32xf32>
    %473 = arith.divf %471, %472 : vector<2x32xf32>
    %474 = vector.extract_strided_slice %442 {offsets = [0, 32], sizes = [2, 32], strides = [1, 1]} : vector<2x128xf32> to vector<2x32xf32>
    %475 = arith.negf %474 : vector<2x32xf32>
    %476 = math.exp %475 : vector<2x32xf32>
    %cst_132 = arith.constant 1.000000e+00 : f32
    %477 = vector.broadcast %cst_132 : f32 to vector<2x32xf32>
    %478 = arith.addf %477, %476 : vector<2x32xf32>
    %479 = arith.divf %477, %478 : vector<2x32xf32>
    %480 = vector.extract_strided_slice %442 {offsets = [0, 64], sizes = [2, 32], strides = [1, 1]} : vector<2x128xf32> to vector<2x32xf32>
    %481 = math.tanh %480 : vector<2x32xf32>
    %482 = vector.extract_strided_slice %442 {offsets = [0, 96], sizes = [2, 32], strides = [1, 1]} : vector<2x128xf32> to vector<2x32xf32>
    %483 = arith.negf %482 : vector<2x32xf32>
    %484 = math.exp %483 : vector<2x32xf32>
    %cst_133 = arith.constant 1.000000e+00 : f32
    %485 = vector.broadcast %cst_133 : f32 to vector<2x32xf32>
    %486 = arith.addf %485, %484 : vector<2x32xf32>
    %487 = arith.divf %485, %486 : vector<2x32xf32>
    %488 = arith.mulf %479, %420 : vector<2x32xf32>
    %489 = arith.mulf %473, %481 : vector<2x32xf32>
    %490 = arith.addf %488, %489 : vector<2x32xf32>
    %491 = math.tanh %490 : vector<2x32xf32>
    %492 = arith.mulf %487, %491 : vector<2x32xf32>
    %493 = arith.truncf %467 : vector<2x32xf32> to vector<2x32xbf16>
    %c6_134 = arith.constant 6 : index
    %c0_135 = arith.constant 0 : index
    %c0_136 = arith.constant 0 : index
    %494 = vector.load %arg4[%c6_134, %c0_135, %c0_136] : memref<16x2x32xbf16, #tpu.memory_space<vmem>>, vector<1x2x32xbf16>
    %495 = vector.shape_cast %494 : vector<1x2x32xbf16> to vector<2x32xbf16>
    %496 = vector.shape_cast %493 : vector<2x32xbf16> to vector<1x2x32xbf16>
    tpu.vector_store %arg4[%c6_134, %c0_135, %c0_136], %496 {strides = array<i32>} : memref<16x2x32xbf16, #tpu.memory_space<vmem>>, vector<1x2x32xbf16>,
    %497 = arith.truncf %492 : vector<2x32xf32> to vector<2x32xbf16>
    %c9_137 = arith.constant 9 : index
    %c0_138 = arith.constant 0 : index
    %c0_139 = arith.constant 0 : index
    %498 = vector.load %arg5[%c9_137, %c0_138, %c0_139] : memref<16x2x32xbf16, #tpu.memory_space<vmem>>, vector<1x2x32xbf16>
    %499 = vector.shape_cast %498 : vector<1x2x32xbf16> to vector<2x32xbf16>
    %500 = vector.shape_cast %497 : vector<2x32xbf16> to vector<1x2x32xbf16>
    tpu.vector_store %arg5[%c9_137, %c0_138, %c0_139], %500 {strides = array<i32>} : memref<16x2x32xbf16, #tpu.memory_space<vmem>>, vector<1x2x32xbf16>,
    %c7 = arith.constant 7 : index
    %c0_140 = arith.constant 0 : index
    %c0_141 = arith.constant 0 : index
    %501 = vector.load %arg1[%c7, %c0_140, %c0_141] : memref<16x2x128xbf16, #tpu.memory_space<vmem>>, vector<1x2x128xbf16>
    %502 = vector.shape_cast %501 : vector<1x2x128xbf16> to vector<2x128xbf16>
    %503 = arith.extf %502 : vector<2x128xbf16> to vector<2x128xf32>
    %504 = arith.truncf %467 : vector<2x32xf32> to vector<2x32xbf16>
    %cst_142 = arith.constant dense<0.000000e+00> : vector<2x128xf32>
    %505 = tpu.matmul %504, %4, %cst_142 {dimension_numbers = #tpu.dot_dimension_numbers<[1], [0], [0], [1], [0, 0, 1, 1], [], []>} : vector<2x32xbf16>, vector<32x128xbf16>, vector<2x128xf32> -> vector<2x128xf32>
    %506 = arith.addf %503, %505 : vector<2x128xf32>
    %c8 = arith.constant 8 : index
    %c0_143 = arith.constant 0 : index
    %c0_144 = arith.constant 0 : index
    %507 = vector.load %arg2[%c8, %c0_143, %c0_144] : memref<16x2x128xbf16, #tpu.memory_space<vmem>>, vector<1x2x128xbf16>
    %508 = vector.shape_cast %507 : vector<1x2x128xbf16> to vector<2x128xbf16>
    %509 = arith.extf %508 : vector<2x128xbf16> to vector<2x128xf32>
    %510 = arith.truncf %492 : vector<2x32xf32> to vector<2x32xbf16>
    %cst_145 = arith.constant dense<0.000000e+00> : vector<2x128xf32>
    %511 = tpu.matmul %510, %6, %cst_145 {dimension_numbers = #tpu.dot_dimension_numbers<[1], [0], [0], [1], [0, 0, 1, 1], [], []>} : vector<2x32xbf16>, vector<32x128xbf16>, vector<2x128xf32> -> vector<2x128xf32>
    %512 = arith.addf %509, %511 : vector<2x128xf32>
    %513 = vector.extract_strided_slice %506 {offsets = [0, 0], sizes = [2, 32], strides = [1, 1]} : vector<2x128xf32> to vector<2x32xf32>
    %514 = arith.negf %513 : vector<2x32xf32>
    %515 = math.exp %514 : vector<2x32xf32>
    %cst_146 = arith.constant 1.000000e+00 : f32
    %516 = vector.broadcast %cst_146 : f32 to vector<2x32xf32>
    %517 = arith.addf %516, %515 : vector<2x32xf32>
    %518 = arith.divf %516, %517 : vector<2x32xf32>
    %519 = vector.extract_strided_slice %506 {offsets = [0, 32], sizes = [2, 32], strides = [1, 1]} : vector<2x128xf32> to vector<2x32xf32>
    %520 = arith.negf %519 : vector<2x32xf32>
    %521 = math.exp %520 : vector<2x32xf32>
    %cst_147 = arith.constant 1.000000e+00 : f32
    %522 = vector.broadcast %cst_147 : f32 to vector<2x32xf32>
    %523 = arith.addf %522, %521 : vector<2x32xf32>
    %524 = arith.divf %522, %523 : vector<2x32xf32>
    %525 = vector.extract_strided_slice %506 {offsets = [0, 64], sizes = [2, 32], strides = [1, 1]} : vector<2x128xf32> to vector<2x32xf32>
    %526 = math.tanh %525 : vector<2x32xf32>
    %527 = vector.extract_strided_slice %506 {offsets = [0, 96], sizes = [2, 32], strides = [1, 1]} : vector<2x128xf32> to vector<2x32xf32>
    %528 = arith.negf %527 : vector<2x32xf32>
    %529 = math.exp %528 : vector<2x32xf32>
    %cst_148 = arith.constant 1.000000e+00 : f32
    %530 = vector.broadcast %cst_148 : f32 to vector<2x32xf32>
    %531 = arith.addf %530, %529 : vector<2x32xf32>
    %532 = arith.divf %530, %531 : vector<2x32xf32>
    %533 = arith.mulf %524, %465 : vector<2x32xf32>
    %534 = arith.mulf %518, %526 : vector<2x32xf32>
    %535 = arith.addf %533, %534 : vector<2x32xf32>
    %536 = math.tanh %535 : vector<2x32xf32>
    %537 = arith.mulf %532, %536 : vector<2x32xf32>
    %538 = vector.extract_strided_slice %512 {offsets = [0, 0], sizes = [2, 32], strides = [1, 1]} : vector<2x128xf32> to vector<2x32xf32>
    %539 = arith.negf %538 : vector<2x32xf32>
    %540 = math.exp %539 : vector<2x32xf32>
    %cst_149 = arith.constant 1.000000e+00 : f32
    %541 = vector.broadcast %cst_149 : f32 to vector<2x32xf32>
    %542 = arith.addf %541, %540 : vector<2x32xf32>
    %543 = arith.divf %541, %542 : vector<2x32xf32>
    %544 = vector.extract_strided_slice %512 {offsets = [0, 32], sizes = [2, 32], strides = [1, 1]} : vector<2x128xf32> to vector<2x32xf32>
    %545 = arith.negf %544 : vector<2x32xf32>
    %546 = math.exp %545 : vector<2x32xf32>
    %cst_150 = arith.constant 1.000000e+00 : f32
    %547 = vector.broadcast %cst_150 : f32 to vector<2x32xf32>
    %548 = arith.addf %547, %546 : vector<2x32xf32>
    %549 = arith.divf %547, %548 : vector<2x32xf32>
    %550 = vector.extract_strided_slice %512 {offsets = [0, 64], sizes = [2, 32], strides = [1, 1]} : vector<2x128xf32> to vector<2x32xf32>
    %551 = math.tanh %550 : vector<2x32xf32>
    %552 = vector.extract_strided_slice %512 {offsets = [0, 96], sizes = [2, 32], strides = [1, 1]} : vector<2x128xf32> to vector<2x32xf32>
    %553 = arith.negf %552 : vector<2x32xf32>
    %554 = math.exp %553 : vector<2x32xf32>
    %cst_151 = arith.constant 1.000000e+00 : f32
    %555 = vector.broadcast %cst_151 : f32 to vector<2x32xf32>
    %556 = arith.addf %555, %554 : vector<2x32xf32>
    %557 = arith.divf %555, %556 : vector<2x32xf32>
    %558 = arith.mulf %549, %490 : vector<2x32xf32>
    %559 = arith.mulf %543, %551 : vector<2x32xf32>
    %560 = arith.addf %558, %559 : vector<2x32xf32>
    %561 = math.tanh %560 : vector<2x32xf32>
    %562 = arith.mulf %557, %561 : vector<2x32xf32>
    %563 = arith.truncf %537 : vector<2x32xf32> to vector<2x32xbf16>
    %c7_152 = arith.constant 7 : index
    %c0_153 = arith.constant 0 : index
    %c0_154 = arith.constant 0 : index
    %564 = vector.load %arg4[%c7_152, %c0_153, %c0_154] : memref<16x2x32xbf16, #tpu.memory_space<vmem>>, vector<1x2x32xbf16>
    %565 = vector.shape_cast %564 : vector<1x2x32xbf16> to vector<2x32xbf16>
    %566 = vector.shape_cast %563 : vector<2x32xbf16> to vector<1x2x32xbf16>
    tpu.vector_store %arg4[%c7_152, %c0_153, %c0_154], %566 {strides = array<i32>} : memref<16x2x32xbf16, #tpu.memory_space<vmem>>, vector<1x2x32xbf16>,
    %567 = arith.truncf %562 : vector<2x32xf32> to vector<2x32xbf16>
    %c8_155 = arith.constant 8 : index
    %c0_156 = arith.constant 0 : index
    %c0_157 = arith.constant 0 : index
    %568 = vector.load %arg5[%c8_155, %c0_156, %c0_157] : memref<16x2x32xbf16, #tpu.memory_space<vmem>>, vector<1x2x32xbf16>
    %569 = vector.shape_cast %568 : vector<1x2x32xbf16> to vector<2x32xbf16>
    %570 = vector.shape_cast %567 : vector<2x32xbf16> to vector<1x2x32xbf16>
    tpu.vector_store %arg5[%c8_155, %c0_156, %c0_157], %570 {strides = array<i32>} : memref<16x2x32xbf16, #tpu.memory_space<vmem>>, vector<1x2x32xbf16>,
    %c8_158 = arith.constant 8 : index
    %c0_159 = arith.constant 0 : index
    %c0_160 = arith.constant 0 : index
    %571 = vector.load %arg1[%c8_158, %c0_159, %c0_160] : memref<16x2x128xbf16, #tpu.memory_space<vmem>>, vector<1x2x128xbf16>
    %572 = vector.shape_cast %571 : vector<1x2x128xbf16> to vector<2x128xbf16>
    %573 = arith.extf %572 : vector<2x128xbf16> to vector<2x128xf32>
    %574 = arith.truncf %537 : vector<2x32xf32> to vector<2x32xbf16>
    %cst_161 = arith.constant dense<0.000000e+00> : vector<2x128xf32>
    %575 = tpu.matmul %574, %4, %cst_161 {dimension_numbers = #tpu.dot_dimension_numbers<[1], [0], [0], [1], [0, 0, 1, 1], [], []>} : vector<2x32xbf16>, vector<32x128xbf16>, vector<2x128xf32> -> vector<2x128xf32>
    %576 = arith.addf %573, %575 : vector<2x128xf32>
    %c7_162 = arith.constant 7 : index
    %c0_163 = arith.constant 0 : index
    %c0_164 = arith.constant 0 : index
    %577 = vector.load %arg2[%c7_162, %c0_163, %c0_164] : memref<16x2x128xbf16, #tpu.memory_space<vmem>>, vector<1x2x128xbf16>
    %578 = vector.shape_cast %577 : vector<1x2x128xbf16> to vector<2x128xbf16>
    %579 = arith.extf %578 : vector<2x128xbf16> to vector<2x128xf32>
    %580 = arith.truncf %562 : vector<2x32xf32> to vector<2x32xbf16>
    %cst_165 = arith.constant dense<0.000000e+00> : vector<2x128xf32>
    %581 = tpu.matmul %580, %6, %cst_165 {dimension_numbers = #tpu.dot_dimension_numbers<[1], [0], [0], [1], [0, 0, 1, 1], [], []>} : vector<2x32xbf16>, vector<32x128xbf16>, vector<2x128xf32> -> vector<2x128xf32>
    %582 = arith.addf %579, %581 : vector<2x128xf32>
    %583 = vector.extract_strided_slice %576 {offsets = [0, 0], sizes = [2, 32], strides = [1, 1]} : vector<2x128xf32> to vector<2x32xf32>
    %584 = arith.negf %583 : vector<2x32xf32>
    %585 = math.exp %584 : vector<2x32xf32>
    %cst_166 = arith.constant 1.000000e+00 : f32
    %586 = vector.broadcast %cst_166 : f32 to vector<2x32xf32>
    %587 = arith.addf %586, %585 : vector<2x32xf32>
    %588 = arith.divf %586, %587 : vector<2x32xf32>
    %589 = vector.extract_strided_slice %576 {offsets = [0, 32], sizes = [2, 32], strides = [1, 1]} : vector<2x128xf32> to vector<2x32xf32>
    %590 = arith.negf %589 : vector<2x32xf32>
    %591 = math.exp %590 : vector<2x32xf32>
    %cst_167 = arith.constant 1.000000e+00 : f32
    %592 = vector.broadcast %cst_167 : f32 to vector<2x32xf32>
    %593 = arith.addf %592, %591 : vector<2x32xf32>
    %594 = arith.divf %592, %593 : vector<2x32xf32>
    %595 = vector.extract_strided_slice %576 {offsets = [0, 64], sizes = [2, 32], strides = [1, 1]} : vector<2x128xf32> to vector<2x32xf32>
    %596 = math.tanh %595 : vector<2x32xf32>
    %597 = vector.extract_strided_slice %576 {offsets = [0, 96], sizes = [2, 32], strides = [1, 1]} : vector<2x128xf32> to vector<2x32xf32>
    %598 = arith.negf %597 : vector<2x32xf32>
    %599 = math.exp %598 : vector<2x32xf32>
    %cst_168 = arith.constant 1.000000e+00 : f32
    %600 = vector.broadcast %cst_168 : f32 to vector<2x32xf32>
    %601 = arith.addf %600, %599 : vector<2x32xf32>
    %602 = arith.divf %600, %601 : vector<2x32xf32>
    %603 = arith.mulf %594, %535 : vector<2x32xf32>
    %604 = arith.mulf %588, %596 : vector<2x32xf32>
    %605 = arith.addf %603, %604 : vector<2x32xf32>
    %606 = math.tanh %605 : vector<2x32xf32>
    %607 = arith.mulf %602, %606 : vector<2x32xf32>
    %608 = vector.extract_strided_slice %582 {offsets = [0, 0], sizes = [2, 32], strides = [1, 1]} : vector<2x128xf32> to vector<2x32xf32>
    %609 = arith.negf %608 : vector<2x32xf32>
    %610 = math.exp %609 : vector<2x32xf32>
    %cst_169 = arith.constant 1.000000e+00 : f32
    %611 = vector.broadcast %cst_169 : f32 to vector<2x32xf32>
    %612 = arith.addf %611, %610 : vector<2x32xf32>
    %613 = arith.divf %611, %612 : vector<2x32xf32>
    %614 = vector.extract_strided_slice %582 {offsets = [0, 32], sizes = [2, 32], strides = [1, 1]} : vector<2x128xf32> to vector<2x32xf32>
    %615 = arith.negf %614 : vector<2x32xf32>
    %616 = math.exp %615 : vector<2x32xf32>
    %cst_170 = arith.constant 1.000000e+00 : f32
    %617 = vector.broadcast %cst_170 : f32 to vector<2x32xf32>
    %618 = arith.addf %617, %616 : vector<2x32xf32>
    %619 = arith.divf %617, %618 : vector<2x32xf32>
    %620 = vector.extract_strided_slice %582 {offsets = [0, 64], sizes = [2, 32], strides = [1, 1]} : vector<2x128xf32> to vector<2x32xf32>
    %621 = math.tanh %620 : vector<2x32xf32>
    %622 = vector.extract_strided_slice %582 {offsets = [0, 96], sizes = [2, 32], strides = [1, 1]} : vector<2x128xf32> to vector<2x32xf32>
    %623 = arith.negf %622 : vector<2x32xf32>
    %624 = math.exp %623 : vector<2x32xf32>
    %cst_171 = arith.constant 1.000000e+00 : f32
    %625 = vector.broadcast %cst_171 : f32 to vector<2x32xf32>
    %626 = arith.addf %625, %624 : vector<2x32xf32>
    %627 = arith.divf %625, %626 : vector<2x32xf32>
    %628 = arith.mulf %619, %560 : vector<2x32xf32>
    %629 = arith.mulf %613, %621 : vector<2x32xf32>
    %630 = arith.addf %628, %629 : vector<2x32xf32>
    %631 = math.tanh %630 : vector<2x32xf32>
    %632 = arith.mulf %627, %631 : vector<2x32xf32>
    %633 = arith.truncf %607 : vector<2x32xf32> to vector<2x32xbf16>
    %c8_172 = arith.constant 8 : index
    %c0_173 = arith.constant 0 : index
    %c0_174 = arith.constant 0 : index
    %634 = vector.load %arg4[%c8_172, %c0_173, %c0_174] : memref<16x2x32xbf16, #tpu.memory_space<vmem>>, vector<1x2x32xbf16>
    %635 = vector.shape_cast %634 : vector<1x2x32xbf16> to vector<2x32xbf16>
    %636 = vector.shape_cast %633 : vector<2x32xbf16> to vector<1x2x32xbf16>
    tpu.vector_store %arg4[%c8_172, %c0_173, %c0_174], %636 {strides = array<i32>} : memref<16x2x32xbf16, #tpu.memory_space<vmem>>, vector<1x2x32xbf16>,
    %637 = arith.truncf %632 : vector<2x32xf32> to vector<2x32xbf16>
    %c7_175 = arith.constant 7 : index
    %c0_176 = arith.constant 0 : index
    %c0_177 = arith.constant 0 : index
    %638 = vector.load %arg5[%c7_175, %c0_176, %c0_177] : memref<16x2x32xbf16, #tpu.memory_space<vmem>>, vector<1x2x32xbf16>
    %639 = vector.shape_cast %638 : vector<1x2x32xbf16> to vector<2x32xbf16>
    %640 = vector.shape_cast %637 : vector<2x32xbf16> to vector<1x2x32xbf16>
    tpu.vector_store %arg5[%c7_175, %c0_176, %c0_177], %640 {strides = array<i32>} : memref<16x2x32xbf16, #tpu.memory_space<vmem>>, vector<1x2x32xbf16>,
    %c9_178 = arith.constant 9 : index
    %c0_179 = arith.constant 0 : index
    %c0_180 = arith.constant 0 : index
    %641 = vector.load %arg1[%c9_178, %c0_179, %c0_180] : memref<16x2x128xbf16, #tpu.memory_space<vmem>>, vector<1x2x128xbf16>
    %642 = vector.shape_cast %641 : vector<1x2x128xbf16> to vector<2x128xbf16>
    %643 = arith.extf %642 : vector<2x128xbf16> to vector<2x128xf32>
    %644 = arith.truncf %607 : vector<2x32xf32> to vector<2x32xbf16>
    %cst_181 = arith.constant dense<0.000000e+00> : vector<2x128xf32>
    %645 = tpu.matmul %644, %4, %cst_181 {dimension_numbers = #tpu.dot_dimension_numbers<[1], [0], [0], [1], [0, 0, 1, 1], [], []>} : vector<2x32xbf16>, vector<32x128xbf16>, vector<2x128xf32> -> vector<2x128xf32>
    %646 = arith.addf %643, %645 : vector<2x128xf32>
    %c6_182 = arith.constant 6 : index
    %c0_183 = arith.constant 0 : index
    %c0_184 = arith.constant 0 : index
    %647 = vector.load %arg2[%c6_182, %c0_183, %c0_184] : memref<16x2x128xbf16, #tpu.memory_space<vmem>>, vector<1x2x128xbf16>
    %648 = vector.shape_cast %647 : vector<1x2x128xbf16> to vector<2x128xbf16>
    %649 = arith.extf %648 : vector<2x128xbf16> to vector<2x128xf32>
    %650 = arith.truncf %632 : vector<2x32xf32> to vector<2x32xbf16>
    %cst_185 = arith.constant dense<0.000000e+00> : vector<2x128xf32>
    %651 = tpu.matmul %650, %6, %cst_185 {dimension_numbers = #tpu.dot_dimension_numbers<[1], [0], [0], [1], [0, 0, 1, 1], [], []>} : vector<2x32xbf16>, vector<32x128xbf16>, vector<2x128xf32> -> vector<2x128xf32>
    %652 = arith.addf %649, %651 : vector<2x128xf32>
    %653 = vector.extract_strided_slice %646 {offsets = [0, 0], sizes = [2, 32], strides = [1, 1]} : vector<2x128xf32> to vector<2x32xf32>
    %654 = arith.negf %653 : vector<2x32xf32>
    %655 = math.exp %654 : vector<2x32xf32>
    %cst_186 = arith.constant 1.000000e+00 : f32
    %656 = vector.broadcast %cst_186 : f32 to vector<2x32xf32>
    %657 = arith.addf %656, %655 : vector<2x32xf32>
    %658 = arith.divf %656, %657 : vector<2x32xf32>
    %659 = vector.extract_strided_slice %646 {offsets = [0, 32], sizes = [2, 32], strides = [1, 1]} : vector<2x128xf32> to vector<2x32xf32>
    %660 = arith.negf %659 : vector<2x32xf32>
    %661 = math.exp %660 : vector<2x32xf32>
    %cst_187 = arith.constant 1.000000e+00 : f32
    %662 = vector.broadcast %cst_187 : f32 to vector<2x32xf32>
    %663 = arith.addf %662, %661 : vector<2x32xf32>
    %664 = arith.divf %662, %663 : vector<2x32xf32>
    %665 = vector.extract_strided_slice %646 {offsets = [0, 64], sizes = [2, 32], strides = [1, 1]} : vector<2x128xf32> to vector<2x32xf32>
    %666 = math.tanh %665 : vector<2x32xf32>
    %667 = vector.extract_strided_slice %646 {offsets = [0, 96], sizes = [2, 32], strides = [1, 1]} : vector<2x128xf32> to vector<2x32xf32>
    %668 = arith.negf %667 : vector<2x32xf32>
    %669 = math.exp %668 : vector<2x32xf32>
    %cst_188 = arith.constant 1.000000e+00 : f32
    %670 = vector.broadcast %cst_188 : f32 to vector<2x32xf32>
    %671 = arith.addf %670, %669 : vector<2x32xf32>
    %672 = arith.divf %670, %671 : vector<2x32xf32>
    %673 = arith.mulf %664, %605 : vector<2x32xf32>
    %674 = arith.mulf %658, %666 : vector<2x32xf32>
    %675 = arith.addf %673, %674 : vector<2x32xf32>
    %676 = math.tanh %675 : vector<2x32xf32>
    %677 = arith.mulf %672, %676 : vector<2x32xf32>
    %678 = vector.extract_strided_slice %652 {offsets = [0, 0], sizes = [2, 32], strides = [1, 1]} : vector<2x128xf32> to vector<2x32xf32>
    %679 = arith.negf %678 : vector<2x32xf32>
    %680 = math.exp %679 : vector<2x32xf32>
    %cst_189 = arith.constant 1.000000e+00 : f32
    %681 = vector.broadcast %cst_189 : f32 to vector<2x32xf32>
    %682 = arith.addf %681, %680 : vector<2x32xf32>
    %683 = arith.divf %681, %682 : vector<2x32xf32>
    %684 = vector.extract_strided_slice %652 {offsets = [0, 32], sizes = [2, 32], strides = [1, 1]} : vector<2x128xf32> to vector<2x32xf32>
    %685 = arith.negf %684 : vector<2x32xf32>
    %686 = math.exp %685 : vector<2x32xf32>
    %cst_190 = arith.constant 1.000000e+00 : f32
    %687 = vector.broadcast %cst_190 : f32 to vector<2x32xf32>
    %688 = arith.addf %687, %686 : vector<2x32xf32>
    %689 = arith.divf %687, %688 : vector<2x32xf32>
    %690 = vector.extract_strided_slice %652 {offsets = [0, 64], sizes = [2, 32], strides = [1, 1]} : vector<2x128xf32> to vector<2x32xf32>
    %691 = math.tanh %690 : vector<2x32xf32>
    %692 = vector.extract_strided_slice %652 {offsets = [0, 96], sizes = [2, 32], strides = [1, 1]} : vector<2x128xf32> to vector<2x32xf32>
    %693 = arith.negf %692 : vector<2x32xf32>
    %694 = math.exp %693 : vector<2x32xf32>
    %cst_191 = arith.constant 1.000000e+00 : f32
    %695 = vector.broadcast %cst_191 : f32 to vector<2x32xf32>
    %696 = arith.addf %695, %694 : vector<2x32xf32>
    %697 = arith.divf %695, %696 : vector<2x32xf32>
    %698 = arith.mulf %689, %630 : vector<2x32xf32>
    %699 = arith.mulf %683, %691 : vector<2x32xf32>
    %700 = arith.addf %698, %699 : vector<2x32xf32>
    %701 = math.tanh %700 : vector<2x32xf32>
    %702 = arith.mulf %697, %701 : vector<2x32xf32>
    %703 = arith.truncf %677 : vector<2x32xf32> to vector<2x32xbf16>
    %c9_192 = arith.constant 9 : index
    %c0_193 = arith.constant 0 : index
    %c0_194 = arith.constant 0 : index
    %704 = vector.load %arg4[%c9_192, %c0_193, %c0_194] : memref<16x2x32xbf16, #tpu.memory_space<vmem>>, vector<1x2x32xbf16>
    %705 = vector.shape_cast %704 : vector<1x2x32xbf16> to vector<2x32xbf16>
    %706 = vector.shape_cast %703 : vector<2x32xbf16> to vector<1x2x32xbf16>
    tpu.vector_store %arg4[%c9_192, %c0_193, %c0_194], %706 {strides = array<i32>} : memref<16x2x32xbf16, #tpu.memory_space<vmem>>, vector<1x2x32xbf16>,
    %707 = arith.truncf %702 : vector<2x32xf32> to vector<2x32xbf16>
    %c6_195 = arith.constant 6 : index
    %c0_196 = arith.constant 0 : index
    %c0_197 = arith.constant 0 : index
    %708 = vector.load %arg5[%c6_195, %c0_196, %c0_197] : memref<16x2x32xbf16, #tpu.memory_space<vmem>>, vector<1x2x32xbf16>
    %709 = vector.shape_cast %708 : vector<1x2x32xbf16> to vector<2x32xbf16>
    %710 = vector.shape_cast %707 : vector<2x32xbf16> to vector<1x2x32xbf16>
    tpu.vector_store %arg5[%c6_195, %c0_196, %c0_197], %710 {strides = array<i32>} : memref<16x2x32xbf16, #tpu.memory_space<vmem>>, vector<1x2x32xbf16>,
    %c10_198 = arith.constant 10 : index
    %c0_199 = arith.constant 0 : index
    %c0_200 = arith.constant 0 : index
    %711 = vector.load %arg1[%c10_198, %c0_199, %c0_200] : memref<16x2x128xbf16, #tpu.memory_space<vmem>>, vector<1x2x128xbf16>
    %712 = vector.shape_cast %711 : vector<1x2x128xbf16> to vector<2x128xbf16>
    %713 = arith.extf %712 : vector<2x128xbf16> to vector<2x128xf32>
    %714 = arith.truncf %677 : vector<2x32xf32> to vector<2x32xbf16>
    %cst_201 = arith.constant dense<0.000000e+00> : vector<2x128xf32>
    %715 = tpu.matmul %714, %4, %cst_201 {dimension_numbers = #tpu.dot_dimension_numbers<[1], [0], [0], [1], [0, 0, 1, 1], [], []>} : vector<2x32xbf16>, vector<32x128xbf16>, vector<2x128xf32> -> vector<2x128xf32>
    %716 = arith.addf %713, %715 : vector<2x128xf32>
    %c5_202 = arith.constant 5 : index
    %c0_203 = arith.constant 0 : index
    %c0_204 = arith.constant 0 : index
    %717 = vector.load %arg2[%c5_202, %c0_203, %c0_204] : memref<16x2x128xbf16, #tpu.memory_space<vmem>>, vector<1x2x128xbf16>
    %718 = vector.shape_cast %717 : vector<1x2x128xbf16> to vector<2x128xbf16>
    %719 = arith.extf %718 : vector<2x128xbf16> to vector<2x128xf32>
    %720 = arith.truncf %702 : vector<2x32xf32> to vector<2x32xbf16>
    %cst_205 = arith.constant dense<0.000000e+00> : vector<2x128xf32>
    %721 = tpu.matmul %720, %6, %cst_205 {dimension_numbers = #tpu.dot_dimension_numbers<[1], [0], [0], [1], [0, 0, 1, 1], [], []>} : vector<2x32xbf16>, vector<32x128xbf16>, vector<2x128xf32> -> vector<2x128xf32>
    %722 = arith.addf %719, %721 : vector<2x128xf32>
    %723 = vector.extract_strided_slice %716 {offsets = [0, 0], sizes = [2, 32], strides = [1, 1]} : vector<2x128xf32> to vector<2x32xf32>
    %724 = arith.negf %723 : vector<2x32xf32>
    %725 = math.exp %724 : vector<2x32xf32>
    %cst_206 = arith.constant 1.000000e+00 : f32
    %726 = vector.broadcast %cst_206 : f32 to vector<2x32xf32>
    %727 = arith.addf %726, %725 : vector<2x32xf32>
    %728 = arith.divf %726, %727 : vector<2x32xf32>
    %729 = vector.extract_strided_slice %716 {offsets = [0, 32], sizes = [2, 32], strides = [1, 1]} : vector<2x128xf32> to vector<2x32xf32>
    %730 = arith.negf %729 : vector<2x32xf32>
    %731 = math.exp %730 : vector<2x32xf32>
    %cst_207 = arith.constant 1.000000e+00 : f32
    %732 = vector.broadcast %cst_207 : f32 to vector<2x32xf32>
    %733 = arith.addf %732, %731 : vector<2x32xf32>
    %734 = arith.divf %732, %733 : vector<2x32xf32>
    %735 = vector.extract_strided_slice %716 {offsets = [0, 64], sizes = [2, 32], strides = [1, 1]} : vector<2x128xf32> to vector<2x32xf32>
    %736 = math.tanh %735 : vector<2x32xf32>
    %737 = vector.extract_strided_slice %716 {offsets = [0, 96], sizes = [2, 32], strides = [1, 1]} : vector<2x128xf32> to vector<2x32xf32>
    %738 = arith.negf %737 : vector<2x32xf32>
    %739 = math.exp %738 : vector<2x32xf32>
    %cst_208 = arith.constant 1.000000e+00 : f32
    %740 = vector.broadcast %cst_208 : f32 to vector<2x32xf32>
    %741 = arith.addf %740, %739 : vector<2x32xf32>
    %742 = arith.divf %740, %741 : vector<2x32xf32>
    %743 = arith.mulf %734, %675 : vector<2x32xf32>
    %744 = arith.mulf %728, %736 : vector<2x32xf32>
    %745 = arith.addf %743, %744 : vector<2x32xf32>
    %746 = math.tanh %745 : vector<2x32xf32>
    %747 = arith.mulf %742, %746 : vector<2x32xf32>
    %748 = vector.extract_strided_slice %722 {offsets = [0, 0], sizes = [2, 32], strides = [1, 1]} : vector<2x128xf32> to vector<2x32xf32>
    %749 = arith.negf %748 : vector<2x32xf32>
    %750 = math.exp %749 : vector<2x32xf32>
    %cst_209 = arith.constant 1.000000e+00 : f32
    %751 = vector.broadcast %cst_209 : f32 to vector<2x32xf32>
    %752 = arith.addf %751, %750 : vector<2x32xf32>
    %753 = arith.divf %751, %752 : vector<2x32xf32>
    %754 = vector.extract_strided_slice %722 {offsets = [0, 32], sizes = [2, 32], strides = [1, 1]} : vector<2x128xf32> to vector<2x32xf32>
    %755 = arith.negf %754 : vector<2x32xf32>
    %756 = math.exp %755 : vector<2x32xf32>
    %cst_210 = arith.constant 1.000000e+00 : f32
    %757 = vector.broadcast %cst_210 : f32 to vector<2x32xf32>
    %758 = arith.addf %757, %756 : vector<2x32xf32>
    %759 = arith.divf %757, %758 : vector<2x32xf32>
    %760 = vector.extract_strided_slice %722 {offsets = [0, 64], sizes = [2, 32], strides = [1, 1]} : vector<2x128xf32> to vector<2x32xf32>
    %761 = math.tanh %760 : vector<2x32xf32>
    %762 = vector.extract_strided_slice %722 {offsets = [0, 96], sizes = [2, 32], strides = [1, 1]} : vector<2x128xf32> to vector<2x32xf32>
    %763 = arith.negf %762 : vector<2x32xf32>
    %764 = math.exp %763 : vector<2x32xf32>
    %cst_211 = arith.constant 1.000000e+00 : f32
    %765 = vector.broadcast %cst_211 : f32 to vector<2x32xf32>
    %766 = arith.addf %765, %764 : vector<2x32xf32>
    %767 = arith.divf %765, %766 : vector<2x32xf32>
    %768 = arith.mulf %759, %700 : vector<2x32xf32>
    %769 = arith.mulf %753, %761 : vector<2x32xf32>
    %770 = arith.addf %768, %769 : vector<2x32xf32>
    %771 = math.tanh %770 : vector<2x32xf32>
    %772 = arith.mulf %767, %771 : vector<2x32xf32>
    %773 = arith.truncf %747 : vector<2x32xf32> to vector<2x32xbf16>
    %c10_212 = arith.constant 10 : index
    %c0_213 = arith.constant 0 : index
    %c0_214 = arith.constant 0 : index
    %774 = vector.load %arg4[%c10_212, %c0_213, %c0_214] : memref<16x2x32xbf16, #tpu.memory_space<vmem>>, vector<1x2x32xbf16>
    %775 = vector.shape_cast %774 : vector<1x2x32xbf16> to vector<2x32xbf16>
    %776 = vector.shape_cast %773 : vector<2x32xbf16> to vector<1x2x32xbf16>
    tpu.vector_store %arg4[%c10_212, %c0_213, %c0_214], %776 {strides = array<i32>} : memref<16x2x32xbf16, #tpu.memory_space<vmem>>, vector<1x2x32xbf16>,
    %777 = arith.truncf %772 : vector<2x32xf32> to vector<2x32xbf16>
    %c5_215 = arith.constant 5 : index
    %c0_216 = arith.constant 0 : index
    %c0_217 = arith.constant 0 : index
    %778 = vector.load %arg5[%c5_215, %c0_216, %c0_217] : memref<16x2x32xbf16, #tpu.memory_space<vmem>>, vector<1x2x32xbf16>
    %779 = vector.shape_cast %778 : vector<1x2x32xbf16> to vector<2x32xbf16>
    %780 = vector.shape_cast %777 : vector<2x32xbf16> to vector<1x2x32xbf16>
    tpu.vector_store %arg5[%c5_215, %c0_216, %c0_217], %780 {strides = array<i32>} : memref<16x2x32xbf16, #tpu.memory_space<vmem>>, vector<1x2x32xbf16>,
    %c11_218 = arith.constant 11 : index
    %c0_219 = arith.constant 0 : index
    %c0_220 = arith.constant 0 : index
    %781 = vector.load %arg1[%c11_218, %c0_219, %c0_220] : memref<16x2x128xbf16, #tpu.memory_space<vmem>>, vector<1x2x128xbf16>
    %782 = vector.shape_cast %781 : vector<1x2x128xbf16> to vector<2x128xbf16>
    %783 = arith.extf %782 : vector<2x128xbf16> to vector<2x128xf32>
    %784 = arith.truncf %747 : vector<2x32xf32> to vector<2x32xbf16>
    %cst_221 = arith.constant dense<0.000000e+00> : vector<2x128xf32>
    %785 = tpu.matmul %784, %4, %cst_221 {dimension_numbers = #tpu.dot_dimension_numbers<[1], [0], [0], [1], [0, 0, 1, 1], [], []>} : vector<2x32xbf16>, vector<32x128xbf16>, vector<2x128xf32> -> vector<2x128xf32>
    %786 = arith.addf %783, %785 : vector<2x128xf32>
    %c4_222 = arith.constant 4 : index
    %c0_223 = arith.constant 0 : index
    %c0_224 = arith.constant 0 : index
    %787 = vector.load %arg2[%c4_222, %c0_223, %c0_224] : memref<16x2x128xbf16, #tpu.memory_space<vmem>>, vector<1x2x128xbf16>
    %788 = vector.shape_cast %787 : vector<1x2x128xbf16> to vector<2x128xbf16>
    %789 = arith.extf %788 : vector<2x128xbf16> to vector<2x128xf32>
    %790 = arith.truncf %772 : vector<2x32xf32> to vector<2x32xbf16>
    %cst_225 = arith.constant dense<0.000000e+00> : vector<2x128xf32>
    %791 = tpu.matmul %790, %6, %cst_225 {dimension_numbers = #tpu.dot_dimension_numbers<[1], [0], [0], [1], [0, 0, 1, 1], [], []>} : vector<2x32xbf16>, vector<32x128xbf16>, vector<2x128xf32> -> vector<2x128xf32>
    %792 = arith.addf %789, %791 : vector<2x128xf32>
    %793 = vector.extract_strided_slice %786 {offsets = [0, 0], sizes = [2, 32], strides = [1, 1]} : vector<2x128xf32> to vector<2x32xf32>
    %794 = arith.negf %793 : vector<2x32xf32>
    %795 = math.exp %794 : vector<2x32xf32>
    %cst_226 = arith.constant 1.000000e+00 : f32
    %796 = vector.broadcast %cst_226 : f32 to vector<2x32xf32>
    %797 = arith.addf %796, %795 : vector<2x32xf32>
    %798 = arith.divf %796, %797 : vector<2x32xf32>
    %799 = vector.extract_strided_slice %786 {offsets = [0, 32], sizes = [2, 32], strides = [1, 1]} : vector<2x128xf32> to vector<2x32xf32>
    %800 = arith.negf %799 : vector<2x32xf32>
    %801 = math.exp %800 : vector<2x32xf32>
    %cst_227 = arith.constant 1.000000e+00 : f32
    %802 = vector.broadcast %cst_227 : f32 to vector<2x32xf32>
    %803 = arith.addf %802, %801 : vector<2x32xf32>
    %804 = arith.divf %802, %803 : vector<2x32xf32>
    %805 = vector.extract_strided_slice %786 {offsets = [0, 64], sizes = [2, 32], strides = [1, 1]} : vector<2x128xf32> to vector<2x32xf32>
    %806 = math.tanh %805 : vector<2x32xf32>
    %807 = vector.extract_strided_slice %786 {offsets = [0, 96], sizes = [2, 32], strides = [1, 1]} : vector<2x128xf32> to vector<2x32xf32>
    %808 = arith.negf %807 : vector<2x32xf32>
    %809 = math.exp %808 : vector<2x32xf32>
    %cst_228 = arith.constant 1.000000e+00 : f32
    %810 = vector.broadcast %cst_228 : f32 to vector<2x32xf32>
    %811 = arith.addf %810, %809 : vector<2x32xf32>
    %812 = arith.divf %810, %811 : vector<2x32xf32>
    %813 = arith.mulf %804, %745 : vector<2x32xf32>
    %814 = arith.mulf %798, %806 : vector<2x32xf32>
    %815 = arith.addf %813, %814 : vector<2x32xf32>
    %816 = math.tanh %815 : vector<2x32xf32>
    %817 = arith.mulf %812, %816 : vector<2x32xf32>
    %818 = vector.extract_strided_slice %792 {offsets = [0, 0], sizes = [2, 32], strides = [1, 1]} : vector<2x128xf32> to vector<2x32xf32>
    %819 = arith.negf %818 : vector<2x32xf32>
    %820 = math.exp %819 : vector<2x32xf32>
    %cst_229 = arith.constant 1.000000e+00 : f32
    %821 = vector.broadcast %cst_229 : f32 to vector<2x32xf32>
    %822 = arith.addf %821, %820 : vector<2x32xf32>
    %823 = arith.divf %821, %822 : vector<2x32xf32>
    %824 = vector.extract_strided_slice %792 {offsets = [0, 32], sizes = [2, 32], strides = [1, 1]} : vector<2x128xf32> to vector<2x32xf32>
    %825 = arith.negf %824 : vector<2x32xf32>
    %826 = math.exp %825 : vector<2x32xf32>
    %cst_230 = arith.constant 1.000000e+00 : f32
    %827 = vector.broadcast %cst_230 : f32 to vector<2x32xf32>
    %828 = arith.addf %827, %826 : vector<2x32xf32>
    %829 = arith.divf %827, %828 : vector<2x32xf32>
    %830 = vector.extract_strided_slice %792 {offsets = [0, 64], sizes = [2, 32], strides = [1, 1]} : vector<2x128xf32> to vector<2x32xf32>
    %831 = math.tanh %830 : vector<2x32xf32>
    %832 = vector.extract_strided_slice %792 {offsets = [0, 96], sizes = [2, 32], strides = [1, 1]} : vector<2x128xf32> to vector<2x32xf32>
    %833 = arith.negf %832 : vector<2x32xf32>
    %834 = math.exp %833 : vector<2x32xf32>
    %cst_231 = arith.constant 1.000000e+00 : f32
    %835 = vector.broadcast %cst_231 : f32 to vector<2x32xf32>
    %836 = arith.addf %835, %834 : vector<2x32xf32>
    %837 = arith.divf %835, %836 : vector<2x32xf32>
    %838 = arith.mulf %829, %770 : vector<2x32xf32>
    %839 = arith.mulf %823, %831 : vector<2x32xf32>
    %840 = arith.addf %838, %839 : vector<2x32xf32>
    %841 = math.tanh %840 : vector<2x32xf32>
    %842 = arith.mulf %837, %841 : vector<2x32xf32>
    %843 = arith.truncf %817 : vector<2x32xf32> to vector<2x32xbf16>
    %c11_232 = arith.constant 11 : index
    %c0_233 = arith.constant 0 : index
    %c0_234 = arith.constant 0 : index
    %844 = vector.load %arg4[%c11_232, %c0_233, %c0_234] : memref<16x2x32xbf16, #tpu.memory_space<vmem>>, vector<1x2x32xbf16>
    %845 = vector.shape_cast %844 : vector<1x2x32xbf16> to vector<2x32xbf16>
    %846 = vector.shape_cast %843 : vector<2x32xbf16> to vector<1x2x32xbf16>
    tpu.vector_store %arg4[%c11_232, %c0_233, %c0_234], %846 {strides = array<i32>} : memref<16x2x32xbf16, #tpu.memory_space<vmem>>, vector<1x2x32xbf16>,
    %847 = arith.truncf %842 : vector<2x32xf32> to vector<2x32xbf16>
    %c4_235 = arith.constant 4 : index
    %c0_236 = arith.constant 0 : index
    %c0_237 = arith.constant 0 : index
    %848 = vector.load %arg5[%c4_235, %c0_236, %c0_237] : memref<16x2x32xbf16, #tpu.memory_space<vmem>>, vector<1x2x32xbf16>
    %849 = vector.shape_cast %848 : vector<1x2x32xbf16> to vector<2x32xbf16>
    %850 = vector.shape_cast %847 : vector<2x32xbf16> to vector<1x2x32xbf16>
    tpu.vector_store %arg5[%c4_235, %c0_236, %c0_237], %850 {strides = array<i32>} : memref<16x2x32xbf16, #tpu.memory_space<vmem>>, vector<1x2x32xbf16>,
    %c12_238 = arith.constant 12 : index
    %c0_239 = arith.constant 0 : index
    %c0_240 = arith.constant 0 : index
    %851 = vector.load %arg1[%c12_238, %c0_239, %c0_240] : memref<16x2x128xbf16, #tpu.memory_space<vmem>>, vector<1x2x128xbf16>
    %852 = vector.shape_cast %851 : vector<1x2x128xbf16> to vector<2x128xbf16>
    %853 = arith.extf %852 : vector<2x128xbf16> to vector<2x128xf32>
    %854 = arith.truncf %817 : vector<2x32xf32> to vector<2x32xbf16>
    %cst_241 = arith.constant dense<0.000000e+00> : vector<2x128xf32>
    %855 = tpu.matmul %854, %4, %cst_241 {dimension_numbers = #tpu.dot_dimension_numbers<[1], [0], [0], [1], [0, 0, 1, 1], [], []>} : vector<2x32xbf16>, vector<32x128xbf16>, vector<2x128xf32> -> vector<2x128xf32>
    %856 = arith.addf %853, %855 : vector<2x128xf32>
    %c3_242 = arith.constant 3 : index
    %c0_243 = arith.constant 0 : index
    %c0_244 = arith.constant 0 : index
    %857 = vector.load %arg2[%c3_242, %c0_243, %c0_244] : memref<16x2x128xbf16, #tpu.memory_space<vmem>>, vector<1x2x128xbf16>
    %858 = vector.shape_cast %857 : vector<1x2x128xbf16> to vector<2x128xbf16>
    %859 = arith.extf %858 : vector<2x128xbf16> to vector<2x128xf32>
    %860 = arith.truncf %842 : vector<2x32xf32> to vector<2x32xbf16>
    %cst_245 = arith.constant dense<0.000000e+00> : vector<2x128xf32>
    %861 = tpu.matmul %860, %6, %cst_245 {dimension_numbers = #tpu.dot_dimension_numbers<[1], [0], [0], [1], [0, 0, 1, 1], [], []>} : vector<2x32xbf16>, vector<32x128xbf16>, vector<2x128xf32> -> vector<2x128xf32>
    %862 = arith.addf %859, %861 : vector<2x128xf32>
    %863 = vector.extract_strided_slice %856 {offsets = [0, 0], sizes = [2, 32], strides = [1, 1]} : vector<2x128xf32> to vector<2x32xf32>
    %864 = arith.negf %863 : vector<2x32xf32>
    %865 = math.exp %864 : vector<2x32xf32>
    %cst_246 = arith.constant 1.000000e+00 : f32
    %866 = vector.broadcast %cst_246 : f32 to vector<2x32xf32>
    %867 = arith.addf %866, %865 : vector<2x32xf32>
    %868 = arith.divf %866, %867 : vector<2x32xf32>
    %869 = vector.extract_strided_slice %856 {offsets = [0, 32], sizes = [2, 32], strides = [1, 1]} : vector<2x128xf32> to vector<2x32xf32>
    %870 = arith.negf %869 : vector<2x32xf32>
    %871 = math.exp %870 : vector<2x32xf32>
    %cst_247 = arith.constant 1.000000e+00 : f32
    %872 = vector.broadcast %cst_247 : f32 to vector<2x32xf32>
    %873 = arith.addf %872, %871 : vector<2x32xf32>
    %874 = arith.divf %872, %873 : vector<2x32xf32>
    %875 = vector.extract_strided_slice %856 {offsets = [0, 64], sizes = [2, 32], strides = [1, 1]} : vector<2x128xf32> to vector<2x32xf32>
    %876 = math.tanh %875 : vector<2x32xf32>
    %877 = vector.extract_strided_slice %856 {offsets = [0, 96], sizes = [2, 32], strides = [1, 1]} : vector<2x128xf32> to vector<2x32xf32>
    %878 = arith.negf %877 : vector<2x32xf32>
    %879 = math.exp %878 : vector<2x32xf32>
    %cst_248 = arith.constant 1.000000e+00 : f32
    %880 = vector.broadcast %cst_248 : f32 to vector<2x32xf32>
    %881 = arith.addf %880, %879 : vector<2x32xf32>
    %882 = arith.divf %880, %881 : vector<2x32xf32>
    %883 = arith.mulf %874, %815 : vector<2x32xf32>
    %884 = arith.mulf %868, %876 : vector<2x32xf32>
    %885 = arith.addf %883, %884 : vector<2x32xf32>
    %886 = math.tanh %885 : vector<2x32xf32>
    %887 = arith.mulf %882, %886 : vector<2x32xf32>
    %888 = vector.extract_strided_slice %862 {offsets = [0, 0], sizes = [2, 32], strides = [1, 1]} : vector<2x128xf32> to vector<2x32xf32>
    %889 = arith.negf %888 : vector<2x32xf32>
    %890 = math.exp %889 : vector<2x32xf32>
    %cst_249 = arith.constant 1.000000e+00 : f32
    %891 = vector.broadcast %cst_249 : f32 to vector<2x32xf32>
    %892 = arith.addf %891, %890 : vector<2x32xf32>
    %893 = arith.divf %891, %892 : vector<2x32xf32>
    %894 = vector.extract_strided_slice %862 {offsets = [0, 32], sizes = [2, 32], strides = [1, 1]} : vector<2x128xf32> to vector<2x32xf32>
    %895 = arith.negf %894 : vector<2x32xf32>
    %896 = math.exp %895 : vector<2x32xf32>
    %cst_250 = arith.constant 1.000000e+00 : f32
    %897 = vector.broadcast %cst_250 : f32 to vector<2x32xf32>
    %898 = arith.addf %897, %896 : vector<2x32xf32>
    %899 = arith.divf %897, %898 : vector<2x32xf32>
    %900 = vector.extract_strided_slice %862 {offsets = [0, 64], sizes = [2, 32], strides = [1, 1]} : vector<2x128xf32> to vector<2x32xf32>
    %901 = math.tanh %900 : vector<2x32xf32>
    %902 = vector.extract_strided_slice %862 {offsets = [0, 96], sizes = [2, 32], strides = [1, 1]} : vector<2x128xf32> to vector<2x32xf32>
    %903 = arith.negf %902 : vector<2x32xf32>
    %904 = math.exp %903 : vector<2x32xf32>
    %cst_251 = arith.constant 1.000000e+00 : f32
    %905 = vector.broadcast %cst_251 : f32 to vector<2x32xf32>
    %906 = arith.addf %905, %904 : vector<2x32xf32>
    %907 = arith.divf %905, %906 : vector<2x32xf32>
    %908 = arith.mulf %899, %840 : vector<2x32xf32>
    %909 = arith.mulf %893, %901 : vector<2x32xf32>
    %910 = arith.addf %908, %909 : vector<2x32xf32>
    %911 = math.tanh %910 : vector<2x32xf32>
    %912 = arith.mulf %907, %911 : vector<2x32xf32>
    %913 = arith.truncf %887 : vector<2x32xf32> to vector<2x32xbf16>
    %c12_252 = arith.constant 12 : index
    %c0_253 = arith.constant 0 : index
    %c0_254 = arith.constant 0 : index
    %914 = vector.load %arg4[%c12_252, %c0_253, %c0_254] : memref<16x2x32xbf16, #tpu.memory_space<vmem>>, vector<1x2x32xbf16>
    %915 = vector.shape_cast %914 : vector<1x2x32xbf16> to vector<2x32xbf16>
    %916 = vector.shape_cast %913 : vector<2x32xbf16> to vector<1x2x32xbf16>
    tpu.vector_store %arg4[%c12_252, %c0_253, %c0_254], %916 {strides = array<i32>} : memref<16x2x32xbf16, #tpu.memory_space<vmem>>, vector<1x2x32xbf16>,
    %917 = arith.truncf %912 : vector<2x32xf32> to vector<2x32xbf16>
    %c3_255 = arith.constant 3 : index
    %c0_256 = arith.constant 0 : index
    %c0_257 = arith.constant 0 : index
    %918 = vector.load %arg5[%c3_255, %c0_256, %c0_257] : memref<16x2x32xbf16, #tpu.memory_space<vmem>>, vector<1x2x32xbf16>
    %919 = vector.shape_cast %918 : vector<1x2x32xbf16> to vector<2x32xbf16>
    %920 = vector.shape_cast %917 : vector<2x32xbf16> to vector<1x2x32xbf16>
    tpu.vector_store %arg5[%c3_255, %c0_256, %c0_257], %920 {strides = array<i32>} : memref<16x2x32xbf16, #tpu.memory_space<vmem>>, vector<1x2x32xbf16>,
    %c13_258 = arith.constant 13 : index
    %c0_259 = arith.constant 0 : index
    %c0_260 = arith.constant 0 : index
    %921 = vector.load %arg1[%c13_258, %c0_259, %c0_260] : memref<16x2x128xbf16, #tpu.memory_space<vmem>>, vector<1x2x128xbf16>
    %922 = vector.shape_cast %921 : vector<1x2x128xbf16> to vector<2x128xbf16>
    %923 = arith.extf %922 : vector<2x128xbf16> to vector<2x128xf32>
    %924 = arith.truncf %887 : vector<2x32xf32> to vector<2x32xbf16>
    %cst_261 = arith.constant dense<0.000000e+00> : vector<2x128xf32>
    %925 = tpu.matmul %924, %4, %cst_261 {dimension_numbers = #tpu.dot_dimension_numbers<[1], [0], [0], [1], [0, 0, 1, 1], [], []>} : vector<2x32xbf16>, vector<32x128xbf16>, vector<2x128xf32> -> vector<2x128xf32>
    %926 = arith.addf %923, %925 : vector<2x128xf32>
    %c2_262 = arith.constant 2 : index
    %c0_263 = arith.constant 0 : index
    %c0_264 = arith.constant 0 : index
    %927 = vector.load %arg2[%c2_262, %c0_263, %c0_264] : memref<16x2x128xbf16, #tpu.memory_space<vmem>>, vector<1x2x128xbf16>
    %928 = vector.shape_cast %927 : vector<1x2x128xbf16> to vector<2x128xbf16>
    %929 = arith.extf %928 : vector<2x128xbf16> to vector<2x128xf32>
    %930 = arith.truncf %912 : vector<2x32xf32> to vector<2x32xbf16>
    %cst_265 = arith.constant dense<0.000000e+00> : vector<2x128xf32>
    %931 = tpu.matmul %930, %6, %cst_265 {dimension_numbers = #tpu.dot_dimension_numbers<[1], [0], [0], [1], [0, 0, 1, 1], [], []>} : vector<2x32xbf16>, vector<32x128xbf16>, vector<2x128xf32> -> vector<2x128xf32>
    %932 = arith.addf %929, %931 : vector<2x128xf32>
    %933 = vector.extract_strided_slice %926 {offsets = [0, 0], sizes = [2, 32], strides = [1, 1]} : vector<2x128xf32> to vector<2x32xf32>
    %934 = arith.negf %933 : vector<2x32xf32>
    %935 = math.exp %934 : vector<2x32xf32>
    %cst_266 = arith.constant 1.000000e+00 : f32
    %936 = vector.broadcast %cst_266 : f32 to vector<2x32xf32>
    %937 = arith.addf %936, %935 : vector<2x32xf32>
    %938 = arith.divf %936, %937 : vector<2x32xf32>
    %939 = vector.extract_strided_slice %926 {offsets = [0, 32], sizes = [2, 32], strides = [1, 1]} : vector<2x128xf32> to vector<2x32xf32>
    %940 = arith.negf %939 : vector<2x32xf32>
    %941 = math.exp %940 : vector<2x32xf32>
    %cst_267 = arith.constant 1.000000e+00 : f32
    %942 = vector.broadcast %cst_267 : f32 to vector<2x32xf32>
    %943 = arith.addf %942, %941 : vector<2x32xf32>
    %944 = arith.divf %942, %943 : vector<2x32xf32>
    %945 = vector.extract_strided_slice %926 {offsets = [0, 64], sizes = [2, 32], strides = [1, 1]} : vector<2x128xf32> to vector<2x32xf32>
    %946 = math.tanh %945 : vector<2x32xf32>
    %947 = vector.extract_strided_slice %926 {offsets = [0, 96], sizes = [2, 32], strides = [1, 1]} : vector<2x128xf32> to vector<2x32xf32>
    %948 = arith.negf %947 : vector<2x32xf32>
    %949 = math.exp %948 : vector<2x32xf32>
    %cst_268 = arith.constant 1.000000e+00 : f32
    %950 = vector.broadcast %cst_268 : f32 to vector<2x32xf32>
    %951 = arith.addf %950, %949 : vector<2x32xf32>
    %952 = arith.divf %950, %951 : vector<2x32xf32>
    %953 = arith.mulf %944, %885 : vector<2x32xf32>
    %954 = arith.mulf %938, %946 : vector<2x32xf32>
    %955 = arith.addf %953, %954 : vector<2x32xf32>
    %956 = math.tanh %955 : vector<2x32xf32>
    %957 = arith.mulf %952, %956 : vector<2x32xf32>
    %958 = vector.extract_strided_slice %932 {offsets = [0, 0], sizes = [2, 32], strides = [1, 1]} : vector<2x128xf32> to vector<2x32xf32>
    %959 = arith.negf %958 : vector<2x32xf32>
    %960 = math.exp %959 : vector<2x32xf32>
    %cst_269 = arith.constant 1.000000e+00 : f32
    %961 = vector.broadcast %cst_269 : f32 to vector<2x32xf32>
    %962 = arith.addf %961, %960 : vector<2x32xf32>
    %963 = arith.divf %961, %962 : vector<2x32xf32>
    %964 = vector.extract_strided_slice %932 {offsets = [0, 32], sizes = [2, 32], strides = [1, 1]} : vector<2x128xf32> to vector<2x32xf32>
    %965 = arith.negf %964 : vector<2x32xf32>
    %966 = math.exp %965 : vector<2x32xf32>
    %cst_270 = arith.constant 1.000000e+00 : f32
    %967 = vector.broadcast %cst_270 : f32 to vector<2x32xf32>
    %968 = arith.addf %967, %966 : vector<2x32xf32>
    %969 = arith.divf %967, %968 : vector<2x32xf32>
    %970 = vector.extract_strided_slice %932 {offsets = [0, 64], sizes = [2, 32], strides = [1, 1]} : vector<2x128xf32> to vector<2x32xf32>
    %971 = math.tanh %970 : vector<2x32xf32>
    %972 = vector.extract_strided_slice %932 {offsets = [0, 96], sizes = [2, 32], strides = [1, 1]} : vector<2x128xf32> to vector<2x32xf32>
    %973 = arith.negf %972 : vector<2x32xf32>
    %974 = math.exp %973 : vector<2x32xf32>
    %cst_271 = arith.constant 1.000000e+00 : f32
    %975 = vector.broadcast %cst_271 : f32 to vector<2x32xf32>
    %976 = arith.addf %975, %974 : vector<2x32xf32>
    %977 = arith.divf %975, %976 : vector<2x32xf32>
    %978 = arith.mulf %969, %910 : vector<2x32xf32>
    %979 = arith.mulf %963, %971 : vector<2x32xf32>
    %980 = arith.addf %978, %979 : vector<2x32xf32>
    %981 = math.tanh %980 : vector<2x32xf32>
    %982 = arith.mulf %977, %981 : vector<2x32xf32>
    %983 = arith.truncf %957 : vector<2x32xf32> to vector<2x32xbf16>
    %c13_272 = arith.constant 13 : index
    %c0_273 = arith.constant 0 : index
    %c0_274 = arith.constant 0 : index
    %984 = vector.load %arg4[%c13_272, %c0_273, %c0_274] : memref<16x2x32xbf16, #tpu.memory_space<vmem>>, vector<1x2x32xbf16>
    %985 = vector.shape_cast %984 : vector<1x2x32xbf16> to vector<2x32xbf16>
    %986 = vector.shape_cast %983 : vector<2x32xbf16> to vector<1x2x32xbf16>
    tpu.vector_store %arg4[%c13_272, %c0_273, %c0_274], %986 {strides = array<i32>} : memref<16x2x32xbf16, #tpu.memory_space<vmem>>, vector<1x2x32xbf16>,
    %987 = arith.truncf %982 : vector<2x32xf32> to vector<2x32xbf16>
    %c2_275 = arith.constant 2 : index
    %c0_276 = arith.constant 0 : index
    %c0_277 = arith.constant 0 : index
    %988 = vector.load %arg5[%c2_275, %c0_276, %c0_277] : memref<16x2x32xbf16, #tpu.memory_space<vmem>>, vector<1x2x32xbf16>
    %989 = vector.shape_cast %988 : vector<1x2x32xbf16> to vector<2x32xbf16>
    %990 = vector.shape_cast %987 : vector<2x32xbf16> to vector<1x2x32xbf16>
    tpu.vector_store %arg5[%c2_275, %c0_276, %c0_277], %990 {strides = array<i32>} : memref<16x2x32xbf16, #tpu.memory_space<vmem>>, vector<1x2x32xbf16>,
    %c14_278 = arith.constant 14 : index
    %c0_279 = arith.constant 0 : index
    %c0_280 = arith.constant 0 : index
    %991 = vector.load %arg1[%c14_278, %c0_279, %c0_280] : memref<16x2x128xbf16, #tpu.memory_space<vmem>>, vector<1x2x128xbf16>
    %992 = vector.shape_cast %991 : vector<1x2x128xbf16> to vector<2x128xbf16>
    %993 = arith.extf %992 : vector<2x128xbf16> to vector<2x128xf32>
    %994 = arith.truncf %957 : vector<2x32xf32> to vector<2x32xbf16>
    %cst_281 = arith.constant dense<0.000000e+00> : vector<2x128xf32>
    %995 = tpu.matmul %994, %4, %cst_281 {dimension_numbers = #tpu.dot_dimension_numbers<[1], [0], [0], [1], [0, 0, 1, 1], [], []>} : vector<2x32xbf16>, vector<32x128xbf16>, vector<2x128xf32> -> vector<2x128xf32>
    %996 = arith.addf %993, %995 : vector<2x128xf32>
    %c1_282 = arith.constant 1 : index
    %c0_283 = arith.constant 0 : index
    %c0_284 = arith.constant 0 : index
    %997 = vector.load %arg2[%c1_282, %c0_283, %c0_284] : memref<16x2x128xbf16, #tpu.memory_space<vmem>>, vector<1x2x128xbf16>
    %998 = vector.shape_cast %997 : vector<1x2x128xbf16> to vector<2x128xbf16>
    %999 = arith.extf %998 : vector<2x128xbf16> to vector<2x128xf32>
    %1000 = arith.truncf %982 : vector<2x32xf32> to vector<2x32xbf16>
    %cst_285 = arith.constant dense<0.000000e+00> : vector<2x128xf32>
    %1001 = tpu.matmul %1000, %6, %cst_285 {dimension_numbers = #tpu.dot_dimension_numbers<[1], [0], [0], [1], [0, 0, 1, 1], [], []>} : vector<2x32xbf16>, vector<32x128xbf16>, vector<2x128xf32> -> vector<2x128xf32>
    %1002 = arith.addf %999, %1001 : vector<2x128xf32>
    %1003 = vector.extract_strided_slice %996 {offsets = [0, 0], sizes = [2, 32], strides = [1, 1]} : vector<2x128xf32> to vector<2x32xf32>
    %1004 = arith.negf %1003 : vector<2x32xf32>
    %1005 = math.exp %1004 : vector<2x32xf32>
    %cst_286 = arith.constant 1.000000e+00 : f32
    %1006 = vector.broadcast %cst_286 : f32 to vector<2x32xf32>
    %1007 = arith.addf %1006, %1005 : vector<2x32xf32>
    %1008 = arith.divf %1006, %1007 : vector<2x32xf32>
    %1009 = vector.extract_strided_slice %996 {offsets = [0, 32], sizes = [2, 32], strides = [1, 1]} : vector<2x128xf32> to vector<2x32xf32>
    %1010 = arith.negf %1009 : vector<2x32xf32>
    %1011 = math.exp %1010 : vector<2x32xf32>
    %cst_287 = arith.constant 1.000000e+00 : f32
    %1012 = vector.broadcast %cst_287 : f32 to vector<2x32xf32>
    %1013 = arith.addf %1012, %1011 : vector<2x32xf32>
    %1014 = arith.divf %1012, %1013 : vector<2x32xf32>
    %1015 = vector.extract_strided_slice %996 {offsets = [0, 64], sizes = [2, 32], strides = [1, 1]} : vector<2x128xf32> to vector<2x32xf32>
    %1016 = math.tanh %1015 : vector<2x32xf32>
    %1017 = vector.extract_strided_slice %996 {offsets = [0, 96], sizes = [2, 32], strides = [1, 1]} : vector<2x128xf32> to vector<2x32xf32>
    %1018 = arith.negf %1017 : vector<2x32xf32>
    %1019 = math.exp %1018 : vector<2x32xf32>
    %cst_288 = arith.constant 1.000000e+00 : f32
    %1020 = vector.broadcast %cst_288 : f32 to vector<2x32xf32>
    %1021 = arith.addf %1020, %1019 : vector<2x32xf32>
    %1022 = arith.divf %1020, %1021 : vector<2x32xf32>
    %1023 = arith.mulf %1014, %955 : vector<2x32xf32>
    %1024 = arith.mulf %1008, %1016 : vector<2x32xf32>
    %1025 = arith.addf %1023, %1024 : vector<2x32xf32>
    %1026 = math.tanh %1025 : vector<2x32xf32>
    %1027 = arith.mulf %1022, %1026 : vector<2x32xf32>
    %1028 = vector.extract_strided_slice %1002 {offsets = [0, 0], sizes = [2, 32], strides = [1, 1]} : vector<2x128xf32> to vector<2x32xf32>
    %1029 = arith.negf %1028 : vector<2x32xf32>
    %1030 = math.exp %1029 : vector<2x32xf32>
    %cst_289 = arith.constant 1.000000e+00 : f32
    %1031 = vector.broadcast %cst_289 : f32 to vector<2x32xf32>
    %1032 = arith.addf %1031, %1030 : vector<2x32xf32>
    %1033 = arith.divf %1031, %1032 : vector<2x32xf32>
    %1034 = vector.extract_strided_slice %1002 {offsets = [0, 32], sizes = [2, 32], strides = [1, 1]} : vector<2x128xf32> to vector<2x32xf32>
    %1035 = arith.negf %1034 : vector<2x32xf32>
    %1036 = math.exp %1035 : vector<2x32xf32>
    %cst_290 = arith.constant 1.000000e+00 : f32
    %1037 = vector.broadcast %cst_290 : f32 to vector<2x32xf32>
    %1038 = arith.addf %1037, %1036 : vector<2x32xf32>
    %1039 = arith.divf %1037, %1038 : vector<2x32xf32>
    %1040 = vector.extract_strided_slice %1002 {offsets = [0, 64], sizes = [2, 32], strides = [1, 1]} : vector<2x128xf32> to vector<2x32xf32>
    %1041 = math.tanh %1040 : vector<2x32xf32>
    %1042 = vector.extract_strided_slice %1002 {offsets = [0, 96], sizes = [2, 32], strides = [1, 1]} : vector<2x128xf32> to vector<2x32xf32>
    %1043 = arith.negf %1042 : vector<2x32xf32>
    %1044 = math.exp %1043 : vector<2x32xf32>
    %cst_291 = arith.constant 1.000000e+00 : f32
    %1045 = vector.broadcast %cst_291 : f32 to vector<2x32xf32>
    %1046 = arith.addf %1045, %1044 : vector<2x32xf32>
    %1047 = arith.divf %1045, %1046 : vector<2x32xf32>
    %1048 = arith.mulf %1039, %980 : vector<2x32xf32>
    %1049 = arith.mulf %1033, %1041 : vector<2x32xf32>
    %1050 = arith.addf %1048, %1049 : vector<2x32xf32>
    %1051 = math.tanh %1050 : vector<2x32xf32>
    %1052 = arith.mulf %1047, %1051 : vector<2x32xf32>
    %1053 = arith.truncf %1027 : vector<2x32xf32> to vector<2x32xbf16>
    %c14_292 = arith.constant 14 : index
    %c0_293 = arith.constant 0 : index
    %c0_294 = arith.constant 0 : index
    %1054 = vector.load %arg4[%c14_292, %c0_293, %c0_294] : memref<16x2x32xbf16, #tpu.memory_space<vmem>>, vector<1x2x32xbf16>
    %1055 = vector.shape_cast %1054 : vector<1x2x32xbf16> to vector<2x32xbf16>
    %1056 = vector.shape_cast %1053 : vector<2x32xbf16> to vector<1x2x32xbf16>
    tpu.vector_store %arg4[%c14_292, %c0_293, %c0_294], %1056 {strides = array<i32>} : memref<16x2x32xbf16, #tpu.memory_space<vmem>>, vector<1x2x32xbf16>,
    %1057 = arith.truncf %1052 : vector<2x32xf32> to vector<2x32xbf16>
    %c1_295 = arith.constant 1 : index
    %c0_296 = arith.constant 0 : index
    %c0_297 = arith.constant 0 : index
    %1058 = vector.load %arg5[%c1_295, %c0_296, %c0_297] : memref<16x2x32xbf16, #tpu.memory_space<vmem>>, vector<1x2x32xbf16>
    %1059 = vector.shape_cast %1058 : vector<1x2x32xbf16> to vector<2x32xbf16>
    %1060 = vector.shape_cast %1057 : vector<2x32xbf16> to vector<1x2x32xbf16>
    tpu.vector_store %arg5[%c1_295, %c0_296, %c0_297], %1060 {strides = array<i32>} : memref<16x2x32xbf16, #tpu.memory_space<vmem>>, vector<1x2x32xbf16>,
    %c15_298 = arith.constant 15 : index
    %c0_299 = arith.constant 0 : index
    %c0_300 = arith.constant 0 : index
    %1061 = vector.load %arg1[%c15_298, %c0_299, %c0_300] : memref<16x2x128xbf16, #tpu.memory_space<vmem>>, vector<1x2x128xbf16>
    %1062 = vector.shape_cast %1061 : vector<1x2x128xbf16> to vector<2x128xbf16>
    %1063 = arith.extf %1062 : vector<2x128xbf16> to vector<2x128xf32>
    %1064 = arith.truncf %1027 : vector<2x32xf32> to vector<2x32xbf16>
    %cst_301 = arith.constant dense<0.000000e+00> : vector<2x128xf32>
    %1065 = tpu.matmul %1064, %4, %cst_301 {dimension_numbers = #tpu.dot_dimension_numbers<[1], [0], [0], [1], [0, 0, 1, 1], [], []>} : vector<2x32xbf16>, vector<32x128xbf16>, vector<2x128xf32> -> vector<2x128xf32>
    %1066 = arith.addf %1063, %1065 : vector<2x128xf32>
    %c0_302 = arith.constant 0 : index
    %c0_303 = arith.constant 0 : index
    %c0_304 = arith.constant 0 : index
    %1067 = vector.load %arg2[%c0_302, %c0_303, %c0_304] : memref<16x2x128xbf16, #tpu.memory_space<vmem>>, vector<1x2x128xbf16>
    %1068 = vector.shape_cast %1067 : vector<1x2x128xbf16> to vector<2x128xbf16>
    %1069 = arith.extf %1068 : vector<2x128xbf16> to vector<2x128xf32>
    %1070 = arith.truncf %1052 : vector<2x32xf32> to vector<2x32xbf16>
    %cst_305 = arith.constant dense<0.000000e+00> : vector<2x128xf32>
    %1071 = tpu.matmul %1070, %6, %cst_305 {dimension_numbers = #tpu.dot_dimension_numbers<[1], [0], [0], [1], [0, 0, 1, 1], [], []>} : vector<2x32xbf16>, vector<32x128xbf16>, vector<2x128xf32> -> vector<2x128xf32>
    %1072 = arith.addf %1069, %1071 : vector<2x128xf32>
    %1073 = vector.extract_strided_slice %1066 {offsets = [0, 0], sizes = [2, 32], strides = [1, 1]} : vector<2x128xf32> to vector<2x32xf32>
    %1074 = arith.negf %1073 : vector<2x32xf32>
    %1075 = math.exp %1074 : vector<2x32xf32>
    %cst_306 = arith.constant 1.000000e+00 : f32
    %1076 = vector.broadcast %cst_306 : f32 to vector<2x32xf32>
    %1077 = arith.addf %1076, %1075 : vector<2x32xf32>
    %1078 = arith.divf %1076, %1077 : vector<2x32xf32>
    %1079 = vector.extract_strided_slice %1066 {offsets = [0, 32], sizes = [2, 32], strides = [1, 1]} : vector<2x128xf32> to vector<2x32xf32>
    %1080 = arith.negf %1079 : vector<2x32xf32>
    %1081 = math.exp %1080 : vector<2x32xf32>
    %cst_307 = arith.constant 1.000000e+00 : f32
    %1082 = vector.broadcast %cst_307 : f32 to vector<2x32xf32>
    %1083 = arith.addf %1082, %1081 : vector<2x32xf32>
    %1084 = arith.divf %1082, %1083 : vector<2x32xf32>
    %1085 = vector.extract_strided_slice %1066 {offsets = [0, 64], sizes = [2, 32], strides = [1, 1]} : vector<2x128xf32> to vector<2x32xf32>
    %1086 = math.tanh %1085 : vector<2x32xf32>
    %1087 = vector.extract_strided_slice %1066 {offsets = [0, 96], sizes = [2, 32], strides = [1, 1]} : vector<2x128xf32> to vector<2x32xf32>
    %1088 = arith.negf %1087 : vector<2x32xf32>
    %1089 = math.exp %1088 : vector<2x32xf32>
    %cst_308 = arith.constant 1.000000e+00 : f32
    %1090 = vector.broadcast %cst_308 : f32 to vector<2x32xf32>
    %1091 = arith.addf %1090, %1089 : vector<2x32xf32>
    %1092 = arith.divf %1090, %1091 : vector<2x32xf32>
    %1093 = arith.mulf %1084, %1025 : vector<2x32xf32>
    %1094 = arith.mulf %1078, %1086 : vector<2x32xf32>
    %1095 = arith.addf %1093, %1094 : vector<2x32xf32>
    %1096 = math.tanh %1095 : vector<2x32xf32>
    %1097 = arith.mulf %1092, %1096 : vector<2x32xf32>
    %1098 = vector.extract_strided_slice %1072 {offsets = [0, 0], sizes = [2, 32], strides = [1, 1]} : vector<2x128xf32> to vector<2x32xf32>
    %1099 = arith.negf %1098 : vector<2x32xf32>
    %1100 = math.exp %1099 : vector<2x32xf32>
    %cst_309 = arith.constant 1.000000e+00 : f32
    %1101 = vector.broadcast %cst_309 : f32 to vector<2x32xf32>
    %1102 = arith.addf %1101, %1100 : vector<2x32xf32>
    %1103 = arith.divf %1101, %1102 : vector<2x32xf32>
    %1104 = vector.extract_strided_slice %1072 {offsets = [0, 32], sizes = [2, 32], strides = [1, 1]} : vector<2x128xf32> to vector<2x32xf32>
    %1105 = arith.negf %1104 : vector<2x32xf32>
    %1106 = math.exp %1105 : vector<2x32xf32>
    %cst_310 = arith.constant 1.000000e+00 : f32
    %1107 = vector.broadcast %cst_310 : f32 to vector<2x32xf32>
    %1108 = arith.addf %1107, %1106 : vector<2x32xf32>
    %1109 = arith.divf %1107, %1108 : vector<2x32xf32>
    %1110 = vector.extract_strided_slice %1072 {offsets = [0, 64], sizes = [2, 32], strides = [1, 1]} : vector<2x128xf32> to vector<2x32xf32>
    %1111 = math.tanh %1110 : vector<2x32xf32>
    %1112 = vector.extract_strided_slice %1072 {offsets = [0, 96], sizes = [2, 32], strides = [1, 1]} : vector<2x128xf32> to vector<2x32xf32>
    %1113 = arith.negf %1112 : vector<2x32xf32>
    %1114 = math.exp %1113 : vector<2x32xf32>
    %cst_311 = arith.constant 1.000000e+00 : f32
    %1115 = vector.broadcast %cst_311 : f32 to vector<2x32xf32>
    %1116 = arith.addf %1115, %1114 : vector<2x32xf32>
    %1117 = arith.divf %1115, %1116 : vector<2x32xf32>
    %1118 = arith.mulf %1109, %1050 : vector<2x32xf32>
    %1119 = arith.mulf %1103, %1111 : vector<2x32xf32>
    %1120 = arith.addf %1118, %1119 : vector<2x32xf32>
    %1121 = math.tanh %1120 : vector<2x32xf32>
    %1122 = arith.mulf %1117, %1121 : vector<2x32xf32>
    %1123 = arith.truncf %1097 : vector<2x32xf32> to vector<2x32xbf16>
    %c15_312 = arith.constant 15 : index
    %c0_313 = arith.constant 0 : index
    %c0_314 = arith.constant 0 : index
    %1124 = vector.load %arg4[%c15_312, %c0_313, %c0_314] : memref<16x2x32xbf16, #tpu.memory_space<vmem>>, vector<1x2x32xbf16>
    %1125 = vector.shape_cast %1124 : vector<1x2x32xbf16> to vector<2x32xbf16>
    %1126 = vector.shape_cast %1123 : vector<2x32xbf16> to vector<1x2x32xbf16>
    tpu.vector_store %arg4[%c15_312, %c0_313, %c0_314], %1126 {strides = array<i32>} : memref<16x2x32xbf16, #tpu.memory_space<vmem>>, vector<1x2x32xbf16>,
    %1127 = arith.truncf %1122 : vector<2x32xf32> to vector<2x32xbf16>
    %c0_315 = arith.constant 0 : index
    %c0_316 = arith.constant 0 : index
    %c0_317 = arith.constant 0 : index
    %1128 = vector.load %arg5[%c0_315, %c0_316, %c0_317] : memref<16x2x32xbf16, #tpu.memory_space<vmem>>, vector<1x2x32xbf16>
    %1129 = vector.shape_cast %1128 : vector<1x2x32xbf16> to vector<2x32xbf16>
    %1130 = vector.shape_cast %1127 : vector<2x32xbf16> to vector<1x2x32xbf16>
    tpu.vector_store %arg5[%c0_315, %c0_316, %c0_317], %1130 {strides = array<i32>} : memref<16x2x32xbf16, #tpu.memory_space<vmem>>, vector<1x2x32xbf16>,
    %c0_318 = arith.constant 0 : index
    %c0_319 = arith.constant 0 : index
    %1131 = vector.load %arg8[%c0_318, %c0_319] : memref<2x32xf32, #tpu.memory_space<vmem>>, vector<2x32xf32>
    tpu.vector_store %arg8[%c0_318, %c0_319], %1097 {strides = array<i32>} : memref<2x32xf32, #tpu.memory_space<vmem>>, vector<2x32xf32>,
    %c0_320 = arith.constant 0 : index
    %c0_321 = arith.constant 0 : index
    %1132 = vector.load %arg9[%c0_320, %c0_321] : memref<2x32xf32, #tpu.memory_space<vmem>>, vector<2x32xf32>
    tpu.vector_store %arg9[%c0_320, %c0_321], %1095 {strides = array<i32>} : memref<2x32xf32, #tpu.memory_space<vmem>>, vector<2x32xf32>,
    %c0_322 = arith.constant 0 : index
    %c0_323 = arith.constant 0 : index
    %1133 = vector.load %arg10[%c0_322, %c0_323] : memref<2x32xf32, #tpu.memory_space<vmem>>, vector<2x32xf32>
    tpu.vector_store %arg10[%c0_322, %c0_323], %1122 {strides = array<i32>} : memref<2x32xf32, #tpu.memory_space<vmem>>, vector<2x32xf32>,
    %c0_324 = arith.constant 0 : index
    %c0_325 = arith.constant 0 : index
    %1134 = vector.load %arg11[%c0_324, %c0_325] : memref<2x32xf32, #tpu.memory_space<vmem>>, vector<2x32xf32>
    tpu.vector_store %arg11[%c0_324, %c0_325], %1120 {strides = array<i32>} : memref<2x32xf32, #tpu.memory_space<vmem>>, vector<2x32xf32>,
    return
  }
  func.func @transform_0(%arg0: i32) -> (i32, i32, i32) {
    %c0_i32 = arith.constant 0 : i32
    %c0_i32_0 = arith.constant 0 : i32
    %c0_i32_1 = arith.constant 0 : i32
    return %arg0, %c0_i32, %c0_i32_0 : i32, i32, i32
  }
  func.func @transform_1(%arg0: i32) -> (i32, i32, i32) {
    %c0_i32 = arith.constant 0 : i32
    %0 = arith.subi %c0_i32, %arg0 : i32
    %c0_i32_0 = arith.constant 0 : i32
    %c0_i32_1 = arith.constant 0 : i32
    %c0_i32_2 = arith.constant 0 : i32
    return %0, %c0_i32_0, %c0_i32_1 : i32, i32, i32
  }
  func.func @transform_3(%arg0: i32) -> (i32, i32, i32) {
    %c0_i32 = arith.constant 0 : i32
    %c0_i32_0 = arith.constant 0 : i32
    %c0_i32_1 = arith.constant 0 : i32
    return %arg0, %c0_i32, %c0_i32_0 : i32, i32, i32
  }
  func.func @transform_4(%arg0: i32) -> (i32, i32, i32) {
    %c0_i32 = arith.constant 0 : i32
    %0 = arith.subi %c0_i32, %arg0 : i32
    %c0_i32_0 = arith.constant 0 : i32
    %c0_i32_1 = arith.constant 0 : i32
    %c0_i32_2 = arith.constant 0 : i32
    return %0, %c0_i32_0, %c0_i32_1 : i32, i32, i32
  }
}

</mosaic_0001>

<llo_original>
// kernel: model_forward.2
$region0: #{model_forward.2}
  #allocation0 [shape = 'u32[]', space=smem, size = 0x4, offset = 0x4, fixed_abs, tag = 'smem constant byte address 0x4 - core index']
  #allocation1 [shape = 'u32[144,128]{1,0:T(1,128)}', space=vmem, size = 0x12000, scoped, tag = 'internal scratch']
  #allocation2 [shape = 'bf16[2,32,128]{2,1,0:T(16,128)(2,1)}', space=vmem, size = 0x4000, scoped, tag = 'scratch operand']
  #allocation3 [shape = 's32[1]{0}', space=sflag, size = 0x4, scoped, tag = 'scratch operand']
  #allocation4 [shape = 'f32[2,32]{1,0:T(2,128)}', space=vmem, size = 0x400, scoped, tag = 'scratch operand']
  #allocation5 [shape = 'f32[2,32]{1,0:T(2,128)}', space=vmem, size = 0x400, scoped, tag = 'scratch operand']
  #allocation6 [shape = 'f32[2,32]{1,0:T(2,128)}', space=vmem, size = 0x400, scoped, tag = 'scratch operand']
  #allocation7 [shape = 'f32[2,32]{1,0:T(2,128)}', space=vmem, size = 0x400, scoped, tag = 'scratch operand']
  #allocation8 [shape = 's32[]', space=sflag, size = 0x4, offset = 0, fixed_abs, tag = 'sflag constant byte address 0x0 - dummy sync flag']
  %s0 = inlined_call_operand.vmem [shape: bf16[16,2,128], index: 0, kind: input, shape index: {}]
  %s1 = inlined_call_operand.vmem [shape: bf16[16,2,128], index: 1, kind: input, shape index: {}]
  %s2 = inlined_call_operand.vmem [shape: bf16[2,32,128], index: 2, kind: input, shape index: {}]
  %s3 = inlined_call_operand.vmem [shape: bf16[16,2,32], index: 3, kind: output, shape index: {0}]
  %s4 = inlined_call_operand.vmem [shape: bf16[16,2,32], index: 4, kind: output, shape index: {1}]
  %5 = xla_tuple %s3, %s4
  %s6 = sld [smem:[#allocation0]]
  $region64: #{model_forward.2} parent=0
    _
  %s8 = ssub.s32 1, %s6
  %s9 = scalar_select 0, %s8, %s6
  // Predicated region
  $region2: #{model_forward.2} parent=0 // pred_check
    _
  $region3: #{model_forward.2} parent=0 // pred_check_branch
    %11 = sbr.rel (0) target = $region5
  $region4: #{model_forward.2} parent=0 // pred_region
    _
  $region5: #{model_forward.2} parent=0 // pred_fallthru
    _
  // Predicated region
  $region6: #{model_forward.2} parent=0 // pred_check
    _
  $region7: #{model_forward.2} parent=0 // pred_check_branch
    %13 = sbr.rel (0) target = $region9
  $region8: #{model_forward.2} parent=0 // pred_region
    %s14 = ssub.s32 0, 0
    %s15 = smul.u32 16, %s14
    %p16 = scmp.lt.s32.totalorder %s15, 15
    %s17 = scalar_select %p16, %s15, 15
    %s18 = scalar_lea.vmem %s1, %s17
    %s19 = ssub.s32 0, 0
    %s20 = smul.u32 16, %s19
  $region9: #{model_forward.2} parent=0 // pred_fallthru
    _
  %s21 = ssub.s32 0, 0
  %s22 = smul.u32 16, %s21
  %p23 = scmp.lt.s32.totalorder %s22, 15
  %s24 = scalar_select %p23, %s22, 15
  %s25 = scalar_lea.vmem %s1, %s24
  %s26 = ssub.s32 0, 0
  %s27 = smul.u32 16, %s26
  %p28 = scmp.lt.s32.totalorder %s27, 15
  %s29 = scalar_select %p28, %s27, 15
  %s30 = scalar_lea.vmem %s4, %s29
  %s31 = ssub.s32 0, 0
  %s32 = smul.u32 16, %s31
  %p33 = scmp.lt.s32.totalorder %s32, 15
  %s34 = scalar_select %p33, %s32, 15
  %s35 = scalar_lea.vmem %s1, %s34
  %s36 = ssub.s32 0, 0
  %s37 = smul.u32 16, %s36
  %s38 = ssub.s32 0, 0
  %s39 = smul.u32 16, %s38
  %p40 = scmp.lt.s32.totalorder %s39, 15
  %s41 = scalar_select %p40, %s39, 15
  %s42 = scalar_lea.vmem %s4, %s41
  %s43 = ssub.s32 0, 0
  %s44 = smul.u32 16, %s43
  %p46 = scmp.eq.s32.totalorder 0, 0
  // Predicated region
  $region10: #{model_forward.2} parent=0 // pred_check
    %p47 = pneg %p46
  $region11: #{model_forward.2} parent=0 // pred_check_branch
    %49 = sbr.rel (%p47) target = $region13
  $region12: #{model_forward.2} parent=0 // pred_region
    %p51 = scmp.lt.u32.totalorder 32, 8
    %p52 = pneg %p51
    // Predicated region
    $region14: #{model_forward.2} parent=12 // pred_check
      _
    $region15: #{model_forward.2} parent=12 // pred_check_branch
      %54 = sbr.rel (%p51) target = $region17
    $region16: #{model_forward.2} parent=12 // pred_region
      %s69 = sand.u32 32, 7
      %p70 = scmp.eq.s32.totalorder %s69, 0
      // Predicated region
      $region29: #{model_forward.2} parent=16 // pred_check
        %p71 = pneg %p70
      $region30: #{model_forward.2} parent=16 // pred_check_branch
        %73 = sbr.rel (%p71) target = $region32
      $region31: #{model_forward.2} parent=16 // pred_region
        loop: start=0, step=1, limit=1
        $region33: #{model_forward.2} parent=31 // loop_pre_header
          _
        $region34: #{model_forward.2} parent=31 // loop_header
          %s75 = sphi 0, %s79
          %p76 = scmp.ge.s32.totalorder %s75, 1
          %s80 = sphi %s2, %s2
          %s81 = sphi [#allocation2], [#allocation2]
        $region35: #{model_forward.2} parent=31 // loop_header_branch
          %78 = sbr.rel (%p76) target = $region39
        $region36: #{model_forward.2} parent=31 // loop_body
          %v82 = vld [vmem:[%s80] sm:$0xff]
          %83 = vst [vmem:[%s81] sm:$0xff] %v82
          %v84 = vld [vmem:[%s80 + $0x8] sm:$0xff]
          %85 = vst [vmem:[%s81 + $0x8] sm:$0xff] %v84
          %v86 = vld [vmem:[%s80 + $0x10] sm:$0xff]
          %87 = vst [vmem:[%s81 + $0x10] sm:$0xff] %v86
          %v88 = vld [vmem:[%s80 + $0x18] sm:$0xff]
          %89 = vst [vmem:[%s81 + $0x18] sm:$0xff] %v88
        $region37: #{model_forward.2} parent=31 // loop_footer
          %s79 = sadd.s32 1, %s75
        $region38: #{model_forward.2} parent=31 // loop_footer_branch
          %74 = sbr.rel target = $region34
        $region39: #{model_forward.2} parent=31 // loop_exit
          _
      $region32: #{model_forward.2} parent=16 // pred_fallthru
        _
      %p90 = pneg %p70
      // Predicated region
      $region40: #{model_forward.2} parent=16 // pred_check
        _
      $region41: #{model_forward.2} parent=16 // pred_check_branch
        %92 = sbr.rel (%p70) target = $region43
      $region42: #{model_forward.2} parent=16 // pred_region
        %s93 = sand.u32 32, 7
      $region43: #{model_forward.2} parent=16 // pred_fallthru
        _
    $region17: #{model_forward.2} parent=12 // pred_fallthru
      _
    // Predicated region
    $region18: #{model_forward.2} parent=12 // pred_check
      %p55 = pneg %p51
    $region19: #{model_forward.2} parent=12 // pred_check_branch
      %57 = sbr.rel (%p55) target = $region21
    $region20: #{model_forward.2} parent=12 // pred_region
      %s58 = sshllo.u32 0, 32
      loop: start=0, step=1, limit=1
      $region22: #{model_forward.2} parent=20 // loop_pre_header
        _
      $region23: #{model_forward.2} parent=20 // loop_header
        %s60 = sphi 0, %s64
        %p61 = scmp.ge.s32.totalorder %s60, 1
        %s65 = sphi %s2, %s2
        %s66 = sphi [#allocation2], [#allocation2]
      $region24: #{model_forward.2} parent=20 // loop_header_branch
        %63 = sbr.rel (%p61) target = $region28
      $region25: #{model_forward.2} parent=20 // loop_body
        %v67 = vld [vmem:[%s65] sm:%s58]
        %68 = vst [vmem:[%s66] sm:%s58] %v67
      $region26: #{model_forward.2} parent=20 // loop_footer
        %s64 = sadd.s32 1, %s60
      $region27: #{model_forward.2} parent=20 // loop_footer_branch
        %59 = sbr.rel target = $region23
      $region28: #{model_forward.2} parent=20 // loop_exit
        _
    $region21: #{model_forward.2} parent=12 // pred_fallthru
      _
    // Predicated region
    $region44: #{model_forward.2} parent=12 // pred_check
      _
    $region45: #{model_forward.2} parent=12 // pred_check_branch
      %96 = sbr.rel (0) target = $region47
    $region46: #{model_forward.2} parent=12 // pred_region
      %97 = vsyncadd [#allocation3], 512
    $region47: #{model_forward.2} parent=12 // pred_fallthru
      _
    %s98 = smul.u32 4, 2
    %s99 = smul.u32 %s98, 4
    %s100 = smul.u32 %s99, 1
    %s101 = sshll.u32 %s100, 4
    %102 = dma.done [#allocation3], %s101
    %vm103 = vcmask 254976
    %104 = vst.msk [vmem:[#allocation4] sm:$0x3] %vm103, 0.0
    %105 = vst.msk [vmem:[#allocation5] sm:$0x3] %vm103, 0.0
    %106 = vst.msk [vmem:[#allocation6] sm:$0x3] %vm103, 0.0
    %107 = vst.msk [vmem:[#allocation7] sm:$0x3] %vm103, 0.0
  $region13: #{model_forward.2} parent=0 // pred_fallthru
    _
  %v108 = vld [vmem:[#allocation2] sm:$0xff]
  %v109 = vld [vmem:[#allocation2 + $0x8] sm:$0xff]
  %s110 = scalar_lea.vmem [#allocation2], 16
  %v111 = vld [vmem:[%s110] sm:$0xff]
  %v112 = vld [vmem:[%s110 + $0x8] sm:$0xff]
  %v113 = vld [vmem:[#allocation4] sm:$0x3]
  %v114 = vld [vmem:[#allocation5] sm:$0x3]
  %v115 = vld [vmem:[#allocation6] sm:$0x3]
  %v116 = vld [vmem:[#allocation7] sm:$0x3]
  %v117 = vld [vmem:[%s0] sm:$0x1]
  %v118 = vunpack.c.l.bf16 %v117
  %v119 = vpack.c.bf16 %v113, %v113
  %vm120 = vcmask 261120
  %v122 = vsel %vm120, %v119, 0
  %124 = vmatprep.subr.bf16.mxu0 0
  %125 = vmatpush1.bf16.msra.mxu0 %v108
  %126 = vmatprep.subr.bf16.mxu0 0
  %127 = vmatpush1.bf16.msra.mxu0 %v109
  %128 = vmatprep.subr.bf16.mxu0 0
  %129 = vmatpush1.bf16.msra.mxu0 0
  %130 = vmatprep.subr.bf16.mxu0 0
  %131 = vmatpush1.bf16.msra.mxu0 0
  %132 = vmatprep.subr.bf16.mxu0 0
  %133 = vmatpush1.bf16.msra.mxu0 0
  %134 = vmatprep.subr.bf16.mxu0 0
  %135 = vmatpush1.bf16.msra.mxu0 0
  %136 = vmatprep.subr.bf16.mxu0 0
  %137 = vmatpush1.bf16.msra.mxu0 0
  %138 = vmatprep.subr.bf16.mxu0 0
  %139 = vmatpush1.bf16.msra.mxu0 0
  %140 = vmatprep.subr.bf16.mxu0 0
  %141 = vmatpush1.bf16.msra.mxu0 0
  %142 = vmatprep.subr.bf16.mxu0 0
  %143 = vmatpush1.bf16.msra.mxu0 0
  %144 = vmatprep.subr.bf16.mxu0 0
  %145 = vmatpush1.bf16.msra.mxu0 0
  %146 = vmatprep.subr.bf16.mxu0 0
  %147 = vmatpush1.bf16.msra.mxu0 0
  %148 = vmatprep.subr.bf16.mxu0 0
  %149 = vmatpush1.bf16.msra.mxu0 0
  %150 = vmatprep.subr.bf16.mxu0 0
  %151 = vmatpush1.bf16.msra.mxu0 0
  %152 = vmatprep.subr.bf16.mxu0 0
  %153 = vmatpush1.bf16.msra.mxu0 0
  %154 = vmatprep.subr.bf16.mxu0 0
  %155 = vmatpush1.bf16.msra.mxu0 0
  %156 = vmatprep.mubr.bf16.mxu0 0
  %157 = vmatmul.mubr.bf16.gmra.mrb[0].mxu0 %v122
  %v158 = vpop.f32.mrb[0].mxu0
  %v159 = vadd.f32 0.0, %v158
  %v160 = vpop.f32.mrb[0].mxu0
  %v161 = vpop.f32.mrb[0].mxu0
  %v162 = vpop.f32.mrb[0].mxu0
  %163 = vdwg.mxu0
  %v164 = vadd.f32 %v118, %v159
  %s165 = scalar_lea.vmem %s35, 15
  %v166 = vld [vmem:[%s165] sm:$0x1]
  %v167 = vunpack.c.l.bf16 %v166
  %v168 = vpack.c.bf16 %v115, %v115
  %v170 = vsel %vm120, %v168, 0
  %172 = vmatprep.subr.bf16.mxu0 0
  %173 = vmatpush1.bf16.msra.mxu0 %v111
  %174 = vmatprep.subr.bf16.mxu0 0
  %175 = vmatpush1.bf16.msra.mxu0 %v112
  %176 = vmatprep.subr.bf16.mxu0 0
  %177 = vmatpush1.bf16.msra.mxu0 0
  %178 = vmatprep.subr.bf16.mxu0 0
  %179 = vmatpush1.bf16.msra.mxu0 0
  %180 = vmatprep.subr.bf16.mxu0 0
  %181 = vmatpush1.bf16.msra.mxu0 0
  %182 = vmatprep.subr.bf16.mxu0 0
  %183 = vmatpush1.bf16.msra.mxu0 0
  %184 = vmatprep.subr.bf16.mxu0 0
  %185 = vmatpush1.bf16.msra.mxu0 0
  %186 = vmatprep.subr.bf16.mxu0 0
  %187 = vmatpush1.bf16.msra.mxu0 0
  %188 = vmatprep.subr.bf16.mxu0 0
  %189 = vmatpush1.bf16.msra.mxu0 0
  %190 = vmatprep.subr.bf16.mxu0 0
  %191 = vmatpush1.bf16.msra.mxu0 0
  %192 = vmatprep.subr.bf16.mxu0 0
  %193 = vmatpush1.bf16.msra.mxu0 0
  %194 = vmatprep.subr.bf16.mxu0 0
  %195 = vmatpush1.bf16.msra.mxu0 0
  %196 = vmatprep.subr.bf16.mxu0 0
  %197 = vmatpush1.bf16.msra.mxu0 0
  %198 = vmatprep.subr.bf16.mxu0 0
  %199 = vmatpush1.bf16.msra.mxu0 0
  %200 = vmatprep.subr.bf16.mxu0 0
  %201 = vmatpush1.bf16.msra.mxu0 0
  %202 = vmatprep.subr.bf16.mxu0 0
  %203 = vmatpush1.bf16.msra.mxu0 0
  %204 = vmatprep.mubr.bf16.mxu0 0
  %205 = vmatmul.mubr.bf16.gmra.mrb[0].mxu0 %v170
  %v206 = vpop.f32.mrb[0].mxu0
  %v207 = vadd.f32 0.0, %v206
  %v208 = vpop.f32.mrb[0].mxu0
  %v209 = vpop.f32.mrb[0].mxu0
  %v210 = vpop.f32.mrb[0].mxu0
  %211 = vdwg.mxu0
  %v212 = vadd.f32 %v167, %v207
  %v213 = vxor.u32 %v164, 2147483648
  %v214 = vmul.f32 %v213, 1.442695
  %v215 = vpow.pop %v214
  %v216 = vadd.f32 %v215, 1.0
  %v217 = vrcp.pop %v216
  %v218 = vmul.f32 1.0, %v217
  %v219 = vtanh.pop %v164
  %v222 = vunpack.c.l.s4 1983009808
  %v223 = vunpack.c.0.s8 %v222
  %v224 = vlaneseq
  %v225 = vshrl.u32 %v224, 7
  %v226 = vsub.s32 %v223, %v225
  %v227 = vrot.slane %v114, %v226
  %228 = vrot.lane.b32.xlu0 %v227, 32
  %v229 = vpop.permute.xlu0 %228
  %v231 = vmul.f32 %v218, %v229
  %233 = vrot.lane.b32.xlu0 %v219, 64
  %v234 = vpop.permute.xlu0 %233
  %v236 = vmul.f32 %v218, %v234
  %238 = vrot.lane.b32.xlu0 %v236, 32
  %v239 = vpop.permute.xlu0 %238
  %v241 = vadd.f32 %v231, %v239
  %v242 = vtanh.pop %v241
  %244 = vrot.lane.b32.xlu0 %v242, 64
  %v245 = vpop.permute.xlu0 %244
  %v247 = vmul.f32 %v218, %v245
  %v248 = vxor.u32 %v212, 2147483648
  %v249 = vmul.f32 %v248, 1.442695
  %v250 = vpow.pop %v249
  %v251 = vadd.f32 %v250, 1.0
  %v252 = vrcp.pop %v251
  %v253 = vmul.f32 1.0, %v252
  %v254 = vtanh.pop %v212
  %v257 = vunpack.c.l.s4 1983009808
  %v258 = vunpack.c.0.s8 %v257
  %v259 = vlaneseq
  %v260 = vshrl.u32 %v259, 7
  %v261 = vsub.s32 %v258, %v260
  %v262 = vrot.slane %v116, %v261
  %263 = vrot.lane.b32.xlu0 %v262, 32
  %v264 = vpop.permute.xlu0 %263
  %v266 = vmul.f32 %v253, %v264
  %268 = vrot.lane.b32.xlu0 %v254, 64
  %v269 = vpop.permute.xlu0 %268
  %v271 = vmul.f32 %v253, %v269
  %273 = vrot.lane.b32.xlu0 %v271, 32
  %v274 = vpop.permute.xlu0 %273
  %v276 = vadd.f32 %v266, %v274
  %v277 = vtanh.pop %v276
  %279 = vrot.lane.b32.xlu0 %v277, 64
  %v280 = vpop.permute.xlu0 %279
  %v282 = vmul.f32 %v253, %v280
  %v283 = vpack.c.bf16 %v247, %v247
  %v286 = vunpack.c.l.s4 1966171168
  %v287 = vunpack.c.0.s8 %v286
  %v288 = vlaneseq
  %v289 = vshrl.u32 %v288, 7
  %v290 = vsub.s32 %v287, %v289
  %v291 = vrot.slane %v283, %v290
  %v293 = vunpack.c.l.s4 1966171168
  %v294 = vunpack.c.0.s8 %v293
  %v295 = vlaneseq
  %v296 = vshrl.u32 %v295, 7
  %v297 = vsub.s32 %v294, %v296
  %v298 = vrot.slane %v291, %v297
  %299 = vrot.lane.b32.xlu0 %v298, 32
  %v300 = vpop.permute.xlu0 %299
  %vm302 = vcmask 253952
  %303 = vst.msk [vmem:[%s3] sm:$0x1] %vm302, %v300
  %v304 = vpack.c.bf16 %v282, %v282
  %v307 = vunpack.c.l.s4 1966171168
  %v308 = vunpack.c.0.s8 %v307
  %v309 = vlaneseq
  %v310 = vshrl.u32 %v309, 7
  %v311 = vsub.s32 %v308, %v310
  %v312 = vrot.slane %v304, %v311
  %v314 = vunpack.c.l.s4 1966171168
  %v315 = vunpack.c.0.s8 %v314
  %v316 = vlaneseq
  %v317 = vshrl.u32 %v316, 7
  %v318 = vsub.s32 %v315, %v317
  %v319 = vrot.slane %v312, %v318
  %320 = vrot.lane.b32.xlu0 %v319, 32
  %v321 = vpop.permute.xlu0 %320
  %s323 = scalar_lea.vmem %s42, 15
  %324 = vst.msk [vmem:[%s323] sm:$0x1] %vm302, %v321
  %s325 = scalar_lea.vmem %s0, 1
  %v326 = vld [vmem:[%s325] sm:$0x1]
  %v327 = vunpack.c.l.bf16 %v326
  %328 = vrot.lane.b32.xlu0 %v283, 32
  %v329 = vpop.permute.xlu0 %328
  %v331 = vsel %vm120, %v329, 0
  %333 = vmatprep.subr.bf16.mxu0 0
  %334 = vmatpush1.bf16.msra.mxu0 %v108
  %335 = vmatprep.subr.bf16.mxu0 0
  %336 = vmatpush1.bf16.msra.mxu0 %v109
  %337 = vmatprep.subr.bf16.mxu0 0
  %338 = vmatpush1.bf16.msra.mxu0 0
  %339 = vmatprep.subr.bf16.mxu0 0
  %340 = vmatpush1.bf16.msra.mxu0 0
  %341 = vmatprep.subr.bf16.mxu0 0
  %342 = vmatpush1.bf16.msra.mxu0 0
  %343 = vmatprep.subr.bf16.mxu0 0
  %344 = vmatpush1.bf16.msra.mxu0 0
  %345 = vmatprep.subr.bf16.mxu0 0
  %346 = vmatpush1.bf16.msra.mxu0 0
  %347 = vmatprep.subr.bf16.mxu0 0
  %348 = vmatpush1.bf16.msra.mxu0 0
  %349 = vmatprep.subr.bf16.mxu0 0
  %350 = vmatpush1.bf16.msra.mxu0 0
  %351 = vmatprep.subr.bf16.mxu0 0
  %352 = vmatpush1.bf16.msra.mxu0 0
  %353 = vmatprep.subr.bf16.mxu0 0
  %354 = vmatpush1.bf16.msra.mxu0 0
  %355 = vmatprep.subr.bf16.mxu0 0
  %356 = vmatpush1.bf16.msra.mxu0 0
  %357 = vmatprep.subr.bf16.mxu0 0
  %358 = vmatpush1.bf16.msra.mxu0 0
  %359 = vmatprep.subr.bf16.mxu0 0
  %360 = vmatpush1.bf16.msra.mxu0 0
  %361 = vmatprep.subr.bf16.mxu0 0
  %362 = vmatpush1.bf16.msra.mxu0 0
  %363 = vmatprep.subr.bf16.mxu0 0
  %364 = vmatpush1.bf16.msra.mxu0 0
  %365 = vmatprep.mubr.bf16.mxu0 0
  %366 = vmatmul.mubr.bf16.gmra.mrb[0].mxu0 %v331
  %v367 = vpop.f32.mrb[0].mxu0
  %v368 = vadd.f32 0.0, %v367
  %v369 = vpop.f32.mrb[0].mxu0
  %v370 = vpop.f32.mrb[0].mxu0
  %v371 = vpop.f32.mrb[0].mxu0
  %372 = vdwg.mxu0
  %v373 = vadd.f32 %v327, %v368
  %s374 = scalar_lea.vmem %s35, 14
  %v375 = vld [vmem:[%s374] sm:$0x1]
  %v376 = vunpack.c.l.bf16 %v375
  %377 = vrot.lane.b32.xlu0 %v304, 32
  %v378 = vpop.permute.xlu0 %377
  %v380 = vsel %vm120, %v378, 0
  %382 = vmatprep.subr.bf16.mxu0 0
  %383 = vmatpush1.bf16.msra.mxu0 %v111
  %384 = vmatprep.subr.bf16.mxu0 0
  %385 = vmatpush1.bf16.msra.mxu0 %v112
  %386 = vmatprep.subr.bf16.mxu0 0
  %387 = vmatpush1.bf16.msra.mxu0 0
  %388 = vmatprep.subr.bf16.mxu0 0
  %389 = vmatpush1.bf16.msra.mxu0 0
  %390 = vmatprep.subr.bf16.mxu0 0
  %391 = vmatpush1.bf16.msra.mxu0 0
  %392 = vmatprep.subr.bf16.mxu0 0
  %393 = vmatpush1.bf16.msra.mxu0 0
  %394 = vmatprep.subr.bf16.mxu0 0
  %395 = vmatpush1.bf16.msra.mxu0 0
  %396 = vmatprep.subr.bf16.mxu0 0
  %397 = vmatpush1.bf16.msra.mxu0 0
  %398 = vmatprep.subr.bf16.mxu0 0
  %399 = vmatpush1.bf16.msra.mxu0 0
  %400 = vmatprep.subr.bf16.mxu0 0
  %401 = vmatpush1.bf16.msra.mxu0 0
  %402 = vmatprep.subr.bf16.mxu0 0
  %403 = vmatpush1.bf16.msra.mxu0 0
  %404 = vmatprep.subr.bf16.mxu0 0
  %405 = vmatpush1.bf16.msra.mxu0 0
  %406 = vmatprep.subr.bf16.mxu0 0
  %407 = vmatpush1.bf16.msra.mxu0 0
  %408 = vmatprep.subr.bf16.mxu0 0
  %409 = vmatpush1.bf16.msra.mxu0 0
  %410 = vmatprep.subr.bf16.mxu0 0
  %411 = vmatpush1.bf16.msra.mxu0 0
  %412 = vmatprep.subr.bf16.mxu0 0
  %413 = vmatpush1.bf16.msra.mxu0 0
  %414 = vmatprep.mubr.bf16.mxu0 0
  %415 = vmatmul.mubr.bf16.gmra.mrb[0].mxu0 %v380
  %v416 = vpop.f32.mrb[0].mxu0
  %v417 = vadd.f32 0.0, %v416
  %v418 = vpop.f32.mrb[0].mxu0
  %v419 = vpop.f32.mrb[0].mxu0
  %v420 = vpop.f32.mrb[0].mxu0
  %421 = vdwg.mxu0
  %v422 = vadd.f32 %v376, %v417
  %v423 = vxor.u32 %v373, 2147483648
  %v424 = vmul.f32 %v423, 1.442695
  %v425 = vpow.pop %v424
  %v426 = vadd.f32 %v425, 1.0
  %v427 = vrcp.pop %v426
  %v428 = vmul.f32 1.0, %v427
  %v429 = vtanh.pop %v373
  %v430 = vmul.f32 %v428, %v241
  %432 = vrot.lane.b32.xlu0 %v429, 64
  %v433 = vpop.permute.xlu0 %432
  %v435 = vmul.f32 %v428, %v433
  %437 = vrot.lane.b32.xlu0 %v435, 32
  %v438 = vpop.permute.xlu0 %437
  %v440 = vadd.f32 %v430, %v438
  %v441 = vtanh.pop %v440
  %443 = vrot.lane.b32.xlu0 %v441, 64
  %v444 = vpop.permute.xlu0 %443
  %v446 = vmul.f32 %v428, %v444
  %v447 = vxor.u32 %v422, 2147483648
  %v448 = vmul.f32 %v447, 1.442695
  %v449 = vpow.pop %v448
  %v450 = vadd.f32 %v449, 1.0
  %v451 = vrcp.pop %v450
  %v452 = vmul.f32 1.0, %v451
  %v453 = vtanh.pop %v422
  %v454 = vmul.f32 %v452, %v276
  %456 = vrot.lane.b32.xlu0 %v453, 64
  %v457 = vpop.permute.xlu0 %456
  %v459 = vmul.f32 %v452, %v457
  %461 = vrot.lane.b32.xlu0 %v459, 32
  %v462 = vpop.permute.xlu0 %461
  %v464 = vadd.f32 %v454, %v462
  %v465 = vtanh.pop %v464
  %467 = vrot.lane.b32.xlu0 %v465, 64
  %v468 = vpop.permute.xlu0 %467
  %v470 = vmul.f32 %v452, %v468
  %v471 = vpack.c.bf16 %v446, %v446
  %v474 = vunpack.c.l.s4 1966171168
  %v475 = vunpack.c.0.s8 %v474
  %v476 = vlaneseq
  %v477 = vshrl.u32 %v476, 7
  %v478 = vsub.s32 %v475, %v477
  %v479 = vrot.slane %v471, %v478
  %v481 = vunpack.c.l.s4 1966171168
  %v482 = vunpack.c.0.s8 %v481
  %v483 = vlaneseq
  %v484 = vshrl.u32 %v483, 7
  %v485 = vsub.s32 %v482, %v484
  %v486 = vrot.slane %v479, %v485
  %487 = vrot.lane.b32.xlu0 %v486, 32
  %v488 = vpop.permute.xlu0 %487
  %s490 = scalar_lea.vmem %s3, 1
  %491 = vst.msk [vmem:[%s490] sm:$0x1] %vm302, %v488
  %v492 = vpack.c.bf16 %v470, %v470
  %v495 = vunpack.c.l.s4 1966171168
  %v496 = vunpack.c.0.s8 %v495
  %v497 = vlaneseq
  %v498 = vshrl.u32 %v497, 7
  %v499 = vsub.s32 %v496, %v498
  %v500 = vrot.slane %v492, %v499
  %v502 = vunpack.c.l.s4 1966171168
  %v503 = vunpack.c.0.s8 %v502
  %v504 = vlaneseq
  %v505 = vshrl.u32 %v504, 7
  %v506 = vsub.s32 %v503, %v505
  %v507 = vrot.slane %v500, %v506
  %508 = vrot.lane.b32.xlu0 %v507, 32
  %v509 = vpop.permute.xlu0 %508
  %s511 = scalar_lea.vmem %s42, 14
  %512 = vst.msk [vmem:[%s511] sm:$0x1] %vm302, %v509
  %s513 = scalar_lea.vmem %s0, 2
  %v514 = vld [vmem:[%s513] sm:$0x1]
  %v515 = vunpack.c.l.bf16 %v514
  %516 = vrot.lane.b32.xlu0 %v471, 32
  %v517 = vpop.permute.xlu0 %516
  %v519 = vsel %vm120, %v517, 0
  %521 = vmatprep.subr.bf16.mxu0 0
  %522 = vmatpush1.bf16.msra.mxu0 %v108
  %523 = vmatprep.subr.bf16.mxu0 0
  %524 = vmatpush1.bf16.msra.mxu0 %v109
  %525 = vmatprep.subr.bf16.mxu0 0
  %526 = vmatpush1.bf16.msra.mxu0 0
  %527 = vmatprep.subr.bf16.mxu0 0
  %528 = vmatpush1.bf16.msra.mxu0 0
  %529 = vmatprep.subr.bf16.mxu0 0
  %530 = vmatpush1.bf16.msra.mxu0 0
  %531 = vmatprep.subr.bf16.mxu0 0
  %532 = vmatpush1.bf16.msra.mxu0 0
  %533 = vmatprep.subr.bf16.mxu0 0
  %534 = vmatpush1.bf16.msra.mxu0 0
  %535 = vmatprep.subr.bf16.mxu0 0
  %536 = vmatpush1.bf16.msra.mxu0 0
  %537 = vmatprep.subr.bf16.mxu0 0
  %538 = vmatpush1.bf16.msra.mxu0 0
  %539 = vmatprep.subr.bf16.mxu0 0
  %540 = vmatpush1.bf16.msra.mxu0 0
  %541 = vmatprep.subr.bf16.mxu0 0
  %542 = vmatpush1.bf16.msra.mxu0 0
  %543 = vmatprep.subr.bf16.mxu0 0
  %544 = vmatpush1.bf16.msra.mxu0 0
  %545 = vmatprep.subr.bf16.mxu0 0
  %546 = vmatpush1.bf16.msra.mxu0 0
  %547 = vmatprep.subr.bf16.mxu0 0
  %548 = vmatpush1.bf16.msra.mxu0 0
  %549 = vmatprep.subr.bf16.mxu0 0
  %550 = vmatpush1.bf16.msra.mxu0 0
  %551 = vmatprep.subr.bf16.mxu0 0
  %552 = vmatpush1.bf16.msra.mxu0 0
  %553 = vmatprep.mubr.bf16.mxu0 0
  %554 = vmatmul.mubr.bf16.gmra.mrb[0].mxu0 %v519
  %v555 = vpop.f32.mrb[0].mxu0
  %v556 = vadd.f32 0.0, %v555
  %v557 = vpop.f32.mrb[0].mxu0
  %v558 = vpop.f32.mrb[0].mxu0
  %v559 = vpop.f32.mrb[0].mxu0
  %560 = vdwg.mxu0
  %v561 = vadd.f32 %v515, %v556
  %s562 = scalar_lea.vmem %s35, 13
  %v563 = vld [vmem:[%s562] sm:$0x1]
  %v564 = vunpack.c.l.bf16 %v563
  %565 = vrot.lane.b32.xlu0 %v492, 32
  %v566 = vpop.permute.xlu0 %565
  %v568 = vsel %vm120, %v566, 0
  %570 = vmatprep.subr.bf16.mxu0 0
  %571 = vmatpush1.bf16.msra.mxu0 %v111
  %572 = vmatprep.subr.bf16.mxu0 0
  %573 = vmatpush1.bf16.msra.mxu0 %v112
  %574 = vmatprep.subr.bf16.mxu0 0
  %575 = vmatpush1.bf16.msra.mxu0 0
  %576 = vmatprep.subr.bf16.mxu0 0
  %577 = vmatpush1.bf16.msra.mxu0 0
  %578 = vmatprep.subr.bf16.mxu0 0
  %579 = vmatpush1.bf16.msra.mxu0 0
  %580 = vmatprep.subr.bf16.mxu0 0
  %581 = vmatpush1.bf16.msra.mxu0 0
  %582 = vmatprep.subr.bf16.mxu0 0
  %583 = vmatpush1.bf16.msra.mxu0 0
  %584 = vmatprep.subr.bf16.mxu0 0
  %585 = vmatpush1.bf16.msra.mxu0 0
  %586 = vmatprep.subr.bf16.mxu0 0
  %587 = vmatpush1.bf16.msra.mxu0 0
  %588 = vmatprep.subr.bf16.mxu0 0
  %589 = vmatpush1.bf16.msra.mxu0 0
  %590 = vmatprep.subr.bf16.mxu0 0
  %591 = vmatpush1.bf16.msra.mxu0 0
  %592 = vmatprep.subr.bf16.mxu0 0
  %593 = vmatpush1.bf16.msra.mxu0 0
  %594 = vmatprep.subr.bf16.mxu0 0
  %595 = vmatpush1.bf16.msra.mxu0 0
  %596 = vmatprep.subr.bf16.mxu0 0
  %597 = vmatpush1.bf16.msra.mxu0 0
  %598 = vmatprep.subr.bf16.mxu0 0
  %599 = vmatpush1.bf16.msra.mxu0 0
  %600 = vmatprep.subr.bf16.mxu0 0
  %601 = vmatpush1.bf16.msra.mxu0 0
  %602 = vmatprep.mubr.bf16.mxu0 0
  %603 = vmatmul.mubr.bf16.gmra.mrb[0].mxu0 %v568
  %v604 = vpop.f32.mrb[0].mxu0
  %v605 = vadd.f32 0.0, %v604
  %v606 = vpop.f32.mrb[0].mxu0
  %v607 = vpop.f32.mrb[0].mxu0
  %v608 = vpop.f32.mrb[0].mxu0
  %609 = vdwg.mxu0
  %v610 = vadd.f32 %v564, %v605
  %v611 = vxor.u32 %v561, 2147483648
  %v612 = vmul.f32 %v611, 1.442695
  %v613 = vpow.pop %v612
  %v614 = vadd.f32 %v613, 1.0
  %v615 = vrcp.pop %v614
  %v616 = vmul.f32 1.0, %v615
  %v617 = vtanh.pop %v561
  %v618 = vmul.f32 %v616, %v440
  %620 = vrot.lane.b32.xlu0 %v617, 64
  %v621 = vpop.permute.xlu0 %620
  %v623 = vmul.f32 %v616, %v621
  %625 = vrot.lane.b32.xlu0 %v623, 32
  %v626 = vpop.permute.xlu0 %625
  %v628 = vadd.f32 %v618, %v626
  %v629 = vtanh.pop %v628
  %631 = vrot.lane.b32.xlu0 %v629, 64
  %v632 = vpop.permute.xlu0 %631
  %v634 = vmul.f32 %v616, %v632
  %v635 = vxor.u32 %v610, 2147483648
  %v636 = vmul.f32 %v635, 1.442695
  %v637 = vpow.pop %v636
  %v638 = vadd.f32 %v637, 1.0
  %v639 = vrcp.pop %v638
  %v640 = vmul.f32 1.0, %v639
  %v641 = vtanh.pop %v610
  %v642 = vmul.f32 %v640, %v464
  %644 = vrot.lane.b32.xlu0 %v641, 64
  %v645 = vpop.permute.xlu0 %644
  %v647 = vmul.f32 %v640, %v645
  %649 = vrot.lane.b32.xlu0 %v647, 32
  %v650 = vpop.permute.xlu0 %649
  %v652 = vadd.f32 %v642, %v650
  %v653 = vtanh.pop %v652
  %655 = vrot.lane.b32.xlu0 %v653, 64
  %v656 = vpop.permute.xlu0 %655
  %v658 = vmul.f32 %v640, %v656
  %v659 = vpack.c.bf16 %v634, %v634
  %v662 = vunpack.c.l.s4 1966171168
  %v663 = vunpack.c.0.s8 %v662
  %v664 = vlaneseq
  %v665 = vshrl.u32 %v664, 7
  %v666 = vsub.s32 %v663, %v665
  %v667 = vrot.slane %v659, %v666
  %v669 = vunpack.c.l.s4 1966171168
  %v670 = vunpack.c.0.s8 %v669
  %v671 = vlaneseq
  %v672 = vshrl.u32 %v671, 7
  %v673 = vsub.s32 %v670, %v672
  %v674 = vrot.slane %v667, %v673
  %675 = vrot.lane.b32.xlu0 %v674, 32
  %v676 = vpop.permute.xlu0 %675
  %s678 = scalar_lea.vmem %s3, 2
  %679 = vst.msk [vmem:[%s678] sm:$0x1] %vm302, %v676
  %v680 = vpack.c.bf16 %v658, %v658
  %v683 = vunpack.c.l.s4 1966171168
  %v684 = vunpack.c.0.s8 %v683
  %v685 = vlaneseq
  %v686 = vshrl.u32 %v685, 7
  %v687 = vsub.s32 %v684, %v686
  %v688 = vrot.slane %v680, %v687
  %v690 = vunpack.c.l.s4 1966171168
  %v691 = vunpack.c.0.s8 %v690
  %v692 = vlaneseq
  %v693 = vshrl.u32 %v692, 7
  %v694 = vsub.s32 %v691, %v693
  %v695 = vrot.slane %v688, %v694
  %696 = vrot.lane.b32.xlu0 %v695, 32
  %v697 = vpop.permute.xlu0 %696
  %s699 = scalar_lea.vmem %s42, 13
  %700 = vst.msk [vmem:[%s699] sm:$0x1] %vm302, %v697
  %s701 = scalar_lea.vmem %s0, 3
  %v702 = vld [vmem:[%s701] sm:$0x1]
  %v703 = vunpack.c.l.bf16 %v702
  %704 = vrot.lane.b32.xlu0 %v659, 32
  %v705 = vpop.permute.xlu0 %704
  %v707 = vsel %vm120, %v705, 0
  %709 = vmatprep.subr.bf16.mxu0 0
  %710 = vmatpush1.bf16.msra.mxu0 %v108
  %711 = vmatprep.subr.bf16.mxu0 0
  %712 = vmatpush1.bf16.msra.mxu0 %v109
  %713 = vmatprep.subr.bf16.mxu0 0
  %714 = vmatpush1.bf16.msra.mxu0 0
  %715 = vmatprep.subr.bf16.mxu0 0
  %716 = vmatpush1.bf16.msra.mxu0 0
  %717 = vmatprep.subr.bf16.mxu0 0
  %718 = vmatpush1.bf16.msra.mxu0 0
  %719 = vmatprep.subr.bf16.mxu0 0
  %720 = vmatpush1.bf16.msra.mxu0 0
  %721 = vmatprep.subr.bf16.mxu0 0
  %722 = vmatpush1.bf16.msra.mxu0 0
  %723 = vmatprep.subr.bf16.mxu0 0
  %724 = vmatpush1.bf16.msra.mxu0 0
  %725 = vmatprep.subr.bf16.mxu0 0
  %726 = vmatpush1.bf16.msra.mxu0 0
  %727 = vmatprep.subr.bf16.mxu0 0
  %728 = vmatpush1.bf16.msra.mxu0 0
  %729 = vmatprep.subr.bf16.mxu0 0
  %730 = vmatpush1.bf16.msra.mxu0 0
  %731 = vmatprep.subr.bf16.mxu0 0
  %732 = vmatpush1.bf16.msra.mxu0 0
  %733 = vmatprep.subr.bf16.mxu0 0
  %734 = vmatpush1.bf16.msra.mxu0 0
  %735 = vmatprep.subr.bf16.mxu0 0
  %736 = vmatpush1.bf16.msra.mxu0 0
  %737 = vmatprep.subr.bf16.mxu0 0
  %738 = vmatpush1.bf16.msra.mxu0 0
  %739 = vmatprep.subr.bf16.mxu0 0
  %740 = vmatpush1.bf16.msra.mxu0 0
  %741 = vmatprep.mubr.bf16.mxu0 0
  %742 = vmatmul.mubr.bf16.gmra.mrb[0].mxu0 %v707
  %v743 = vpop.f32.mrb[0].mxu0
  %v744 = vadd.f32 0.0, %v743
  %v745 = vpop.f32.mrb[0].mxu0
  %v746 = vpop.f32.mrb[0].mxu0
  %v747 = vpop.f32.mrb[0].mxu0
  %748 = vdwg.mxu0
  %v749 = vadd.f32 %v703, %v744
  %s750 = scalar_lea.vmem %s35, 12
  %v751 = vld [vmem:[%s750] sm:$0x1]
  %v752 = vunpack.c.l.bf16 %v751
  %753 = vrot.lane.b32.xlu0 %v680, 32
  %v754 = vpop.permute.xlu0 %753
  %v756 = vsel %vm120, %v754, 0
  %758 = vmatprep.subr.bf16.mxu0 0
  %759 = vmatpush1.bf16.msra.mxu0 %v111
  %760 = vmatprep.subr.bf16.mxu0 0
  %761 = vmatpush1.bf16.msra.mxu0 %v112
  %762 = vmatprep.subr.bf16.mxu0 0
  %763 = vmatpush1.bf16.msra.mxu0 0
  %764 = vmatprep.subr.bf16.mxu0 0
  %765 = vmatpush1.bf16.msra.mxu0 0
  %766 = vmatprep.subr.bf16.mxu0 0
  %767 = vmatpush1.bf16.msra.mxu0 0
  %768 = vmatprep.subr.bf16.mxu0 0
  %769 = vmatpush1.bf16.msra.mxu0 0
  %770 = vmatprep.subr.bf16.mxu0 0
  %771 = vmatpush1.bf16.msra.mxu0 0
  %772 = vmatprep.subr.bf16.mxu0 0
  %773 = vmatpush1.bf16.msra.mxu0 0
  %774 = vmatprep.subr.bf16.mxu0 0
  %775 = vmatpush1.bf16.msra.mxu0 0
  %776 = vmatprep.subr.bf16.mxu0 0
  %777 = vmatpush1.bf16.msra.mxu0 0
  %778 = vmatprep.subr.bf16.mxu0 0
  %779 = vmatpush1.bf16.msra.mxu0 0
  %780 = vmatprep.subr.bf16.mxu0 0
  %781 = vmatpush1.bf16.msra.mxu0 0
  %782 = vmatprep.subr.bf16.mxu0 0
  %783 = vmatpush1.bf16.msra.mxu0 0
  %784 = vmatprep.subr.bf16.mxu0 0
  %785 = vmatpush1.bf16.msra.mxu0 0
  %786 = vmatprep.subr.bf16.mxu0 0
  %787 = vmatpush1.bf16.msra.mxu0 0
  %788 = vmatprep.subr.bf16.mxu0 0
  %789 = vmatpush1.bf16.msra.mxu0 0
  %790 = vmatprep.mubr.bf16.mxu0 0
  %791 = vmatmul.mubr.bf16.gmra.mrb[0].mxu0 %v756
  %v792 = vpop.f32.mrb[0].mxu0
  %v793 = vadd.f32 0.0, %v792
  %v794 = vpop.f32.mrb[0].mxu0
  %v795 = vpop.f32.mrb[0].mxu0
  %v796 = vpop.f32.mrb[0].mxu0
  %797 = vdwg.mxu0
  %v798 = vadd.f32 %v752, %v793
  %v799 = vxor.u32 %v749, 2147483648
  %v800 = vmul.f32 %v799, 1.442695
  %v801 = vpow.pop %v800
  %v802 = vadd.f32 %v801, 1.0
  %v803 = vrcp.pop %v802
  %v804 = vmul.f32 1.0, %v803
  %v805 = vtanh.pop %v749
  %v806 = vmul.f32 %v804, %v628
  %808 = vrot.lane.b32.xlu0 %v805, 64
  %v809 = vpop.permute.xlu0 %808
  %v811 = vmul.f32 %v804, %v809
  %813 = vrot.lane.b32.xlu0 %v811, 32
  %v814 = vpop.permute.xlu0 %813
  %v816 = vadd.f32 %v806, %v814
  %v817 = vtanh.pop %v816
  %819 = vrot.lane.b32.xlu0 %v817, 64
  %v820 = vpop.permute.xlu0 %819
  %v822 = vmul.f32 %v804, %v820
  %v823 = vxor.u32 %v798, 2147483648
  %v824 = vmul.f32 %v823, 1.442695
  %v825 = vpow.pop %v824
  %v826 = vadd.f32 %v825, 1.0
  %v827 = vrcp.pop %v826
  %v828 = vmul.f32 1.0, %v827
  %v829 = vtanh.pop %v798
  %v830 = vmul.f32 %v828, %v652
  %832 = vrot.lane.b32.xlu0 %v829, 64
  %v833 = vpop.permute.xlu0 %832
  %v835 = vmul.f32 %v828, %v833
  %837 = vrot.lane.b32.xlu0 %v835, 32
  %v838 = vpop.permute.xlu0 %837
  %v840 = vadd.f32 %v830, %v838
  %v841 = vtanh.pop %v840
  %843 = vrot.lane.b32.xlu0 %v841, 64
  %v844 = vpop.permute.xlu0 %843
  %v846 = vmul.f32 %v828, %v844
  %v847 = vpack.c.bf16 %v822, %v822
  %v850 = vunpack.c.l.s4 1966171168
  %v851 = vunpack.c.0.s8 %v850
  %v852 = vlaneseq
  %v853 = vshrl.u32 %v852, 7
  %v854 = vsub.s32 %v851, %v853
  %v855 = vrot.slane %v847, %v854
  %v857 = vunpack.c.l.s4 1966171168
  %v858 = vunpack.c.0.s8 %v857
  %v859 = vlaneseq
  %v860 = vshrl.u32 %v859, 7
  %v861 = vsub.s32 %v858, %v860
  %v862 = vrot.slane %v855, %v861
  %863 = vrot.lane.b32.xlu0 %v862, 32
  %v864 = vpop.permute.xlu0 %863
  %s866 = scalar_lea.vmem %s3, 3
  %867 = vst.msk [vmem:[%s866] sm:$0x1] %vm302, %v864
  %v868 = vpack.c.bf16 %v846, %v846
  %v871 = vunpack.c.l.s4 1966171168
  %v872 = vunpack.c.0.s8 %v871
  %v873 = vlaneseq
  %v874 = vshrl.u32 %v873, 7
  %v875 = vsub.s32 %v872, %v874
  %v876 = vrot.slane %v868, %v875
  %v878 = vunpack.c.l.s4 1966171168
  %v879 = vunpack.c.0.s8 %v878
  %v880 = vlaneseq
  %v881 = vshrl.u32 %v880, 7
  %v882 = vsub.s32 %v879, %v881
  %v883 = vrot.slane %v876, %v882
  %884 = vrot.lane.b32.xlu0 %v883, 32
  %v885 = vpop.permute.xlu0 %884
  %s887 = scalar_lea.vmem %s42, 12
  %888 = vst.msk [vmem:[%s887] sm:$0x1] %vm302, %v885
  %s889 = scalar_lea.vmem %s0, 4
  %v890 = vld [vmem:[%s889] sm:$0x1]
  %v891 = vunpack.c.l.bf16 %v890
  %892 = vrot.lane.b32.xlu0 %v847, 32
  %v893 = vpop.permute.xlu0 %892
  %v895 = vsel %vm120, %v893, 0
  %897 = vmatprep.subr.bf16.mxu0 0
  %898 = vmatpush1.bf16.msra.mxu0 %v108
  %899 = vmatprep.subr.bf16.mxu0 0
  %900 = vmatpush1.bf16.msra.mxu0 %v109
  %901 = vmatprep.subr.bf16.mxu0 0
  %902 = vmatpush1.bf16.msra.mxu0 0
  %903 = vmatprep.subr.bf16.mxu0 0
  %904 = vmatpush1.bf16.msra.mxu0 0
  %905 = vmatprep.subr.bf16.mxu0 0
  %906 = vmatpush1.bf16.msra.mxu0 0
  %907 = vmatprep.subr.bf16.mxu0 0
  %908 = vmatpush1.bf16.msra.mxu0 0
  %909 = vmatprep.subr.bf16.mxu0 0
  %910 = vmatpush1.bf16.msra.mxu0 0
  %911 = vmatprep.subr.bf16.mxu0 0
  %912 = vmatpush1.bf16.msra.mxu0 0
  %913 = vmatprep.subr.bf16.mxu0 0
  %914 = vmatpush1.bf16.msra.mxu0 0
  %915 = vmatprep.subr.bf16.mxu0 0
  %916 = vmatpush1.bf16.msra.mxu0 0
  %917 = vmatprep.subr.bf16.mxu0 0
  %918 = vmatpush1.bf16.msra.mxu0 0
  %919 = vmatprep.subr.bf16.mxu0 0
  %920 = vmatpush1.bf16.msra.mxu0 0
  %921 = vmatprep.subr.bf16.mxu0 0
  %922 = vmatpush1.bf16.msra.mxu0 0
  %923 = vmatprep.subr.bf16.mxu0 0
  %924 = vmatpush1.bf16.msra.mxu0 0
  %925 = vmatprep.subr.bf16.mxu0 0
  %926 = vmatpush1.bf16.msra.mxu0 0
  %927 = vmatprep.subr.bf16.mxu0 0
  %928 = vmatpush1.bf16.msra.mxu0 0
  %929 = vmatprep.mubr.bf16.mxu0 0
  %930 = vmatmul.mubr.bf16.gmra.mrb[0].mxu0 %v895
  %v931 = vpop.f32.mrb[0].mxu0
  %v932 = vadd.f32 0.0, %v931
  %v933 = vpop.f32.mrb[0].mxu0
  %v934 = vpop.f32.mrb[0].mxu0
  %v935 = vpop.f32.mrb[0].mxu0
  %936 = vdwg.mxu0
  %v937 = vadd.f32 %v891, %v932
  %s938 = scalar_lea.vmem %s35, 11
  %v939 = vld [vmem:[%s938] sm:$0x1]
  %v940 = vunpack.c.l.bf16 %v939
  %941 = vrot.lane.b32.xlu0 %v868, 32
  %v942 = vpop.permute.xlu0 %941
  %v944 = vsel %vm120, %v942, 0
  %946 = vmatprep.subr.bf16.mxu0 0
  %947 = vmatpush1.bf16.msra.mxu0 %v111
  %948 = vmatprep.subr.bf16.mxu0 0
  %949 = vmatpush1.bf16.msra.mxu0 %v112
  %950 = vmatprep.subr.bf16.mxu0 0
  %951 = vmatpush1.bf16.msra.mxu0 0
  %952 = vmatprep.subr.bf16.mxu0 0
  %953 = vmatpush1.bf16.msra.mxu0 0
  %954 = vmatprep.subr.bf16.mxu0 0
  %955 = vmatpush1.bf16.msra.mxu0 0
  %956 = vmatprep.subr.bf16.mxu0 0
  %957 = vmatpush1.bf16.msra.mxu0 0
  %958 = vmatprep.subr.bf16.mxu0 0
  %959 = vmatpush1.bf16.msra.mxu0 0
  %960 = vmatprep.subr.bf16.mxu0 0
  %961 = vmatpush1.bf16.msra.mxu0 0
  %962 = vmatprep.subr.bf16.mxu0 0
  %963 = vmatpush1.bf16.msra.mxu0 0
  %964 = vmatprep.subr.bf16.mxu0 0
  %965 = vmatpush1.bf16.msra.mxu0 0
  %966 = vmatprep.subr.bf16.mxu0 0
  %967 = vmatpush1.bf16.msra.mxu0 0
  %968 = vmatprep.subr.bf16.mxu0 0
  %969 = vmatpush1.bf16.msra.mxu0 0
  %970 = vmatprep.subr.bf16.mxu0 0
  %971 = vmatpush1.bf16.msra.mxu0 0
  %972 = vmatprep.subr.bf16.mxu0 0
  %973 = vmatpush1.bf16.msra.mxu0 0
  %974 = vmatprep.subr.bf16.mxu0 0
  %975 = vmatpush1.bf16.msra.mxu0 0
  %976 = vmatprep.subr.bf16.mxu0 0
  %977 = vmatpush1.bf16.msra.mxu0 0
  %978 = vmatprep.mubr.bf16.mxu0 0
  %979 = vmatmul.mubr.bf16.gmra.mrb[0].mxu0 %v944
  %v980 = vpop.f32.mrb[0].mxu0
  %v981 = vadd.f32 0.0, %v980
  %v982 = vpop.f32.mrb[0].mxu0
  %v983 = vpop.f32.mrb[0].mxu0
  %v984 = vpop.f32.mrb[0].mxu0
  %985 = vdwg.mxu0
  %v986 = vadd.f32 %v940, %v981
  %v987 = vxor.u32 %v937, 2147483648
  %v988 = vmul.f32 %v987, 1.442695
  %v989 = vpow.pop %v988
  %v990 = vadd.f32 %v989, 1.0
  %v991 = vrcp.pop %v990
  %v992 = vmul.f32 1.0, %v991
  %v993 = vtanh.pop %v937
  %v994 = vmul.f32 %v992, %v816
  %996 = vrot.lane.b32.xlu0 %v993, 64
  %v997 = vpop.permute.xlu0 %996
  %v999 = vmul.f32 %v992, %v997
  %1001 = vrot.lane.b32.xlu0 %v999, 32
  %v1002 = vpop.permute.xlu0 %1001
  %v1004 = vadd.f32 %v994, %v1002
  %v1005 = vtanh.pop %v1004
  %1007 = vrot.lane.b32.xlu0 %v1005, 64
  %v1008 = vpop.permute.xlu0 %1007
  %v1010 = vmul.f32 %v992, %v1008
  %v1011 = vxor.u32 %v986, 2147483648
  %v1012 = vmul.f32 %v1011, 1.442695
  %v1013 = vpow.pop %v1012
  %v1014 = vadd.f32 %v1013, 1.0
  %v1015 = vrcp.pop %v1014
  %v1016 = vmul.f32 1.0, %v1015
  %v1017 = vtanh.pop %v986
  %v1018 = vmul.f32 %v1016, %v840
  %1020 = vrot.lane.b32.xlu0 %v1017, 64
  %v1021 = vpop.permute.xlu0 %1020
  %v1023 = vmul.f32 %v1016, %v1021
  %1025 = vrot.lane.b32.xlu0 %v1023, 32
  %v1026 = vpop.permute.xlu0 %1025
  %v1028 = vadd.f32 %v1018, %v1026
  %v1029 = vtanh.pop %v1028
  %1031 = vrot.lane.b32.xlu0 %v1029, 64
  %v1032 = vpop.permute.xlu0 %1031
  %v1034 = vmul.f32 %v1016, %v1032
  %v1035 = vpack.c.bf16 %v1010, %v1010
  %v1038 = vunpack.c.l.s4 1966171168
  %v1039 = vunpack.c.0.s8 %v1038
  %v1040 = vlaneseq
  %v1041 = vshrl.u32 %v1040, 7
  %v1042 = vsub.s32 %v1039, %v1041
  %v1043 = vrot.slane %v1035, %v1042
  %v1045 = vunpack.c.l.s4 1966171168
  %v1046 = vunpack.c.0.s8 %v1045
  %v1047 = vlaneseq
  %v1048 = vshrl.u32 %v1047, 7
  %v1049 = vsub.s32 %v1046, %v1048
  %v1050 = vrot.slane %v1043, %v1049
  %1051 = vrot.lane.b32.xlu0 %v1050, 32
  %v1052 = vpop.permute.xlu0 %1051
  %s1054 = scalar_lea.vmem %s3, 4
  %1055 = vst.msk [vmem:[%s1054] sm:$0x1] %vm302, %v1052
  %v1056 = vpack.c.bf16 %v1034, %v1034
  %v1059 = vunpack.c.l.s4 1966171168
  %v1060 = vunpack.c.0.s8 %v1059
  %v1061 = vlaneseq
  %v1062 = vshrl.u32 %v1061, 7
  %v1063 = vsub.s32 %v1060, %v1062
  %v1064 = vrot.slane %v1056, %v1063
  %v1066 = vunpack.c.l.s4 1966171168
  %v1067 = vunpack.c.0.s8 %v1066
  %v1068 = vlaneseq
  %v1069 = vshrl.u32 %v1068, 7
  %v1070 = vsub.s32 %v1067, %v1069
  %v1071 = vrot.slane %v1064, %v1070
  %1072 = vrot.lane.b32.xlu0 %v1071, 32
  %v1073 = vpop.permute.xlu0 %1072
  %s1075 = scalar_lea.vmem %s42, 11
  %1076 = vst.msk [vmem:[%s1075] sm:$0x1] %vm302, %v1073
  %s1077 = scalar_lea.vmem %s0, 5
  %v1078 = vld [vmem:[%s1077] sm:$0x1]
  %v1079 = vunpack.c.l.bf16 %v1078
  %1080 = vrot.lane.b32.xlu0 %v1035, 32
  %v1081 = vpop.permute.xlu0 %1080
  %v1083 = vsel %vm120, %v1081, 0
  %1085 = vmatprep.subr.bf16.mxu0 0
  %1086 = vmatpush1.bf16.msra.mxu0 %v108
  %1087 = vmatprep.subr.bf16.mxu0 0
  %1088 = vmatpush1.bf16.msra.mxu0 %v109
  %1089 = vmatprep.subr.bf16.mxu0 0
  %1090 = vmatpush1.bf16.msra.mxu0 0
  %1091 = vmatprep.subr.bf16.mxu0 0
  %1092 = vmatpush1.bf16.msra.mxu0 0
  %1093 = vmatprep.subr.bf16.mxu0 0
  %1094 = vmatpush1.bf16.msra.mxu0 0
  %1095 = vmatprep.subr.bf16.mxu0 0
  %1096 = vmatpush1.bf16.msra.mxu0 0
  %1097 = vmatprep.subr.bf16.mxu0 0
  %1098 = vmatpush1.bf16.msra.mxu0 0
  %1099 = vmatprep.subr.bf16.mxu0 0
  %1100 = vmatpush1.bf16.msra.mxu0 0
  %1101 = vmatprep.subr.bf16.mxu0 0
  %1102 = vmatpush1.bf16.msra.mxu0 0
  %1103 = vmatprep.subr.bf16.mxu0 0
  %1104 = vmatpush1.bf16.msra.mxu0 0
  %1105 = vmatprep.subr.bf16.mxu0 0
  %1106 = vmatpush1.bf16.msra.mxu0 0
  %1107 = vmatprep.subr.bf16.mxu0 0
  %1108 = vmatpush1.bf16.msra.mxu0 0
  %1109 = vmatprep.subr.bf16.mxu0 0
  %1110 = vmatpush1.bf16.msra.mxu0 0
  %1111 = vmatprep.subr.bf16.mxu0 0
  %1112 = vmatpush1.bf16.msra.mxu0 0
  %1113 = vmatprep.subr.bf16.mxu0 0
  %1114 = vmatpush1.bf16.msra.mxu0 0
  %1115 = vmatprep.subr.bf16.mxu0 0
  %1116 = vmatpush1.bf16.msra.mxu0 0
  %1117 = vmatprep.mubr.bf16.mxu0 0
  %1118 = vmatmul.mubr.bf16.gmra.mrb[0].mxu0 %v1083
  %v1119 = vpop.f32.mrb[0].mxu0
  %v1120 = vadd.f32 0.0, %v1119
  %v1121 = vpop.f32.mrb[0].mxu0
  %v1122 = vpop.f32.mrb[0].mxu0
  %v1123 = vpop.f32.mrb[0].mxu0
  %1124 = vdwg.mxu0
  %v1125 = vadd.f32 %v1079, %v1120
  %s1126 = scalar_lea.vmem %s35, 10
  %v1127 = vld [vmem:[%s1126] sm:$0x1]
  %v1128 = vunpack.c.l.bf16 %v1127
  %1129 = vrot.lane.b32.xlu0 %v1056, 32
  %v1130 = vpop.permute.xlu0 %1129
  %v1132 = vsel %vm120, %v1130, 0
  %1134 = vmatprep.subr.bf16.mxu0 0
  %1135 = vmatpush1.bf16.msra.mxu0 %v111
  %1136 = vmatprep.subr.bf16.mxu0 0
  %1137 = vmatpush1.bf16.msra.mxu0 %v112
  %1138 = vmatprep.subr.bf16.mxu0 0
  %1139 = vmatpush1.bf16.msra.mxu0 0
  %1140 = vmatprep.subr.bf16.mxu0 0
  %1141 = vmatpush1.bf16.msra.mxu0 0
  %1142 = vmatprep.subr.bf16.mxu0 0
  %1143 = vmatpush1.bf16.msra.mxu0 0
  %1144 = vmatprep.subr.bf16.mxu0 0
  %1145 = vmatpush1.bf16.msra.mxu0 0
  %1146 = vmatprep.subr.bf16.mxu0 0
  %1147 = vmatpush1.bf16.msra.mxu0 0
  %1148 = vmatprep.subr.bf16.mxu0 0
  %1149 = vmatpush1.bf16.msra.mxu0 0
  %1150 = vmatprep.subr.bf16.mxu0 0
  %1151 = vmatpush1.bf16.msra.mxu0 0
  %1152 = vmatprep.subr.bf16.mxu0 0
  %1153 = vmatpush1.bf16.msra.mxu0 0
  %1154 = vmatprep.subr.bf16.mxu0 0
  %1155 = vmatpush1.bf16.msra.mxu0 0
  %1156 = vmatprep.subr.bf16.mxu0 0
  %1157 = vmatpush1.bf16.msra.mxu0 0
  %1158 = vmatprep.subr.bf16.mxu0 0
  %1159 = vmatpush1.bf16.msra.mxu0 0
  %1160 = vmatprep.subr.bf16.mxu0 0
  %1161 = vmatpush1.bf16.msra.mxu0 0
  %1162 = vmatprep.subr.bf16.mxu0 0
  %1163 = vmatpush1.bf16.msra.mxu0 0
  %1164 = vmatprep.subr.bf16.mxu0 0
  %1165 = vmatpush1.bf16.msra.mxu0 0
  %1166 = vmatprep.mubr.bf16.mxu0 0
  %1167 = vmatmul.mubr.bf16.gmra.mrb[0].mxu0 %v1132
  %v1168 = vpop.f32.mrb[0].mxu0
  %v1169 = vadd.f32 0.0, %v1168
  %v1170 = vpop.f32.mrb[0].mxu0
  %v1171 = vpop.f32.mrb[0].mxu0
  %v1172 = vpop.f32.mrb[0].mxu0
  %1173 = vdwg.mxu0
  %v1174 = vadd.f32 %v1128, %v1169
  %v1175 = vxor.u32 %v1125, 2147483648
  %v1176 = vmul.f32 %v1175, 1.442695
  %v1177 = vpow.pop %v1176
  %v1178 = vadd.f32 %v1177, 1.0
  %v1179 = vrcp.pop %v1178
  %v1180 = vmul.f32 1.0, %v1179
  %v1181 = vtanh.pop %v1125
  %v1182 = vmul.f32 %v1180, %v1004
  %1184 = vrot.lane.b32.xlu0 %v1181, 64
  %v1185 = vpop.permute.xlu0 %1184
  %v1187 = vmul.f32 %v1180, %v1185
  %1189 = vrot.lane.b32.xlu0 %v1187, 32
  %v1190 = vpop.permute.xlu0 %1189
  %v1192 = vadd.f32 %v1182, %v1190
  %v1193 = vtanh.pop %v1192
  %1195 = vrot.lane.b32.xlu0 %v1193, 64
  %v1196 = vpop.permute.xlu0 %1195
  %v1198 = vmul.f32 %v1180, %v1196
  %v1199 = vxor.u32 %v1174, 2147483648
  %v1200 = vmul.f32 %v1199, 1.442695
  %v1201 = vpow.pop %v1200
  %v1202 = vadd.f32 %v1201, 1.0
  %v1203 = vrcp.pop %v1202
  %v1204 = vmul.f32 1.0, %v1203
  %v1205 = vtanh.pop %v1174
  %v1206 = vmul.f32 %v1204, %v1028
  %1208 = vrot.lane.b32.xlu0 %v1205, 64
  %v1209 = vpop.permute.xlu0 %1208
  %v1211 = vmul.f32 %v1204, %v1209
  %1213 = vrot.lane.b32.xlu0 %v1211, 32
  %v1214 = vpop.permute.xlu0 %1213
  %v1216 = vadd.f32 %v1206, %v1214
  %v1217 = vtanh.pop %v1216
  %1219 = vrot.lane.b32.xlu0 %v1217, 64
  %v1220 = vpop.permute.xlu0 %1219
  %v1222 = vmul.f32 %v1204, %v1220
  %v1223 = vpack.c.bf16 %v1198, %v1198
  %v1226 = vunpack.c.l.s4 1966171168
  %v1227 = vunpack.c.0.s8 %v1226
  %v1228 = vlaneseq
  %v1229 = vshrl.u32 %v1228, 7
  %v1230 = vsub.s32 %v1227, %v1229
  %v1231 = vrot.slane %v1223, %v1230
  %v1233 = vunpack.c.l.s4 1966171168
  %v1234 = vunpack.c.0.s8 %v1233
  %v1235 = vlaneseq
  %v1236 = vshrl.u32 %v1235, 7
  %v1237 = vsub.s32 %v1234, %v1236
  %v1238 = vrot.slane %v1231, %v1237
  %1239 = vrot.lane.b32.xlu0 %v1238, 32
  %v1240 = vpop.permute.xlu0 %1239
  %s1242 = scalar_lea.vmem %s3, 5
  %1243 = vst.msk [vmem:[%s1242] sm:$0x1] %vm302, %v1240
  %v1244 = vpack.c.bf16 %v1222, %v1222
  %v1247 = vunpack.c.l.s4 1966171168
  %v1248 = vunpack.c.0.s8 %v1247
  %v1249 = vlaneseq
  %v1250 = vshrl.u32 %v1249, 7
  %v1251 = vsub.s32 %v1248, %v1250
  %v1252 = vrot.slane %v1244, %v1251
  %v1254 = vunpack.c.l.s4 1966171168
  %v1255 = vunpack.c.0.s8 %v1254
  %v1256 = vlaneseq
  %v1257 = vshrl.u32 %v1256, 7
  %v1258 = vsub.s32 %v1255, %v1257
  %v1259 = vrot.slane %v1252, %v1258
  %1260 = vrot.lane.b32.xlu0 %v1259, 32
  %v1261 = vpop.permute.xlu0 %1260
  %s1263 = scalar_lea.vmem %s42, 10
  %1264 = vst.msk [vmem:[%s1263] sm:$0x1] %vm302, %v1261
  %s1265 = scalar_lea.vmem %s0, 6
  %v1266 = vld [vmem:[%s1265] sm:$0x1]
  %v1267 = vunpack.c.l.bf16 %v1266
  %1268 = vrot.lane.b32.xlu0 %v1223, 32
  %v1269 = vpop.permute.xlu0 %1268
  %v1271 = vsel %vm120, %v1269, 0
  %1273 = vmatprep.subr.bf16.mxu0 0
  %1274 = vmatpush1.bf16.msra.mxu0 %v108
  %1275 = vmatprep.subr.bf16.mxu0 0
  %1276 = vmatpush1.bf16.msra.mxu0 %v109
  %1277 = vmatprep.subr.bf16.mxu0 0
  %1278 = vmatpush1.bf16.msra.mxu0 0
  %1279 = vmatprep.subr.bf16.mxu0 0
  %1280 = vmatpush1.bf16.msra.mxu0 0
  %1281 = vmatprep.subr.bf16.mxu0 0
  %1282 = vmatpush1.bf16.msra.mxu0 0
  %1283 = vmatprep.subr.bf16.mxu0 0
  %1284 = vmatpush1.bf16.msra.mxu0 0
  %1285 = vmatprep.subr.bf16.mxu0 0
  %1286 = vmatpush1.bf16.msra.mxu0 0
  %1287 = vmatprep.subr.bf16.mxu0 0
  %1288 = vmatpush1.bf16.msra.mxu0 0
  %1289 = vmatprep.subr.bf16.mxu0 0
  %1290 = vmatpush1.bf16.msra.mxu0 0
  %1291 = vmatprep.subr.bf16.mxu0 0
  %1292 = vmatpush1.bf16.msra.mxu0 0
  %1293 = vmatprep.subr.bf16.mxu0 0
  %1294 = vmatpush1.bf16.msra.mxu0 0
  %1295 = vmatprep.subr.bf16.mxu0 0
  %1296 = vmatpush1.bf16.msra.mxu0 0
  %1297 = vmatprep.subr.bf16.mxu0 0
  %1298 = vmatpush1.bf16.msra.mxu0 0
  %1299 = vmatprep.subr.bf16.mxu0 0
  %1300 = vmatpush1.bf16.msra.mxu0 0
  %1301 = vmatprep.subr.bf16.mxu0 0
  %1302 = vmatpush1.bf16.msra.mxu0 0
  %1303 = vmatprep.subr.bf16.mxu0 0
  %1304 = vmatpush1.bf16.msra.mxu0 0
  %1305 = vmatprep.mubr.bf16.mxu0 0
  %1306 = vmatmul.mubr.bf16.gmra.mrb[0].mxu0 %v1271
  %v1307 = vpop.f32.mrb[0].mxu0
  %v1308 = vadd.f32 0.0, %v1307
  %v1309 = vpop.f32.mrb[0].mxu0
  %v1310 = vpop.f32.mrb[0].mxu0
  %v1311 = vpop.f32.mrb[0].mxu0
  %1312 = vdwg.mxu0
  %v1313 = vadd.f32 %v1267, %v1308
  %s1314 = scalar_lea.vmem %s35, 9
  %v1315 = vld [vmem:[%s1314] sm:$0x1]
  %v1316 = vunpack.c.l.bf16 %v1315
  %1317 = vrot.lane.b32.xlu0 %v1244, 32
  %v1318 = vpop.permute.xlu0 %1317
  %v1320 = vsel %vm120, %v1318, 0
  %1322 = vmatprep.subr.bf16.mxu0 0
  %1323 = vmatpush1.bf16.msra.mxu0 %v111
  %1324 = vmatprep.subr.bf16.mxu0 0
  %1325 = vmatpush1.bf16.msra.mxu0 %v112
  %1326 = vmatprep.subr.bf16.mxu0 0
  %1327 = vmatpush1.bf16.msra.mxu0 0
  %1328 = vmatprep.subr.bf16.mxu0 0
  %1329 = vmatpush1.bf16.msra.mxu0 0
  %1330 = vmatprep.subr.bf16.mxu0 0
  %1331 = vmatpush1.bf16.msra.mxu0 0
  %1332 = vmatprep.subr.bf16.mxu0 0
  %1333 = vmatpush1.bf16.msra.mxu0 0
  %1334 = vmatprep.subr.bf16.mxu0 0
  %1335 = vmatpush1.bf16.msra.mxu0 0
  %1336 = vmatprep.subr.bf16.mxu0 0
  %1337 = vmatpush1.bf16.msra.mxu0 0
  %1338 = vmatprep.subr.bf16.mxu0 0
  %1339 = vmatpush1.bf16.msra.mxu0 0
  %1340 = vmatprep.subr.bf16.mxu0 0
  %1341 = vmatpush1.bf16.msra.mxu0 0
  %1342 = vmatprep.subr.bf16.mxu0 0
  %1343 = vmatpush1.bf16.msra.mxu0 0
  %1344 = vmatprep.subr.bf16.mxu0 0
  %1345 = vmatpush1.bf16.msra.mxu0 0
  %1346 = vmatprep.subr.bf16.mxu0 0
  %1347 = vmatpush1.bf16.msra.mxu0 0
  %1348 = vmatprep.subr.bf16.mxu0 0
  %1349 = vmatpush1.bf16.msra.mxu0 0
  %1350 = vmatprep.subr.bf16.mxu0 0
  %1351 = vmatpush1.bf16.msra.mxu0 0
  %1352 = vmatprep.subr.bf16.mxu0 0
  %1353 = vmatpush1.bf16.msra.mxu0 0
  %1354 = vmatprep.mubr.bf16.mxu0 0
  %1355 = vmatmul.mubr.bf16.gmra.mrb[0].mxu0 %v1320
  %v1356 = vpop.f32.mrb[0].mxu0
  %v1357 = vadd.f32 0.0, %v1356
  %v1358 = vpop.f32.mrb[0].mxu0
  %v1359 = vpop.f32.mrb[0].mxu0
  %v1360 = vpop.f32.mrb[0].mxu0
  %1361 = vdwg.mxu0
  %v1362 = vadd.f32 %v1316, %v1357
  %v1363 = vxor.u32 %v1313, 2147483648
  %v1364 = vmul.f32 %v1363, 1.442695
  %v1365 = vpow.pop %v1364
  %v1366 = vadd.f32 %v1365, 1.0
  %v1367 = vrcp.pop %v1366
  %v1368 = vmul.f32 1.0, %v1367
  %v1369 = vtanh.pop %v1313
  %v1370 = vmul.f32 %v1368, %v1192
  %1372 = vrot.lane.b32.xlu0 %v1369, 64
  %v1373 = vpop.permute.xlu0 %1372
  %v1375 = vmul.f32 %v1368, %v1373
  %1377 = vrot.lane.b32.xlu0 %v1375, 32
  %v1378 = vpop.permute.xlu0 %1377
  %v1380 = vadd.f32 %v1370, %v1378
  %v1381 = vtanh.pop %v1380
  %1383 = vrot.lane.b32.xlu0 %v1381, 64
  %v1384 = vpop.permute.xlu0 %1383
  %v1386 = vmul.f32 %v1368, %v1384
  %v1387 = vxor.u32 %v1362, 2147483648
  %v1388 = vmul.f32 %v1387, 1.442695
  %v1389 = vpow.pop %v1388
  %v1390 = vadd.f32 %v1389, 1.0
  %v1391 = vrcp.pop %v1390
  %v1392 = vmul.f32 1.0, %v1391
  %v1393 = vtanh.pop %v1362
  %v1394 = vmul.f32 %v1392, %v1216
  %1396 = vrot.lane.b32.xlu0 %v1393, 64
  %v1397 = vpop.permute.xlu0 %1396
  %v1399 = vmul.f32 %v1392, %v1397
  %1401 = vrot.lane.b32.xlu0 %v1399, 32
  %v1402 = vpop.permute.xlu0 %1401
  %v1404 = vadd.f32 %v1394, %v1402
  %v1405 = vtanh.pop %v1404
  %1407 = vrot.lane.b32.xlu0 %v1405, 64
  %v1408 = vpop.permute.xlu0 %1407
  %v1410 = vmul.f32 %v1392, %v1408
  %v1411 = vpack.c.bf16 %v1386, %v1386
  %v1414 = vunpack.c.l.s4 1966171168
  %v1415 = vunpack.c.0.s8 %v1414
  %v1416 = vlaneseq
  %v1417 = vshrl.u32 %v1416, 7
  %v1418 = vsub.s32 %v1415, %v1417
  %v1419 = vrot.slane %v1411, %v1418
  %v1421 = vunpack.c.l.s4 1966171168
  %v1422 = vunpack.c.0.s8 %v1421
  %v1423 = vlaneseq
  %v1424 = vshrl.u32 %v1423, 7
  %v1425 = vsub.s32 %v1422, %v1424
  %v1426 = vrot.slane %v1419, %v1425
  %1427 = vrot.lane.b32.xlu0 %v1426, 32
  %v1428 = vpop.permute.xlu0 %1427
  %s1430 = scalar_lea.vmem %s3, 6
  %1431 = vst.msk [vmem:[%s1430] sm:$0x1] %vm302, %v1428
  %v1432 = vpack.c.bf16 %v1410, %v1410
  %v1435 = vunpack.c.l.s4 1966171168
  %v1436 = vunpack.c.0.s8 %v1435
  %v1437 = vlaneseq
  %v1438 = vshrl.u32 %v1437, 7
  %v1439 = vsub.s32 %v1436, %v1438
  %v1440 = vrot.slane %v1432, %v1439
  %v1442 = vunpack.c.l.s4 1966171168
  %v1443 = vunpack.c.0.s8 %v1442
  %v1444 = vlaneseq
  %v1445 = vshrl.u32 %v1444, 7
  %v1446 = vsub.s32 %v1443, %v1445
  %v1447 = vrot.slane %v1440, %v1446
  %1448 = vrot.lane.b32.xlu0 %v1447, 32
  %v1449 = vpop.permute.xlu0 %1448
  %s1451 = scalar_lea.vmem %s42, 9
  %1452 = vst.msk [vmem:[%s1451] sm:$0x1] %vm302, %v1449
  %s1453 = scalar_lea.vmem %s0, 7
  %v1454 = vld [vmem:[%s1453] sm:$0x1]
  %v1455 = vunpack.c.l.bf16 %v1454
  %1456 = vrot.lane.b32.xlu0 %v1411, 32
  %v1457 = vpop.permute.xlu0 %1456
  %v1459 = vsel %vm120, %v1457, 0
  %1461 = vmatprep.subr.bf16.mxu0 0
  %1462 = vmatpush1.bf16.msra.mxu0 %v108
  %1463 = vmatprep.subr.bf16.mxu0 0
  %1464 = vmatpush1.bf16.msra.mxu0 %v109
  %1465 = vmatprep.subr.bf16.mxu0 0
  %1466 = vmatpush1.bf16.msra.mxu0 0
  %1467 = vmatprep.subr.bf16.mxu0 0
  %1468 = vmatpush1.bf16.msra.mxu0 0
  %1469 = vmatprep.subr.bf16.mxu0 0
  %1470 = vmatpush1.bf16.msra.mxu0 0
  %1471 = vmatprep.subr.bf16.mxu0 0
  %1472 = vmatpush1.bf16.msra.mxu0 0
  %1473 = vmatprep.subr.bf16.mxu0 0
  %1474 = vmatpush1.bf16.msra.mxu0 0
  %1475 = vmatprep.subr.bf16.mxu0 0
  %1476 = vmatpush1.bf16.msra.mxu0 0
  %1477 = vmatprep.subr.bf16.mxu0 0
  %1478 = vmatpush1.bf16.msra.mxu0 0
  %1479 = vmatprep.subr.bf16.mxu0 0
  %1480 = vmatpush1.bf16.msra.mxu0 0
  %1481 = vmatprep.subr.bf16.mxu0 0
  %1482 = vmatpush1.bf16.msra.mxu0 0
  %1483 = vmatprep.subr.bf16.mxu0 0
  %1484 = vmatpush1.bf16.msra.mxu0 0
  %1485 = vmatprep.subr.bf16.mxu0 0
  %1486 = vmatpush1.bf16.msra.mxu0 0
  %1487 = vmatprep.subr.bf16.mxu0 0
  %1488 = vmatpush1.bf16.msra.mxu0 0
  %1489 = vmatprep.subr.bf16.mxu0 0
  %1490 = vmatpush1.bf16.msra.mxu0 0
  %1491 = vmatprep.subr.bf16.mxu0 0
  %1492 = vmatpush1.bf16.msra.mxu0 0
  %1493 = vmatprep.mubr.bf16.mxu0 0
  %1494 = vmatmul.mubr.bf16.gmra.mrb[0].mxu0 %v1459
  %v1495 = vpop.f32.mrb[0].mxu0
  %v1496 = vadd.f32 0.0, %v1495
  %v1497 = vpop.f32.mrb[0].mxu0
  %v1498 = vpop.f32.mrb[0].mxu0
  %v1499 = vpop.f32.mrb[0].mxu0
  %1500 = vdwg.mxu0
  %v1501 = vadd.f32 %v1455, %v1496
  %s1502 = scalar_lea.vmem %s35, 8
  %v1503 = vld [vmem:[%s1502] sm:$0x1]
  %v1504 = vunpack.c.l.bf16 %v1503
  %1505 = vrot.lane.b32.xlu0 %v1432, 32
  %v1506 = vpop.permute.xlu0 %1505
  %v1508 = vsel %vm120, %v1506, 0
  %1510 = vmatprep.subr.bf16.mxu0 0
  %1511 = vmatpush1.bf16.msra.mxu0 %v111
  %1512 = vmatprep.subr.bf16.mxu0 0
  %1513 = vmatpush1.bf16.msra.mxu0 %v112
  %1514 = vmatprep.subr.bf16.mxu0 0
  %1515 = vmatpush1.bf16.msra.mxu0 0
  %1516 = vmatprep.subr.bf16.mxu0 0
  %1517 = vmatpush1.bf16.msra.mxu0 0
  %1518 = vmatprep.subr.bf16.mxu0 0
  %1519 = vmatpush1.bf16.msra.mxu0 0
  %1520 = vmatprep.subr.bf16.mxu0 0
  %1521 = vmatpush1.bf16.msra.mxu0 0
  %1522 = vmatprep.subr.bf16.mxu0 0
  %1523 = vmatpush1.bf16.msra.mxu0 0
  %1524 = vmatprep.subr.bf16.mxu0 0
  %1525 = vmatpush1.bf16.msra.mxu0 0
  %1526 = vmatprep.subr.bf16.mxu0 0
  %1527 = vmatpush1.bf16.msra.mxu0 0
  %1528 = vmatprep.subr.bf16.mxu0 0
  %1529 = vmatpush1.bf16.msra.mxu0 0
  %1530 = vmatprep.subr.bf16.mxu0 0
  %1531 = vmatpush1.bf16.msra.mxu0 0
  %1532 = vmatprep.subr.bf16.mxu0 0
  %1533 = vmatpush1.bf16.msra.mxu0 0
  %1534 = vmatprep.subr.bf16.mxu0 0
  %1535 = vmatpush1.bf16.msra.mxu0 0
  %1536 = vmatprep.subr.bf16.mxu0 0
  %1537 = vmatpush1.bf16.msra.mxu0 0
  %1538 = vmatprep.subr.bf16.mxu0 0
  %1539 = vmatpush1.bf16.msra.mxu0 0
  %1540 = vmatprep.subr.bf16.mxu0 0
  %1541 = vmatpush1.bf16.msra.mxu0 0
  %1542 = vmatprep.mubr.bf16.mxu0 0
  %1543 = vmatmul.mubr.bf16.gmra.mrb[0].mxu0 %v1508
  %v1544 = vpop.f32.mrb[0].mxu0
  %v1545 = vadd.f32 0.0, %v1544
  %v1546 = vpop.f32.mrb[0].mxu0
  %v1547 = vpop.f32.mrb[0].mxu0
  %v1548 = vpop.f32.mrb[0].mxu0
  %1549 = vdwg.mxu0
  %v1550 = vadd.f32 %v1504, %v1545
  %v1551 = vxor.u32 %v1501, 2147483648
  %v1552 = vmul.f32 %v1551, 1.442695
  %v1553 = vpow.pop %v1552
  %v1554 = vadd.f32 %v1553, 1.0
  %v1555 = vrcp.pop %v1554
  %v1556 = vmul.f32 1.0, %v1555
  %v1557 = vtanh.pop %v1501
  %v1558 = vmul.f32 %v1556, %v1380
  %1560 = vrot.lane.b32.xlu0 %v1557, 64
  %v1561 = vpop.permute.xlu0 %1560
  %v1563 = vmul.f32 %v1556, %v1561
  %1565 = vrot.lane.b32.xlu0 %v1563, 32
  %v1566 = vpop.permute.xlu0 %1565
  %v1568 = vadd.f32 %v1558, %v1566
  %v1569 = vtanh.pop %v1568
  %1571 = vrot.lane.b32.xlu0 %v1569, 64
  %v1572 = vpop.permute.xlu0 %1571
  %v1574 = vmul.f32 %v1556, %v1572
  %v1575 = vxor.u32 %v1550, 2147483648
  %v1576 = vmul.f32 %v1575, 1.442695
  %v1577 = vpow.pop %v1576
  %v1578 = vadd.f32 %v1577, 1.0
  %v1579 = vrcp.pop %v1578
  %v1580 = vmul.f32 1.0, %v1579
  %v1581 = vtanh.pop %v1550
  %v1582 = vmul.f32 %v1580, %v1404
  %1584 = vrot.lane.b32.xlu0 %v1581, 64
  %v1585 = vpop.permute.xlu0 %1584
  %v1587 = vmul.f32 %v1580, %v1585
  %1589 = vrot.lane.b32.xlu0 %v1587, 32
  %v1590 = vpop.permute.xlu0 %1589
  %v1592 = vadd.f32 %v1582, %v1590
  %v1593 = vtanh.pop %v1592
  %1595 = vrot.lane.b32.xlu0 %v1593, 64
  %v1596 = vpop.permute.xlu0 %1595
  %v1598 = vmul.f32 %v1580, %v1596
  %v1599 = vpack.c.bf16 %v1574, %v1574
  %v1602 = vunpack.c.l.s4 1966171168
  %v1603 = vunpack.c.0.s8 %v1602
  %v1604 = vlaneseq
  %v1605 = vshrl.u32 %v1604, 7
  %v1606 = vsub.s32 %v1603, %v1605
  %v1607 = vrot.slane %v1599, %v1606
  %v1609 = vunpack.c.l.s4 1966171168
  %v1610 = vunpack.c.0.s8 %v1609
  %v1611 = vlaneseq
  %v1612 = vshrl.u32 %v1611, 7
  %v1613 = vsub.s32 %v1610, %v1612
  %v1614 = vrot.slane %v1607, %v1613
  %1615 = vrot.lane.b32.xlu0 %v1614, 32
  %v1616 = vpop.permute.xlu0 %1615
  %s1618 = scalar_lea.vmem %s3, 7
  %1619 = vst.msk [vmem:[%s1618] sm:$0x1] %vm302, %v1616
  %v1620 = vpack.c.bf16 %v1598, %v1598
  %v1623 = vunpack.c.l.s4 1966171168
  %v1624 = vunpack.c.0.s8 %v1623
  %v1625 = vlaneseq
  %v1626 = vshrl.u32 %v1625, 7
  %v1627 = vsub.s32 %v1624, %v1626
  %v1628 = vrot.slane %v1620, %v1627
  %v1630 = vunpack.c.l.s4 1966171168
  %v1631 = vunpack.c.0.s8 %v1630
  %v1632 = vlaneseq
  %v1633 = vshrl.u32 %v1632, 7
  %v1634 = vsub.s32 %v1631, %v1633
  %v1635 = vrot.slane %v1628, %v1634
  %1636 = vrot.lane.b32.xlu0 %v1635, 32
  %v1637 = vpop.permute.xlu0 %1636
  %s1639 = scalar_lea.vmem %s42, 8
  %1640 = vst.msk [vmem:[%s1639] sm:$0x1] %vm302, %v1637
  %s1641 = scalar_lea.vmem %s0, 8
  %v1642 = vld [vmem:[%s1641] sm:$0x1]
  %v1643 = vunpack.c.l.bf16 %v1642
  %1644 = vrot.lane.b32.xlu0 %v1599, 32
  %v1645 = vpop.permute.xlu0 %1644
  %v1647 = vsel %vm120, %v1645, 0
  %1649 = vmatprep.subr.bf16.mxu0 0
  %1650 = vmatpush1.bf16.msra.mxu0 %v108
  %1651 = vmatprep.subr.bf16.mxu0 0
  %1652 = vmatpush1.bf16.msra.mxu0 %v109
  %1653 = vmatprep.subr.bf16.mxu0 0
  %1654 = vmatpush1.bf16.msra.mxu0 0
  %1655 = vmatprep.subr.bf16.mxu0 0
  %1656 = vmatpush1.bf16.msra.mxu0 0
  %1657 = vmatprep.subr.bf16.mxu0 0
  %1658 = vmatpush1.bf16.msra.mxu0 0
  %1659 = vmatprep.subr.bf16.mxu0 0
  %1660 = vmatpush1.bf16.msra.mxu0 0
  %1661 = vmatprep.subr.bf16.mxu0 0
  %1662 = vmatpush1.bf16.msra.mxu0 0
  %1663 = vmatprep.subr.bf16.mxu0 0
  %1664 = vmatpush1.bf16.msra.mxu0 0
  %1665 = vmatprep.subr.bf16.mxu0 0
  %1666 = vmatpush1.bf16.msra.mxu0 0
  %1667 = vmatprep.subr.bf16.mxu0 0
  %1668 = vmatpush1.bf16.msra.mxu0 0
  %1669 = vmatprep.subr.bf16.mxu0 0
  %1670 = vmatpush1.bf16.msra.mxu0 0
  %1671 = vmatprep.subr.bf16.mxu0 0
  %1672 = vmatpush1.bf16.msra.mxu0 0
  %1673 = vmatprep.subr.bf16.mxu0 0
  %1674 = vmatpush1.bf16.msra.mxu0 0
  %1675 = vmatprep.subr.bf16.mxu0 0
  %1676 = vmatpush1.bf16.msra.mxu0 0
  %1677 = vmatprep.subr.bf16.mxu0 0
  %1678 = vmatpush1.bf16.msra.mxu0 0
  %1679 = vmatprep.subr.bf16.mxu0 0
  %1680 = vmatpush1.bf16.msra.mxu0 0
  %1681 = vmatprep.mubr.bf16.mxu0 0
  %1682 = vmatmul.mubr.bf16.gmra.mrb[0].mxu0 %v1647
  %v1683 = vpop.f32.mrb[0].mxu0
  %v1684 = vadd.f32 0.0, %v1683
  %v1685 = vpop.f32.mrb[0].mxu0
  %v1686 = vpop.f32.mrb[0].mxu0
  %v1687 = vpop.f32.mrb[0].mxu0
  %1688 = vdwg.mxu0
  %v1689 = vadd.f32 %v1643, %v1684
  %s1690 = scalar_lea.vmem %s35, 7
  %v1691 = vld [vmem:[%s1690] sm:$0x1]
  %v1692 = vunpack.c.l.bf16 %v1691
  %1693 = vrot.lane.b32.xlu0 %v1620, 32
  %v1694 = vpop.permute.xlu0 %1693
  %v1696 = vsel %vm120, %v1694, 0
  %1698 = vmatprep.subr.bf16.mxu0 0
  %1699 = vmatpush1.bf16.msra.mxu0 %v111
  %1700 = vmatprep.subr.bf16.mxu0 0
  %1701 = vmatpush1.bf16.msra.mxu0 %v112
  %1702 = vmatprep.subr.bf16.mxu0 0
  %1703 = vmatpush1.bf16.msra.mxu0 0
  %1704 = vmatprep.subr.bf16.mxu0 0
  %1705 = vmatpush1.bf16.msra.mxu0 0
  %1706 = vmatprep.subr.bf16.mxu0 0
  %1707 = vmatpush1.bf16.msra.mxu0 0
  %1708 = vmatprep.subr.bf16.mxu0 0
  %1709 = vmatpush1.bf16.msra.mxu0 0
  %1710 = vmatprep.subr.bf16.mxu0 0
  %1711 = vmatpush1.bf16.msra.mxu0 0
  %1712 = vmatprep.subr.bf16.mxu0 0
  %1713 = vmatpush1.bf16.msra.mxu0 0
  %1714 = vmatprep.subr.bf16.mxu0 0
  %1715 = vmatpush1.bf16.msra.mxu0 0
  %1716 = vmatprep.subr.bf16.mxu0 0
  %1717 = vmatpush1.bf16.msra.mxu0 0
  %1718 = vmatprep.subr.bf16.mxu0 0
  %1719 = vmatpush1.bf16.msra.mxu0 0
  %1720 = vmatprep.subr.bf16.mxu0 0
  %1721 = vmatpush1.bf16.msra.mxu0 0
  %1722 = vmatprep.subr.bf16.mxu0 0
  %1723 = vmatpush1.bf16.msra.mxu0 0
  %1724 = vmatprep.subr.bf16.mxu0 0
  %1725 = vmatpush1.bf16.msra.mxu0 0
  %1726 = vmatprep.subr.bf16.mxu0 0
  %1727 = vmatpush1.bf16.msra.mxu0 0
  %1728 = vmatprep.subr.bf16.mxu0 0
  %1729 = vmatpush1.bf16.msra.mxu0 0
  %1730 = vmatprep.mubr.bf16.mxu0 0
  %1731 = vmatmul.mubr.bf16.gmra.mrb[0].mxu0 %v1696
  %v1732 = vpop.f32.mrb[0].mxu0
  %v1733 = vadd.f32 0.0, %v1732
  %v1734 = vpop.f32.mrb[0].mxu0
  %v1735 = vpop.f32.mrb[0].mxu0
  %v1736 = vpop.f32.mrb[0].mxu0
  %1737 = vdwg.mxu0
  %v1738 = vadd.f32 %v1692, %v1733
  %v1739 = vxor.u32 %v1689, 2147483648
  %v1740 = vmul.f32 %v1739, 1.442695
  %v1741 = vpow.pop %v1740
  %v1742 = vadd.f32 %v1741, 1.0
  %v1743 = vrcp.pop %v1742
  %v1744 = vmul.f32 1.0, %v1743
  %v1745 = vtanh.pop %v1689
  %v1746 = vmul.f32 %v1744, %v1568
  %1748 = vrot.lane.b32.xlu0 %v1745, 64
  %v1749 = vpop.permute.xlu0 %1748
  %v1751 = vmul.f32 %v1744, %v1749
  %1753 = vrot.lane.b32.xlu0 %v1751, 32
  %v1754 = vpop.permute.xlu0 %1753
  %v1756 = vadd.f32 %v1746, %v1754
  %v1757 = vtanh.pop %v1756
  %1759 = vrot.lane.b32.xlu0 %v1757, 64
  %v1760 = vpop.permute.xlu0 %1759
  %v1762 = vmul.f32 %v1744, %v1760
  %v1763 = vxor.u32 %v1738, 2147483648
  %v1764 = vmul.f32 %v1763, 1.442695
  %v1765 = vpow.pop %v1764
  %v1766 = vadd.f32 %v1765, 1.0
  %v1767 = vrcp.pop %v1766
  %v1768 = vmul.f32 1.0, %v1767
  %v1769 = vtanh.pop %v1738
  %v1770 = vmul.f32 %v1768, %v1592
  %1772 = vrot.lane.b32.xlu0 %v1769, 64
  %v1773 = vpop.permute.xlu0 %1772
  %v1775 = vmul.f32 %v1768, %v1773
  %1777 = vrot.lane.b32.xlu0 %v1775, 32
  %v1778 = vpop.permute.xlu0 %1777
  %v1780 = vadd.f32 %v1770, %v1778
  %v1781 = vtanh.pop %v1780
  %1783 = vrot.lane.b32.xlu0 %v1781, 64
  %v1784 = vpop.permute.xlu0 %1783
  %v1786 = vmul.f32 %v1768, %v1784
  %v1787 = vpack.c.bf16 %v1762, %v1762
  %v1790 = vunpack.c.l.s4 1966171168
  %v1791 = vunpack.c.0.s8 %v1790
  %v1792 = vlaneseq
  %v1793 = vshrl.u32 %v1792, 7
  %v1794 = vsub.s32 %v1791, %v1793
  %v1795 = vrot.slane %v1787, %v1794
  %v1797 = vunpack.c.l.s4 1966171168
  %v1798 = vunpack.c.0.s8 %v1797
  %v1799 = vlaneseq
  %v1800 = vshrl.u32 %v1799, 7
  %v1801 = vsub.s32 %v1798, %v1800
  %v1802 = vrot.slane %v1795, %v1801
  %1803 = vrot.lane.b32.xlu0 %v1802, 32
  %v1804 = vpop.permute.xlu0 %1803
  %s1806 = scalar_lea.vmem %s3, 8
  %1807 = vst.msk [vmem:[%s1806] sm:$0x1] %vm302, %v1804
  %v1808 = vpack.c.bf16 %v1786, %v1786
  %v1811 = vunpack.c.l.s4 1966171168
  %v1812 = vunpack.c.0.s8 %v1811
  %v1813 = vlaneseq
  %v1814 = vshrl.u32 %v1813, 7
  %v1815 = vsub.s32 %v1812, %v1814
  %v1816 = vrot.slane %v1808, %v1815
  %v1818 = vunpack.c.l.s4 1966171168
  %v1819 = vunpack.c.0.s8 %v1818
  %v1820 = vlaneseq
  %v1821 = vshrl.u32 %v1820, 7
  %v1822 = vsub.s32 %v1819, %v1821
  %v1823 = vrot.slane %v1816, %v1822
  %1824 = vrot.lane.b32.xlu0 %v1823, 32
  %v1825 = vpop.permute.xlu0 %1824
  %s1827 = scalar_lea.vmem %s42, 7
  %1828 = vst.msk [vmem:[%s1827] sm:$0x1] %vm302, %v1825
  %s1829 = scalar_lea.vmem %s0, 9
  %v1830 = vld [vmem:[%s1829] sm:$0x1]
  %v1831 = vunpack.c.l.bf16 %v1830
  %1832 = vrot.lane.b32.xlu0 %v1787, 32
  %v1833 = vpop.permute.xlu0 %1832
  %v1835 = vsel %vm120, %v1833, 0
  %1837 = vmatprep.subr.bf16.mxu0 0
  %1838 = vmatpush1.bf16.msra.mxu0 %v108
  %1839 = vmatprep.subr.bf16.mxu0 0
  %1840 = vmatpush1.bf16.msra.mxu0 %v109
  %1841 = vmatprep.subr.bf16.mxu0 0
  %1842 = vmatpush1.bf16.msra.mxu0 0
  %1843 = vmatprep.subr.bf16.mxu0 0
  %1844 = vmatpush1.bf16.msra.mxu0 0
  %1845 = vmatprep.subr.bf16.mxu0 0
  %1846 = vmatpush1.bf16.msra.mxu0 0
  %1847 = vmatprep.subr.bf16.mxu0 0
  %1848 = vmatpush1.bf16.msra.mxu0 0
  %1849 = vmatprep.subr.bf16.mxu0 0
  %1850 = vmatpush1.bf16.msra.mxu0 0
  %1851 = vmatprep.subr.bf16.mxu0 0
  %1852 = vmatpush1.bf16.msra.mxu0 0
  %1853 = vmatprep.subr.bf16.mxu0 0
  %1854 = vmatpush1.bf16.msra.mxu0 0
  %1855 = vmatprep.subr.bf16.mxu0 0
  %1856 = vmatpush1.bf16.msra.mxu0 0
  %1857 = vmatprep.subr.bf16.mxu0 0
  %1858 = vmatpush1.bf16.msra.mxu0 0
  %1859 = vmatprep.subr.bf16.mxu0 0
  %1860 = vmatpush1.bf16.msra.mxu0 0
  %1861 = vmatprep.subr.bf16.mxu0 0
  %1862 = vmatpush1.bf16.msra.mxu0 0
  %1863 = vmatprep.subr.bf16.mxu0 0
  %1864 = vmatpush1.bf16.msra.mxu0 0
  %1865 = vmatprep.subr.bf16.mxu0 0
  %1866 = vmatpush1.bf16.msra.mxu0 0
  %1867 = vmatprep.subr.bf16.mxu0 0
  %1868 = vmatpush1.bf16.msra.mxu0 0
  %1869 = vmatprep.mubr.bf16.mxu0 0
  %1870 = vmatmul.mubr.bf16.gmra.mrb[0].mxu0 %v1835
  %v1871 = vpop.f32.mrb[0].mxu0
  %v1872 = vadd.f32 0.0, %v1871
  %v1873 = vpop.f32.mrb[0].mxu0
  %v1874 = vpop.f32.mrb[0].mxu0
  %v1875 = vpop.f32.mrb[0].mxu0
  %1876 = vdwg.mxu0
  %v1877 = vadd.f32 %v1831, %v1872
  %s1878 = scalar_lea.vmem %s35, 6
  %v1879 = vld [vmem:[%s1878] sm:$0x1]
  %v1880 = vunpack.c.l.bf16 %v1879
  %1881 = vrot.lane.b32.xlu0 %v1808, 32
  %v1882 = vpop.permute.xlu0 %1881
  %v1884 = vsel %vm120, %v1882, 0
  %1886 = vmatprep.subr.bf16.mxu0 0
  %1887 = vmatpush1.bf16.msra.mxu0 %v111
  %1888 = vmatprep.subr.bf16.mxu0 0
  %1889 = vmatpush1.bf16.msra.mxu0 %v112
  %1890 = vmatprep.subr.bf16.mxu0 0
  %1891 = vmatpush1.bf16.msra.mxu0 0
  %1892 = vmatprep.subr.bf16.mxu0 0
  %1893 = vmatpush1.bf16.msra.mxu0 0
  %1894 = vmatprep.subr.bf16.mxu0 0
  %1895 = vmatpush1.bf16.msra.mxu0 0
  %1896 = vmatprep.subr.bf16.mxu0 0
  %1897 = vmatpush1.bf16.msra.mxu0 0
  %1898 = vmatprep.subr.bf16.mxu0 0
  %1899 = vmatpush1.bf16.msra.mxu0 0
  %1900 = vmatprep.subr.bf16.mxu0 0
  %1901 = vmatpush1.bf16.msra.mxu0 0
  %1902 = vmatprep.subr.bf16.mxu0 0
  %1903 = vmatpush1.bf16.msra.mxu0 0
  %1904 = vmatprep.subr.bf16.mxu0 0
  %1905 = vmatpush1.bf16.msra.mxu0 0
  %1906 = vmatprep.subr.bf16.mxu0 0
  %1907 = vmatpush1.bf16.msra.mxu0 0
  %1908 = vmatprep.subr.bf16.mxu0 0
  %1909 = vmatpush1.bf16.msra.mxu0 0
  %1910 = vmatprep.subr.bf16.mxu0 0
  %1911 = vmatpush1.bf16.msra.mxu0 0
  %1912 = vmatprep.subr.bf16.mxu0 0
  %1913 = vmatpush1.bf16.msra.mxu0 0
  %1914 = vmatprep.subr.bf16.mxu0 0
  %1915 = vmatpush1.bf16.msra.mxu0 0
  %1916 = vmatprep.subr.bf16.mxu0 0
  %1917 = vmatpush1.bf16.msra.mxu0 0
  %1918 = vmatprep.mubr.bf16.mxu0 0
  %1919 = vmatmul.mubr.bf16.gmra.mrb[0].mxu0 %v1884
  %v1920 = vpop.f32.mrb[0].mxu0
  %v1921 = vadd.f32 0.0, %v1920
  %v1922 = vpop.f32.mrb[0].mxu0
  %v1923 = vpop.f32.mrb[0].mxu0
  %v1924 = vpop.f32.mrb[0].mxu0
  %1925 = vdwg.mxu0
  %v1926 = vadd.f32 %v1880, %v1921
  %v1927 = vxor.u32 %v1877, 2147483648
  %v1928 = vmul.f32 %v1927, 1.442695
  %v1929 = vpow.pop %v1928
  %v1930 = vadd.f32 %v1929, 1.0
  %v1931 = vrcp.pop %v1930
  %v1932 = vmul.f32 1.0, %v1931
  %v1933 = vtanh.pop %v1877
  %v1934 = vmul.f32 %v1932, %v1756
  %1936 = vrot.lane.b32.xlu0 %v1933, 64
  %v1937 = vpop.permute.xlu0 %1936
  %v1939 = vmul.f32 %v1932, %v1937
  %1941 = vrot.lane.b32.xlu0 %v1939, 32
  %v1942 = vpop.permute.xlu0 %1941
  %v1944 = vadd.f32 %v1934, %v1942
  %v1945 = vtanh.pop %v1944
  %1947 = vrot.lane.b32.xlu0 %v1945, 64
  %v1948 = vpop.permute.xlu0 %1947
  %v1950 = vmul.f32 %v1932, %v1948
  %v1951 = vxor.u32 %v1926, 2147483648
  %v1952 = vmul.f32 %v1951, 1.442695
  %v1953 = vpow.pop %v1952
  %v1954 = vadd.f32 %v1953, 1.0
  %v1955 = vrcp.pop %v1954
  %v1956 = vmul.f32 1.0, %v1955
  %v1957 = vtanh.pop %v1926
  %v1958 = vmul.f32 %v1956, %v1780
  %1960 = vrot.lane.b32.xlu0 %v1957, 64
  %v1961 = vpop.permute.xlu0 %1960
  %v1963 = vmul.f32 %v1956, %v1961
  %1965 = vrot.lane.b32.xlu0 %v1963, 32
  %v1966 = vpop.permute.xlu0 %1965
  %v1968 = vadd.f32 %v1958, %v1966
  %v1969 = vtanh.pop %v1968
  %1971 = vrot.lane.b32.xlu0 %v1969, 64
  %v1972 = vpop.permute.xlu0 %1971
  %v1974 = vmul.f32 %v1956, %v1972
  %v1975 = vpack.c.bf16 %v1950, %v1950
  %v1978 = vunpack.c.l.s4 1966171168
  %v1979 = vunpack.c.0.s8 %v1978
  %v1980 = vlaneseq
  %v1981 = vshrl.u32 %v1980, 7
  %v1982 = vsub.s32 %v1979, %v1981
  %v1983 = vrot.slane %v1975, %v1982
  %v1985 = vunpack.c.l.s4 1966171168
  %v1986 = vunpack.c.0.s8 %v1985
  %v1987 = vlaneseq
  %v1988 = vshrl.u32 %v1987, 7
  %v1989 = vsub.s32 %v1986, %v1988
  %v1990 = vrot.slane %v1983, %v1989
  %1991 = vrot.lane.b32.xlu0 %v1990, 32
  %v1992 = vpop.permute.xlu0 %1991
  %s1994 = scalar_lea.vmem %s3, 9
  %1995 = vst.msk [vmem:[%s1994] sm:$0x1] %vm302, %v1992
  %v1996 = vpack.c.bf16 %v1974, %v1974
  %v1999 = vunpack.c.l.s4 1966171168
  %v2000 = vunpack.c.0.s8 %v1999
  %v2001 = vlaneseq
  %v2002 = vshrl.u32 %v2001, 7
  %v2003 = vsub.s32 %v2000, %v2002
  %v2004 = vrot.slane %v1996, %v2003
  %v2006 = vunpack.c.l.s4 1966171168
  %v2007 = vunpack.c.0.s8 %v2006
  %v2008 = vlaneseq
  %v2009 = vshrl.u32 %v2008, 7
  %v2010 = vsub.s32 %v2007, %v2009
  %v2011 = vrot.slane %v2004, %v2010
  %2012 = vrot.lane.b32.xlu0 %v2011, 32
  %v2013 = vpop.permute.xlu0 %2012
  %s2015 = scalar_lea.vmem %s42, 6
  %2016 = vst.msk [vmem:[%s2015] sm:$0x1] %vm302, %v2013
  %s2017 = scalar_lea.vmem %s0, 10
  %v2018 = vld [vmem:[%s2017] sm:$0x1]
  %v2019 = vunpack.c.l.bf16 %v2018
  %2020 = vrot.lane.b32.xlu0 %v1975, 32
  %v2021 = vpop.permute.xlu0 %2020
  %v2023 = vsel %vm120, %v2021, 0
  %2025 = vmatprep.subr.bf16.mxu0 0
  %2026 = vmatpush1.bf16.msra.mxu0 %v108
  %2027 = vmatprep.subr.bf16.mxu0 0
  %2028 = vmatpush1.bf16.msra.mxu0 %v109
  %2029 = vmatprep.subr.bf16.mxu0 0
  %2030 = vmatpush1.bf16.msra.mxu0 0
  %2031 = vmatprep.subr.bf16.mxu0 0
  %2032 = vmatpush1.bf16.msra.mxu0 0
  %2033 = vmatprep.subr.bf16.mxu0 0
  %2034 = vmatpush1.bf16.msra.mxu0 0
  %2035 = vmatprep.subr.bf16.mxu0 0
  %2036 = vmatpush1.bf16.msra.mxu0 0
  %2037 = vmatprep.subr.bf16.mxu0 0
  %2038 = vmatpush1.bf16.msra.mxu0 0
  %2039 = vmatprep.subr.bf16.mxu0 0
  %2040 = vmatpush1.bf16.msra.mxu0 0
  %2041 = vmatprep.subr.bf16.mxu0 0
  %2042 = vmatpush1.bf16.msra.mxu0 0
  %2043 = vmatprep.subr.bf16.mxu0 0
  %2044 = vmatpush1.bf16.msra.mxu0 0
  %2045 = vmatprep.subr.bf16.mxu0 0
  %2046 = vmatpush1.bf16.msra.mxu0 0
  %2047 = vmatprep.subr.bf16.mxu0 0
  %2048 = vmatpush1.bf16.msra.mxu0 0
  %2049 = vmatprep.subr.bf16.mxu0 0
  %2050 = vmatpush1.bf16.msra.mxu0 0
  %2051 = vmatprep.subr.bf16.mxu0 0
  %2052 = vmatpush1.bf16.msra.mxu0 0
  %2053 = vmatprep.subr.bf16.mxu0 0
  %2054 = vmatpush1.bf16.msra.mxu0 0
  %2055 = vmatprep.subr.bf16.mxu0 0
  %2056 = vmatpush1.bf16.msra.mxu0 0
  %2057 = vmatprep.mubr.bf16.mxu0 0
  %2058 = vmatmul.mubr.bf16.gmra.mrb[0].mxu0 %v2023
  %v2059 = vpop.f32.mrb[0].mxu0
  %v2060 = vadd.f32 0.0, %v2059
  %v2061 = vpop.f32.mrb[0].mxu0
  %v2062 = vpop.f32.mrb[0].mxu0
  %v2063 = vpop.f32.mrb[0].mxu0
  %2064 = vdwg.mxu0
  %v2065 = vadd.f32 %v2019, %v2060
  %s2066 = scalar_lea.vmem %s35, 5
  %v2067 = vld [vmem:[%s2066] sm:$0x1]
  %v2068 = vunpack.c.l.bf16 %v2067
  %2069 = vrot.lane.b32.xlu0 %v1996, 32
  %v2070 = vpop.permute.xlu0 %2069
  %v2072 = vsel %vm120, %v2070, 0
  %2074 = vmatprep.subr.bf16.mxu0 0
  %2075 = vmatpush1.bf16.msra.mxu0 %v111
  %2076 = vmatprep.subr.bf16.mxu0 0
  %2077 = vmatpush1.bf16.msra.mxu0 %v112
  %2078 = vmatprep.subr.bf16.mxu0 0
  %2079 = vmatpush1.bf16.msra.mxu0 0
  %2080 = vmatprep.subr.bf16.mxu0 0
  %2081 = vmatpush1.bf16.msra.mxu0 0
  %2082 = vmatprep.subr.bf16.mxu0 0
  %2083 = vmatpush1.bf16.msra.mxu0 0
  %2084 = vmatprep.subr.bf16.mxu0 0
  %2085 = vmatpush1.bf16.msra.mxu0 0
  %2086 = vmatprep.subr.bf16.mxu0 0
  %2087 = vmatpush1.bf16.msra.mxu0 0
  %2088 = vmatprep.subr.bf16.mxu0 0
  %2089 = vmatpush1.bf16.msra.mxu0 0
  %2090 = vmatprep.subr.bf16.mxu0 0
  %2091 = vmatpush1.bf16.msra.mxu0 0
  %2092 = vmatprep.subr.bf16.mxu0 0
  %2093 = vmatpush1.bf16.msra.mxu0 0
  %2094 = vmatprep.subr.bf16.mxu0 0
  %2095 = vmatpush1.bf16.msra.mxu0 0
  %2096 = vmatprep.subr.bf16.mxu0 0
  %2097 = vmatpush1.bf16.msra.mxu0 0
  %2098 = vmatprep.subr.bf16.mxu0 0
  %2099 = vmatpush1.bf16.msra.mxu0 0
  %2100 = vmatprep.subr.bf16.mxu0 0
  %2101 = vmatpush1.bf16.msra.mxu0 0
  %2102 = vmatprep.subr.bf16.mxu0 0
  %2103 = vmatpush1.bf16.msra.mxu0 0
  %2104 = vmatprep.subr.bf16.mxu0 0
  %2105 = vmatpush1.bf16.msra.mxu0 0
  %2106 = vmatprep.mubr.bf16.mxu0 0
  %2107 = vmatmul.mubr.bf16.gmra.mrb[0].mxu0 %v2072
  %v2108 = vpop.f32.mrb[0].mxu0
  %v2109 = vadd.f32 0.0, %v2108
  %v2110 = vpop.f32.mrb[0].mxu0
  %v2111 = vpop.f32.mrb[0].mxu0
  %v2112 = vpop.f32.mrb[0].mxu0
  %2113 = vdwg.mxu0
  %v2114 = vadd.f32 %v2068, %v2109
  %v2115 = vxor.u32 %v2065, 2147483648
  %v2116 = vmul.f32 %v2115, 1.442695
  %v2117 = vpow.pop %v2116
  %v2118 = vadd.f32 %v2117, 1.0
  %v2119 = vrcp.pop %v2118
  %v2120 = vmul.f32 1.0, %v2119
  %v2121 = vtanh.pop %v2065
  %v2122 = vmul.f32 %v2120, %v1944
  %2124 = vrot.lane.b32.xlu0 %v2121, 64
  %v2125 = vpop.permute.xlu0 %2124
  %v2127 = vmul.f32 %v2120, %v2125
  %2129 = vrot.lane.b32.xlu0 %v2127, 32
  %v2130 = vpop.permute.xlu0 %2129
  %v2132 = vadd.f32 %v2122, %v2130
  %v2133 = vtanh.pop %v2132
  %2135 = vrot.lane.b32.xlu0 %v2133, 64
  %v2136 = vpop.permute.xlu0 %2135
  %v2138 = vmul.f32 %v2120, %v2136
  %v2139 = vxor.u32 %v2114, 2147483648
  %v2140 = vmul.f32 %v2139, 1.442695
  %v2141 = vpow.pop %v2140
  %v2142 = vadd.f32 %v2141, 1.0
  %v2143 = vrcp.pop %v2142
  %v2144 = vmul.f32 1.0, %v2143
  %v2145 = vtanh.pop %v2114
  %v2146 = vmul.f32 %v2144, %v1968
  %2148 = vrot.lane.b32.xlu0 %v2145, 64
  %v2149 = vpop.permute.xlu0 %2148
  %v2151 = vmul.f32 %v2144, %v2149
  %2153 = vrot.lane.b32.xlu0 %v2151, 32
  %v2154 = vpop.permute.xlu0 %2153
  %v2156 = vadd.f32 %v2146, %v2154
  %v2157 = vtanh.pop %v2156
  %2159 = vrot.lane.b32.xlu0 %v2157, 64
  %v2160 = vpop.permute.xlu0 %2159
  %v2162 = vmul.f32 %v2144, %v2160
  %v2163 = vpack.c.bf16 %v2138, %v2138
  %v2166 = vunpack.c.l.s4 1966171168
  %v2167 = vunpack.c.0.s8 %v2166
  %v2168 = vlaneseq
  %v2169 = vshrl.u32 %v2168, 7
  %v2170 = vsub.s32 %v2167, %v2169
  %v2171 = vrot.slane %v2163, %v2170
  %v2173 = vunpack.c.l.s4 1966171168
  %v2174 = vunpack.c.0.s8 %v2173
  %v2175 = vlaneseq
  %v2176 = vshrl.u32 %v2175, 7
  %v2177 = vsub.s32 %v2174, %v2176
  %v2178 = vrot.slane %v2171, %v2177
  %2179 = vrot.lane.b32.xlu0 %v2178, 32
  %v2180 = vpop.permute.xlu0 %2179
  %s2182 = scalar_lea.vmem %s3, 10
  %2183 = vst.msk [vmem:[%s2182] sm:$0x1] %vm302, %v2180
  %v2184 = vpack.c.bf16 %v2162, %v2162
  %v2187 = vunpack.c.l.s4 1966171168
  %v2188 = vunpack.c.0.s8 %v2187
  %v2189 = vlaneseq
  %v2190 = vshrl.u32 %v2189, 7
  %v2191 = vsub.s32 %v2188, %v2190
  %v2192 = vrot.slane %v2184, %v2191
  %v2194 = vunpack.c.l.s4 1966171168
  %v2195 = vunpack.c.0.s8 %v2194
  %v2196 = vlaneseq
  %v2197 = vshrl.u32 %v2196, 7
  %v2198 = vsub.s32 %v2195, %v2197
  %v2199 = vrot.slane %v2192, %v2198
  %2200 = vrot.lane.b32.xlu0 %v2199, 32
  %v2201 = vpop.permute.xlu0 %2200
  %s2203 = scalar_lea.vmem %s42, 5
  %2204 = vst.msk [vmem:[%s2203] sm:$0x1] %vm302, %v2201
  %s2205 = scalar_lea.vmem %s0, 11
  %v2206 = vld [vmem:[%s2205] sm:$0x1]
  %v2207 = vunpack.c.l.bf16 %v2206
  %2208 = vrot.lane.b32.xlu0 %v2163, 32
  %v2209 = vpop.permute.xlu0 %2208
  %v2211 = vsel %vm120, %v2209, 0
  %2213 = vmatprep.subr.bf16.mxu0 0
  %2214 = vmatpush1.bf16.msra.mxu0 %v108
  %2215 = vmatprep.subr.bf16.mxu0 0
  %2216 = vmatpush1.bf16.msra.mxu0 %v109
  %2217 = vmatprep.subr.bf16.mxu0 0
  %2218 = vmatpush1.bf16.msra.mxu0 0
  %2219 = vmatprep.subr.bf16.mxu0 0
  %2220 = vmatpush1.bf16.msra.mxu0 0
  %2221 = vmatprep.subr.bf16.mxu0 0
  %2222 = vmatpush1.bf16.msra.mxu0 0
  %2223 = vmatprep.subr.bf16.mxu0 0
  %2224 = vmatpush1.bf16.msra.mxu0 0
  %2225 = vmatprep.subr.bf16.mxu0 0
  %2226 = vmatpush1.bf16.msra.mxu0 0
  %2227 = vmatprep.subr.bf16.mxu0 0
  %2228 = vmatpush1.bf16.msra.mxu0 0
  %2229 = vmatprep.subr.bf16.mxu0 0
  %2230 = vmatpush1.bf16.msra.mxu0 0
  %2231 = vmatprep.subr.bf16.mxu0 0
  %2232 = vmatpush1.bf16.msra.mxu0 0
  %2233 = vmatprep.subr.bf16.mxu0 0
  %2234 = vmatpush1.bf16.msra.mxu0 0
  %2235 = vmatprep.subr.bf16.mxu0 0
  %2236 = vmatpush1.bf16.msra.mxu0 0
  %2237 = vmatprep.subr.bf16.mxu0 0
  %2238 = vmatpush1.bf16.msra.mxu0 0
  %2239 = vmatprep.subr.bf16.mxu0 0
  %2240 = vmatpush1.bf16.msra.mxu0 0
  %2241 = vmatprep.subr.bf16.mxu0 0
  %2242 = vmatpush1.bf16.msra.mxu0 0
  %2243 = vmatprep.subr.bf16.mxu0 0
  %2244 = vmatpush1.bf16.msra.mxu0 0
  %2245 = vmatprep.mubr.bf16.mxu0 0
  %2246 = vmatmul.mubr.bf16.gmra.mrb[0].mxu0 %v2211
  %v2247 = vpop.f32.mrb[0].mxu0
  %v2248 = vadd.f32 0.0, %v2247
  %v2249 = vpop.f32.mrb[0].mxu0
  %v2250 = vpop.f32.mrb[0].mxu0
  %v2251 = vpop.f32.mrb[0].mxu0
  %2252 = vdwg.mxu0
  %v2253 = vadd.f32 %v2207, %v2248
  %s2254 = scalar_lea.vmem %s35, 4
  %v2255 = vld [vmem:[%s2254] sm:$0x1]
  %v2256 = vunpack.c.l.bf16 %v2255
  %2257 = vrot.lane.b32.xlu0 %v2184, 32
  %v2258 = vpop.permute.xlu0 %2257
  %v2260 = vsel %vm120, %v2258, 0
  %2262 = vmatprep.subr.bf16.mxu0 0
  %2263 = vmatpush1.bf16.msra.mxu0 %v111
  %2264 = vmatprep.subr.bf16.mxu0 0
  %2265 = vmatpush1.bf16.msra.mxu0 %v112
  %2266 = vmatprep.subr.bf16.mxu0 0
  %2267 = vmatpush1.bf16.msra.mxu0 0
  %2268 = vmatprep.subr.bf16.mxu0 0
  %2269 = vmatpush1.bf16.msra.mxu0 0
  %2270 = vmatprep.subr.bf16.mxu0 0
  %2271 = vmatpush1.bf16.msra.mxu0 0
  %2272 = vmatprep.subr.bf16.mxu0 0
  %2273 = vmatpush1.bf16.msra.mxu0 0
  %2274 = vmatprep.subr.bf16.mxu0 0
  %2275 = vmatpush1.bf16.msra.mxu0 0
  %2276 = vmatprep.subr.bf16.mxu0 0
  %2277 = vmatpush1.bf16.msra.mxu0 0
  %2278 = vmatprep.subr.bf16.mxu0 0
  %2279 = vmatpush1.bf16.msra.mxu0 0
  %2280 = vmatprep.subr.bf16.mxu0 0
  %2281 = vmatpush1.bf16.msra.mxu0 0
  %2282 = vmatprep.subr.bf16.mxu0 0
  %2283 = vmatpush1.bf16.msra.mxu0 0
  %2284 = vmatprep.subr.bf16.mxu0 0
  %2285 = vmatpush1.bf16.msra.mxu0 0
  %2286 = vmatprep.subr.bf16.mxu0 0
  %2287 = vmatpush1.bf16.msra.mxu0 0
  %2288 = vmatprep.subr.bf16.mxu0 0
  %2289 = vmatpush1.bf16.msra.mxu0 0
  %2290 = vmatprep.subr.bf16.mxu0 0
  %2291 = vmatpush1.bf16.msra.mxu0 0
  %2292 = vmatprep.subr.bf16.mxu0 0
  %2293 = vmatpush1.bf16.msra.mxu0 0
  %2294 = vmatprep.mubr.bf16.mxu0 0
  %2295 = vmatmul.mubr.bf16.gmra.mrb[0].mxu0 %v2260
  %v2296 = vpop.f32.mrb[0].mxu0
  %v2297 = vadd.f32 0.0, %v2296
  %v2298 = vpop.f32.mrb[0].mxu0
  %v2299 = vpop.f32.mrb[0].mxu0
  %v2300 = vpop.f32.mrb[0].mxu0
  %2301 = vdwg.mxu0
  %v2302 = vadd.f32 %v2256, %v2297
  %v2303 = vxor.u32 %v2253, 2147483648
  %v2304 = vmul.f32 %v2303, 1.442695
  %v2305 = vpow.pop %v2304
  %v2306 = vadd.f32 %v2305, 1.0
  %v2307 = vrcp.pop %v2306
  %v2308 = vmul.f32 1.0, %v2307
  %v2309 = vtanh.pop %v2253
  %v2310 = vmul.f32 %v2308, %v2132
  %2312 = vrot.lane.b32.xlu0 %v2309, 64
  %v2313 = vpop.permute.xlu0 %2312
  %v2315 = vmul.f32 %v2308, %v2313
  %2317 = vrot.lane.b32.xlu0 %v2315, 32
  %v2318 = vpop.permute.xlu0 %2317
  %v2320 = vadd.f32 %v2310, %v2318
  %v2321 = vtanh.pop %v2320
  %2323 = vrot.lane.b32.xlu0 %v2321, 64
  %v2324 = vpop.permute.xlu0 %2323
  %v2326 = vmul.f32 %v2308, %v2324
  %v2327 = vxor.u32 %v2302, 2147483648
  %v2328 = vmul.f32 %v2327, 1.442695
  %v2329 = vpow.pop %v2328
  %v2330 = vadd.f32 %v2329, 1.0
  %v2331 = vrcp.pop %v2330
  %v2332 = vmul.f32 1.0, %v2331
  %v2333 = vtanh.pop %v2302
  %v2334 = vmul.f32 %v2332, %v2156
  %2336 = vrot.lane.b32.xlu0 %v2333, 64
  %v2337 = vpop.permute.xlu0 %2336
  %v2339 = vmul.f32 %v2332, %v2337
  %2341 = vrot.lane.b32.xlu0 %v2339, 32
  %v2342 = vpop.permute.xlu0 %2341
  %v2344 = vadd.f32 %v2334, %v2342
  %v2345 = vtanh.pop %v2344
  %2347 = vrot.lane.b32.xlu0 %v2345, 64
  %v2348 = vpop.permute.xlu0 %2347
  %v2350 = vmul.f32 %v2332, %v2348
  %v2351 = vpack.c.bf16 %v2326, %v2326
  %v2354 = vunpack.c.l.s4 1966171168
  %v2355 = vunpack.c.0.s8 %v2354
  %v2356 = vlaneseq
  %v2357 = vshrl.u32 %v2356, 7
  %v2358 = vsub.s32 %v2355, %v2357
  %v2359 = vrot.slane %v2351, %v2358
  %v2361 = vunpack.c.l.s4 1966171168
  %v2362 = vunpack.c.0.s8 %v2361
  %v2363 = vlaneseq
  %v2364 = vshrl.u32 %v2363, 7
  %v2365 = vsub.s32 %v2362, %v2364
  %v2366 = vrot.slane %v2359, %v2365
  %2367 = vrot.lane.b32.xlu0 %v2366, 32
  %v2368 = vpop.permute.xlu0 %2367
  %s2370 = scalar_lea.vmem %s3, 11
  %2371 = vst.msk [vmem:[%s2370] sm:$0x1] %vm302, %v2368
  %v2372 = vpack.c.bf16 %v2350, %v2350
  %v2375 = vunpack.c.l.s4 1966171168
  %v2376 = vunpack.c.0.s8 %v2375
  %v2377 = vlaneseq
  %v2378 = vshrl.u32 %v2377, 7
  %v2379 = vsub.s32 %v2376, %v2378
  %v2380 = vrot.slane %v2372, %v2379
  %v2382 = vunpack.c.l.s4 1966171168
  %v2383 = vunpack.c.0.s8 %v2382
  %v2384 = vlaneseq
  %v2385 = vshrl.u32 %v2384, 7
  %v2386 = vsub.s32 %v2383, %v2385
  %v2387 = vrot.slane %v2380, %v2386
  %2388 = vrot.lane.b32.xlu0 %v2387, 32
  %v2389 = vpop.permute.xlu0 %2388
  %s2391 = scalar_lea.vmem %s42, 4
  %2392 = vst.msk [vmem:[%s2391] sm:$0x1] %vm302, %v2389
  %s2393 = scalar_lea.vmem %s0, 12
  %v2394 = vld [vmem:[%s2393] sm:$0x1]
  %v2395 = vunpack.c.l.bf16 %v2394
  %2396 = vrot.lane.b32.xlu0 %v2351, 32
  %v2397 = vpop.permute.xlu0 %2396
  %v2399 = vsel %vm120, %v2397, 0
  %2401 = vmatprep.subr.bf16.mxu0 0
  %2402 = vmatpush1.bf16.msra.mxu0 %v108
  %2403 = vmatprep.subr.bf16.mxu0 0
  %2404 = vmatpush1.bf16.msra.mxu0 %v109
  %2405 = vmatprep.subr.bf16.mxu0 0
  %2406 = vmatpush1.bf16.msra.mxu0 0
  %2407 = vmatprep.subr.bf16.mxu0 0
  %2408 = vmatpush1.bf16.msra.mxu0 0
  %2409 = vmatprep.subr.bf16.mxu0 0
  %2410 = vmatpush1.bf16.msra.mxu0 0
  %2411 = vmatprep.subr.bf16.mxu0 0
  %2412 = vmatpush1.bf16.msra.mxu0 0
  %2413 = vmatprep.subr.bf16.mxu0 0
  %2414 = vmatpush1.bf16.msra.mxu0 0
  %2415 = vmatprep.subr.bf16.mxu0 0
  %2416 = vmatpush1.bf16.msra.mxu0 0
  %2417 = vmatprep.subr.bf16.mxu0 0
  %2418 = vmatpush1.bf16.msra.mxu0 0
  %2419 = vmatprep.subr.bf16.mxu0 0
  %2420 = vmatpush1.bf16.msra.mxu0 0
  %2421 = vmatprep.subr.bf16.mxu0 0
  %2422 = vmatpush1.bf16.msra.mxu0 0
  %2423 = vmatprep.subr.bf16.mxu0 0
  %2424 = vmatpush1.bf16.msra.mxu0 0
  %2425 = vmatprep.subr.bf16.mxu0 0
  %2426 = vmatpush1.bf16.msra.mxu0 0
  %2427 = vmatprep.subr.bf16.mxu0 0
  %2428 = vmatpush1.bf16.msra.mxu0 0
  %2429 = vmatprep.subr.bf16.mxu0 0
  %2430 = vmatpush1.bf16.msra.mxu0 0
  %2431 = vmatprep.subr.bf16.mxu0 0
  %2432 = vmatpush1.bf16.msra.mxu0 0
  %2433 = vmatprep.mubr.bf16.mxu0 0
  %2434 = vmatmul.mubr.bf16.gmra.mrb[0].mxu0 %v2399
  %v2435 = vpop.f32.mrb[0].mxu0
  %v2436 = vadd.f32 0.0, %v2435
  %v2437 = vpop.f32.mrb[0].mxu0
  %v2438 = vpop.f32.mrb[0].mxu0
  %v2439 = vpop.f32.mrb[0].mxu0
  %2440 = vdwg.mxu0
  %v2441 = vadd.f32 %v2395, %v2436
  %s2442 = scalar_lea.vmem %s35, 3
  %v2443 = vld [vmem:[%s2442] sm:$0x1]
  %v2444 = vunpack.c.l.bf16 %v2443
  %2445 = vrot.lane.b32.xlu0 %v2372, 32
  %v2446 = vpop.permute.xlu0 %2445
  %v2448 = vsel %vm120, %v2446, 0
  %2450 = vmatprep.subr.bf16.mxu0 0
  %2451 = vmatpush1.bf16.msra.mxu0 %v111
  %2452 = vmatprep.subr.bf16.mxu0 0
  %2453 = vmatpush1.bf16.msra.mxu0 %v112
  %2454 = vmatprep.subr.bf16.mxu0 0
  %2455 = vmatpush1.bf16.msra.mxu0 0
  %2456 = vmatprep.subr.bf16.mxu0 0
  %2457 = vmatpush1.bf16.msra.mxu0 0
  %2458 = vmatprep.subr.bf16.mxu0 0
  %2459 = vmatpush1.bf16.msra.mxu0 0
  %2460 = vmatprep.subr.bf16.mxu0 0
  %2461 = vmatpush1.bf16.msra.mxu0 0
  %2462 = vmatprep.subr.bf16.mxu0 0
  %2463 = vmatpush1.bf16.msra.mxu0 0
  %2464 = vmatprep.subr.bf16.mxu0 0
  %2465 = vmatpush1.bf16.msra.mxu0 0
  %2466 = vmatprep.subr.bf16.mxu0 0
  %2467 = vmatpush1.bf16.msra.mxu0 0
  %2468 = vmatprep.subr.bf16.mxu0 0
  %2469 = vmatpush1.bf16.msra.mxu0 0
  %2470 = vmatprep.subr.bf16.mxu0 0
  %2471 = vmatpush1.bf16.msra.mxu0 0
  %2472 = vmatprep.subr.bf16.mxu0 0
  %2473 = vmatpush1.bf16.msra.mxu0 0
  %2474 = vmatprep.subr.bf16.mxu0 0
  %2475 = vmatpush1.bf16.msra.mxu0 0
  %2476 = vmatprep.subr.bf16.mxu0 0
  %2477 = vmatpush1.bf16.msra.mxu0 0
  %2478 = vmatprep.subr.bf16.mxu0 0
  %2479 = vmatpush1.bf16.msra.mxu0 0
  %2480 = vmatprep.subr.bf16.mxu0 0
  %2481 = vmatpush1.bf16.msra.mxu0 0
  %2482 = vmatprep.mubr.bf16.mxu0 0
  %2483 = vmatmul.mubr.bf16.gmra.mrb[0].mxu0 %v2448
  %v2484 = vpop.f32.mrb[0].mxu0
  %v2485 = vadd.f32 0.0, %v2484
  %v2486 = vpop.f32.mrb[0].mxu0
  %v2487 = vpop.f32.mrb[0].mxu0
  %v2488 = vpop.f32.mrb[0].mxu0
  %2489 = vdwg.mxu0
  %v2490 = vadd.f32 %v2444, %v2485
  %v2491 = vxor.u32 %v2441, 2147483648
  %v2492 = vmul.f32 %v2491, 1.442695
  %v2493 = vpow.pop %v2492
  %v2494 = vadd.f32 %v2493, 1.0
  %v2495 = vrcp.pop %v2494
  %v2496 = vmul.f32 1.0, %v2495
  %v2497 = vtanh.pop %v2441
  %v2498 = vmul.f32 %v2496, %v2320
  %2500 = vrot.lane.b32.xlu0 %v2497, 64
  %v2501 = vpop.permute.xlu0 %2500
  %v2503 = vmul.f32 %v2496, %v2501
  %2505 = vrot.lane.b32.xlu0 %v2503, 32
  %v2506 = vpop.permute.xlu0 %2505
  %v2508 = vadd.f32 %v2498, %v2506
  %v2509 = vtanh.pop %v2508
  %2511 = vrot.lane.b32.xlu0 %v2509, 64
  %v2512 = vpop.permute.xlu0 %2511
  %v2514 = vmul.f32 %v2496, %v2512
  %v2515 = vxor.u32 %v2490, 2147483648
  %v2516 = vmul.f32 %v2515, 1.442695
  %v2517 = vpow.pop %v2516
  %v2518 = vadd.f32 %v2517, 1.0
  %v2519 = vrcp.pop %v2518
  %v2520 = vmul.f32 1.0, %v2519
  %v2521 = vtanh.pop %v2490
  %v2522 = vmul.f32 %v2520, %v2344
  %2524 = vrot.lane.b32.xlu0 %v2521, 64
  %v2525 = vpop.permute.xlu0 %2524
  %v2527 = vmul.f32 %v2520, %v2525
  %2529 = vrot.lane.b32.xlu0 %v2527, 32
  %v2530 = vpop.permute.xlu0 %2529
  %v2532 = vadd.f32 %v2522, %v2530
  %v2533 = vtanh.pop %v2532
  %2535 = vrot.lane.b32.xlu0 %v2533, 64
  %v2536 = vpop.permute.xlu0 %2535
  %v2538 = vmul.f32 %v2520, %v2536
  %v2539 = vpack.c.bf16 %v2514, %v2514
  %v2542 = vunpack.c.l.s4 1966171168
  %v2543 = vunpack.c.0.s8 %v2542
  %v2544 = vlaneseq
  %v2545 = vshrl.u32 %v2544, 7
  %v2546 = vsub.s32 %v2543, %v2545
  %v2547 = vrot.slane %v2539, %v2546
  %v2549 = vunpack.c.l.s4 1966171168
  %v2550 = vunpack.c.0.s8 %v2549
  %v2551 = vlaneseq
  %v2552 = vshrl.u32 %v2551, 7
  %v2553 = vsub.s32 %v2550, %v2552
  %v2554 = vrot.slane %v2547, %v2553
  %2555 = vrot.lane.b32.xlu0 %v2554, 32
  %v2556 = vpop.permute.xlu0 %2555
  %s2558 = scalar_lea.vmem %s3, 12
  %2559 = vst.msk [vmem:[%s2558] sm:$0x1] %vm302, %v2556
  %v2560 = vpack.c.bf16 %v2538, %v2538
  %v2563 = vunpack.c.l.s4 1966171168
  %v2564 = vunpack.c.0.s8 %v2563
  %v2565 = vlaneseq
  %v2566 = vshrl.u32 %v2565, 7
  %v2567 = vsub.s32 %v2564, %v2566
  %v2568 = vrot.slane %v2560, %v2567
  %v2570 = vunpack.c.l.s4 1966171168
  %v2571 = vunpack.c.0.s8 %v2570
  %v2572 = vlaneseq
  %v2573 = vshrl.u32 %v2572, 7
  %v2574 = vsub.s32 %v2571, %v2573
  %v2575 = vrot.slane %v2568, %v2574
  %2576 = vrot.lane.b32.xlu0 %v2575, 32
  %v2577 = vpop.permute.xlu0 %2576
  %s2579 = scalar_lea.vmem %s42, 3
  %2580 = vst.msk [vmem:[%s2579] sm:$0x1] %vm302, %v2577
  %s2581 = scalar_lea.vmem %s0, 13
  %v2582 = vld [vmem:[%s2581] sm:$0x1]
  %v2583 = vunpack.c.l.bf16 %v2582
  %2584 = vrot.lane.b32.xlu0 %v2539, 32
  %v2585 = vpop.permute.xlu0 %2584
  %v2587 = vsel %vm120, %v2585, 0
  %2589 = vmatprep.subr.bf16.mxu0 0
  %2590 = vmatpush1.bf16.msra.mxu0 %v108
  %2591 = vmatprep.subr.bf16.mxu0 0
  %2592 = vmatpush1.bf16.msra.mxu0 %v109
  %2593 = vmatprep.subr.bf16.mxu0 0
  %2594 = vmatpush1.bf16.msra.mxu0 0
  %2595 = vmatprep.subr.bf16.mxu0 0
  %2596 = vmatpush1.bf16.msra.mxu0 0
  %2597 = vmatprep.subr.bf16.mxu0 0
  %2598 = vmatpush1.bf16.msra.mxu0 0
  %2599 = vmatprep.subr.bf16.mxu0 0
  %2600 = vmatpush1.bf16.msra.mxu0 0
  %2601 = vmatprep.subr.bf16.mxu0 0
  %2602 = vmatpush1.bf16.msra.mxu0 0
  %2603 = vmatprep.subr.bf16.mxu0 0
  %2604 = vmatpush1.bf16.msra.mxu0 0
  %2605 = vmatprep.subr.bf16.mxu0 0
  %2606 = vmatpush1.bf16.msra.mxu0 0
  %2607 = vmatprep.subr.bf16.mxu0 0
  %2608 = vmatpush1.bf16.msra.mxu0 0
  %2609 = vmatprep.subr.bf16.mxu0 0
  %2610 = vmatpush1.bf16.msra.mxu0 0
  %2611 = vmatprep.subr.bf16.mxu0 0
  %2612 = vmatpush1.bf16.msra.mxu0 0
  %2613 = vmatprep.subr.bf16.mxu0 0
  %2614 = vmatpush1.bf16.msra.mxu0 0
  %2615 = vmatprep.subr.bf16.mxu0 0
  %2616 = vmatpush1.bf16.msra.mxu0 0
  %2617 = vmatprep.subr.bf16.mxu0 0
  %2618 = vmatpush1.bf16.msra.mxu0 0
  %2619 = vmatprep.subr.bf16.mxu0 0
  %2620 = vmatpush1.bf16.msra.mxu0 0
  %2621 = vmatprep.mubr.bf16.mxu0 0
  %2622 = vmatmul.mubr.bf16.gmra.mrb[0].mxu0 %v2587
  %v2623 = vpop.f32.mrb[0].mxu0
  %v2624 = vadd.f32 0.0, %v2623
  %v2625 = vpop.f32.mrb[0].mxu0
  %v2626 = vpop.f32.mrb[0].mxu0
  %v2627 = vpop.f32.mrb[0].mxu0
  %2628 = vdwg.mxu0
  %v2629 = vadd.f32 %v2583, %v2624
  %s2630 = scalar_lea.vmem %s35, 2
  %v2631 = vld [vmem:[%s2630] sm:$0x1]
  %v2632 = vunpack.c.l.bf16 %v2631
  %2633 = vrot.lane.b32.xlu0 %v2560, 32
  %v2634 = vpop.permute.xlu0 %2633
  %v2636 = vsel %vm120, %v2634, 0
  %2638 = vmatprep.subr.bf16.mxu0 0
  %2639 = vmatpush1.bf16.msra.mxu0 %v111
  %2640 = vmatprep.subr.bf16.mxu0 0
  %2641 = vmatpush1.bf16.msra.mxu0 %v112
  %2642 = vmatprep.subr.bf16.mxu0 0
  %2643 = vmatpush1.bf16.msra.mxu0 0
  %2644 = vmatprep.subr.bf16.mxu0 0
  %2645 = vmatpush1.bf16.msra.mxu0 0
  %2646 = vmatprep.subr.bf16.mxu0 0
  %2647 = vmatpush1.bf16.msra.mxu0 0
  %2648 = vmatprep.subr.bf16.mxu0 0
  %2649 = vmatpush1.bf16.msra.mxu0 0
  %2650 = vmatprep.subr.bf16.mxu0 0
  %2651 = vmatpush1.bf16.msra.mxu0 0
  %2652 = vmatprep.subr.bf16.mxu0 0
  %2653 = vmatpush1.bf16.msra.mxu0 0
  %2654 = vmatprep.subr.bf16.mxu0 0
  %2655 = vmatpush1.bf16.msra.mxu0 0
  %2656 = vmatprep.subr.bf16.mxu0 0
  %2657 = vmatpush1.bf16.msra.mxu0 0
  %2658 = vmatprep.subr.bf16.mxu0 0
  %2659 = vmatpush1.bf16.msra.mxu0 0
  %2660 = vmatprep.subr.bf16.mxu0 0
  %2661 = vmatpush1.bf16.msra.mxu0 0
  %2662 = vmatprep.subr.bf16.mxu0 0
  %2663 = vmatpush1.bf16.msra.mxu0 0
  %2664 = vmatprep.subr.bf16.mxu0 0
  %2665 = vmatpush1.bf16.msra.mxu0 0
  %2666 = vmatprep.subr.bf16.mxu0 0
  %2667 = vmatpush1.bf16.msra.mxu0 0
  %2668 = vmatprep.subr.bf16.mxu0 0
  %2669 = vmatpush1.bf16.msra.mxu0 0
  %2670 = vmatprep.mubr.bf16.mxu0 0
  %2671 = vmatmul.mubr.bf16.gmra.mrb[0].mxu0 %v2636
  %v2672 = vpop.f32.mrb[0].mxu0
  %v2673 = vadd.f32 0.0, %v2672
  %v2674 = vpop.f32.mrb[0].mxu0
  %v2675 = vpop.f32.mrb[0].mxu0
  %v2676 = vpop.f32.mrb[0].mxu0
  %2677 = vdwg.mxu0
  %v2678 = vadd.f32 %v2632, %v2673
  %v2679 = vxor.u32 %v2629, 2147483648
  %v2680 = vmul.f32 %v2679, 1.442695
  %v2681 = vpow.pop %v2680
  %v2682 = vadd.f32 %v2681, 1.0
  %v2683 = vrcp.pop %v2682
  %v2684 = vmul.f32 1.0, %v2683
  %v2685 = vtanh.pop %v2629
  %v2686 = vmul.f32 %v2684, %v2508
  %2688 = vrot.lane.b32.xlu0 %v2685, 64
  %v2689 = vpop.permute.xlu0 %2688
  %v2691 = vmul.f32 %v2684, %v2689
  %2693 = vrot.lane.b32.xlu0 %v2691, 32
  %v2694 = vpop.permute.xlu0 %2693
  %v2696 = vadd.f32 %v2686, %v2694
  %v2697 = vtanh.pop %v2696
  %2699 = vrot.lane.b32.xlu0 %v2697, 64
  %v2700 = vpop.permute.xlu0 %2699
  %v2702 = vmul.f32 %v2684, %v2700
  %v2703 = vxor.u32 %v2678, 2147483648
  %v2704 = vmul.f32 %v2703, 1.442695
  %v2705 = vpow.pop %v2704
  %v2706 = vadd.f32 %v2705, 1.0
  %v2707 = vrcp.pop %v2706
  %v2708 = vmul.f32 1.0, %v2707
  %v2709 = vtanh.pop %v2678
  %v2710 = vmul.f32 %v2708, %v2532
  %2712 = vrot.lane.b32.xlu0 %v2709, 64
  %v2713 = vpop.permute.xlu0 %2712
  %v2715 = vmul.f32 %v2708, %v2713
  %2717 = vrot.lane.b32.xlu0 %v2715, 32
  %v2718 = vpop.permute.xlu0 %2717
  %v2720 = vadd.f32 %v2710, %v2718
  %v2721 = vtanh.pop %v2720
  %2723 = vrot.lane.b32.xlu0 %v2721, 64
  %v2724 = vpop.permute.xlu0 %2723
  %v2726 = vmul.f32 %v2708, %v2724
  %v2727 = vpack.c.bf16 %v2702, %v2702
  %v2730 = vunpack.c.l.s4 1966171168
  %v2731 = vunpack.c.0.s8 %v2730
  %v2732 = vlaneseq
  %v2733 = vshrl.u32 %v2732, 7
  %v2734 = vsub.s32 %v2731, %v2733
  %v2735 = vrot.slane %v2727, %v2734
  %v2737 = vunpack.c.l.s4 1966171168
  %v2738 = vunpack.c.0.s8 %v2737
  %v2739 = vlaneseq
  %v2740 = vshrl.u32 %v2739, 7
  %v2741 = vsub.s32 %v2738, %v2740
  %v2742 = vrot.slane %v2735, %v2741
  %2743 = vrot.lane.b32.xlu0 %v2742, 32
  %v2744 = vpop.permute.xlu0 %2743
  %s2746 = scalar_lea.vmem %s3, 13
  %2747 = vst.msk [vmem:[%s2746] sm:$0x1] %vm302, %v2744
  %v2748 = vpack.c.bf16 %v2726, %v2726
  %v2751 = vunpack.c.l.s4 1966171168
  %v2752 = vunpack.c.0.s8 %v2751
  %v2753 = vlaneseq
  %v2754 = vshrl.u32 %v2753, 7
  %v2755 = vsub.s32 %v2752, %v2754
  %v2756 = vrot.slane %v2748, %v2755
  %v2758 = vunpack.c.l.s4 1966171168
  %v2759 = vunpack.c.0.s8 %v2758
  %v2760 = vlaneseq
  %v2761 = vshrl.u32 %v2760, 7
  %v2762 = vsub.s32 %v2759, %v2761
  %v2763 = vrot.slane %v2756, %v2762
  %2764 = vrot.lane.b32.xlu0 %v2763, 32
  %v2765 = vpop.permute.xlu0 %2764
  %s2767 = scalar_lea.vmem %s42, 2
  %2768 = vst.msk [vmem:[%s2767] sm:$0x1] %vm302, %v2765
  %s2769 = scalar_lea.vmem %s0, 14
  %v2770 = vld [vmem:[%s2769] sm:$0x1]
  %v2771 = vunpack.c.l.bf16 %v2770
  %2772 = vrot.lane.b32.xlu0 %v2727, 32
  %v2773 = vpop.permute.xlu0 %2772
  %v2775 = vsel %vm120, %v2773, 0
  %2777 = vmatprep.subr.bf16.mxu0 0
  %2778 = vmatpush1.bf16.msra.mxu0 %v108
  %2779 = vmatprep.subr.bf16.mxu0 0
  %2780 = vmatpush1.bf16.msra.mxu0 %v109
  %2781 = vmatprep.subr.bf16.mxu0 0
  %2782 = vmatpush1.bf16.msra.mxu0 0
  %2783 = vmatprep.subr.bf16.mxu0 0
  %2784 = vmatpush1.bf16.msra.mxu0 0
  %2785 = vmatprep.subr.bf16.mxu0 0
  %2786 = vmatpush1.bf16.msra.mxu0 0
  %2787 = vmatprep.subr.bf16.mxu0 0
  %2788 = vmatpush1.bf16.msra.mxu0 0
  %2789 = vmatprep.subr.bf16.mxu0 0
  %2790 = vmatpush1.bf16.msra.mxu0 0
  %2791 = vmatprep.subr.bf16.mxu0 0
  %2792 = vmatpush1.bf16.msra.mxu0 0
  %2793 = vmatprep.subr.bf16.mxu0 0
  %2794 = vmatpush1.bf16.msra.mxu0 0
  %2795 = vmatprep.subr.bf16.mxu0 0
  %2796 = vmatpush1.bf16.msra.mxu0 0
  %2797 = vmatprep.subr.bf16.mxu0 0
  %2798 = vmatpush1.bf16.msra.mxu0 0
  %2799 = vmatprep.subr.bf16.mxu0 0
  %2800 = vmatpush1.bf16.msra.mxu0 0
  %2801 = vmatprep.subr.bf16.mxu0 0
  %2802 = vmatpush1.bf16.msra.mxu0 0
  %2803 = vmatprep.subr.bf16.mxu0 0
  %2804 = vmatpush1.bf16.msra.mxu0 0
  %2805 = vmatprep.subr.bf16.mxu0 0
  %2806 = vmatpush1.bf16.msra.mxu0 0
  %2807 = vmatprep.subr.bf16.mxu0 0
  %2808 = vmatpush1.bf16.msra.mxu0 0
  %2809 = vmatprep.mubr.bf16.mxu0 0
  %2810 = vmatmul.mubr.bf16.gmra.mrb[0].mxu0 %v2775
  %v2811 = vpop.f32.mrb[0].mxu0
  %v2812 = vadd.f32 0.0, %v2811
  %v2813 = vpop.f32.mrb[0].mxu0
  %v2814 = vpop.f32.mrb[0].mxu0
  %v2815 = vpop.f32.mrb[0].mxu0
  %2816 = vdwg.mxu0
  %v2817 = vadd.f32 %v2771, %v2812
  %s2818 = scalar_lea.vmem %s35, 1
  %v2819 = vld [vmem:[%s2818] sm:$0x1]
  %v2820 = vunpack.c.l.bf16 %v2819
  %2821 = vrot.lane.b32.xlu0 %v2748, 32
  %v2822 = vpop.permute.xlu0 %2821
  %v2824 = vsel %vm120, %v2822, 0
  %2826 = vmatprep.subr.bf16.mxu0 0
  %2827 = vmatpush1.bf16.msra.mxu0 %v111
  %2828 = vmatprep.subr.bf16.mxu0 0
  %2829 = vmatpush1.bf16.msra.mxu0 %v112
  %2830 = vmatprep.subr.bf16.mxu0 0
  %2831 = vmatpush1.bf16.msra.mxu0 0
  %2832 = vmatprep.subr.bf16.mxu0 0
  %2833 = vmatpush1.bf16.msra.mxu0 0
  %2834 = vmatprep.subr.bf16.mxu0 0
  %2835 = vmatpush1.bf16.msra.mxu0 0
  %2836 = vmatprep.subr.bf16.mxu0 0
  %2837 = vmatpush1.bf16.msra.mxu0 0
  %2838 = vmatprep.subr.bf16.mxu0 0
  %2839 = vmatpush1.bf16.msra.mxu0 0
  %2840 = vmatprep.subr.bf16.mxu0 0
  %2841 = vmatpush1.bf16.msra.mxu0 0
  %2842 = vmatprep.subr.bf16.mxu0 0
  %2843 = vmatpush1.bf16.msra.mxu0 0
  %2844 = vmatprep.subr.bf16.mxu0 0
  %2845 = vmatpush1.bf16.msra.mxu0 0
  %2846 = vmatprep.subr.bf16.mxu0 0
  %2847 = vmatpush1.bf16.msra.mxu0 0
  %2848 = vmatprep.subr.bf16.mxu0 0
  %2849 = vmatpush1.bf16.msra.mxu0 0
  %2850 = vmatprep.subr.bf16.mxu0 0
  %2851 = vmatpush1.bf16.msra.mxu0 0
  %2852 = vmatprep.subr.bf16.mxu0 0
  %2853 = vmatpush1.bf16.msra.mxu0 0
  %2854 = vmatprep.subr.bf16.mxu0 0
  %2855 = vmatpush1.bf16.msra.mxu0 0
  %2856 = vmatprep.subr.bf16.mxu0 0
  %2857 = vmatpush1.bf16.msra.mxu0 0
  %2858 = vmatprep.mubr.bf16.mxu0 0
  %2859 = vmatmul.mubr.bf16.gmra.mrb[0].mxu0 %v2824
  %v2860 = vpop.f32.mrb[0].mxu0
  %v2861 = vadd.f32 0.0, %v2860
  %v2862 = vpop.f32.mrb[0].mxu0
  %v2863 = vpop.f32.mrb[0].mxu0
  %v2864 = vpop.f32.mrb[0].mxu0
  %2865 = vdwg.mxu0
  %v2866 = vadd.f32 %v2820, %v2861
  %v2867 = vxor.u32 %v2817, 2147483648
  %v2868 = vmul.f32 %v2867, 1.442695
  %v2869 = vpow.pop %v2868
  %v2870 = vadd.f32 %v2869, 1.0
  %v2871 = vrcp.pop %v2870
  %v2872 = vmul.f32 1.0, %v2871
  %v2873 = vtanh.pop %v2817
  %v2874 = vmul.f32 %v2872, %v2696
  %2876 = vrot.lane.b32.xlu0 %v2873, 64
  %v2877 = vpop.permute.xlu0 %2876
  %v2879 = vmul.f32 %v2872, %v2877
  %2881 = vrot.lane.b32.xlu0 %v2879, 32
  %v2882 = vpop.permute.xlu0 %2881
  %v2884 = vadd.f32 %v2874, %v2882
  %v2885 = vtanh.pop %v2884
  %2887 = vrot.lane.b32.xlu0 %v2885, 64
  %v2888 = vpop.permute.xlu0 %2887
  %v2890 = vmul.f32 %v2872, %v2888
  %v2891 = vxor.u32 %v2866, 2147483648
  %v2892 = vmul.f32 %v2891, 1.442695
  %v2893 = vpow.pop %v2892
  %v2894 = vadd.f32 %v2893, 1.0
  %v2895 = vrcp.pop %v2894
  %v2896 = vmul.f32 1.0, %v2895
  %v2897 = vtanh.pop %v2866
  %v2898 = vmul.f32 %v2896, %v2720
  %2900 = vrot.lane.b32.xlu0 %v2897, 64
  %v2901 = vpop.permute.xlu0 %2900
  %v2903 = vmul.f32 %v2896, %v2901
  %2905 = vrot.lane.b32.xlu0 %v2903, 32
  %v2906 = vpop.permute.xlu0 %2905
  %v2908 = vadd.f32 %v2898, %v2906
  %v2909 = vtanh.pop %v2908
  %2911 = vrot.lane.b32.xlu0 %v2909, 64
  %v2912 = vpop.permute.xlu0 %2911
  %v2914 = vmul.f32 %v2896, %v2912
  %v2915 = vpack.c.bf16 %v2890, %v2890
  %v2918 = vunpack.c.l.s4 1966171168
  %v2919 = vunpack.c.0.s8 %v2918
  %v2920 = vlaneseq
  %v2921 = vshrl.u32 %v2920, 7
  %v2922 = vsub.s32 %v2919, %v2921
  %v2923 = vrot.slane %v2915, %v2922
  %v2925 = vunpack.c.l.s4 1966171168
  %v2926 = vunpack.c.0.s8 %v2925
  %v2927 = vlaneseq
  %v2928 = vshrl.u32 %v2927, 7
  %v2929 = vsub.s32 %v2926, %v2928
  %v2930 = vrot.slane %v2923, %v2929
  %2931 = vrot.lane.b32.xlu0 %v2930, 32
  %v2932 = vpop.permute.xlu0 %2931
  %s2934 = scalar_lea.vmem %s3, 14
  %2935 = vst.msk [vmem:[%s2934] sm:$0x1] %vm302, %v2932
  %v2936 = vpack.c.bf16 %v2914, %v2914
  %v2939 = vunpack.c.l.s4 1966171168
  %v2940 = vunpack.c.0.s8 %v2939
  %v2941 = vlaneseq
  %v2942 = vshrl.u32 %v2941, 7
  %v2943 = vsub.s32 %v2940, %v2942
  %v2944 = vrot.slane %v2936, %v2943
  %v2946 = vunpack.c.l.s4 1966171168
  %v2947 = vunpack.c.0.s8 %v2946
  %v2948 = vlaneseq
  %v2949 = vshrl.u32 %v2948, 7
  %v2950 = vsub.s32 %v2947, %v2949
  %v2951 = vrot.slane %v2944, %v2950
  %2952 = vrot.lane.b32.xlu0 %v2951, 32
  %v2953 = vpop.permute.xlu0 %2952
  %s2955 = scalar_lea.vmem %s42, 1
  %2956 = vst.msk [vmem:[%s2955] sm:$0x1] %vm302, %v2953
  %s2957 = scalar_lea.vmem %s0, 15
  %v2958 = vld [vmem:[%s2957] sm:$0x1]
  %v2959 = vunpack.c.l.bf16 %v2958
  %2960 = vrot.lane.b32.xlu0 %v2915, 32
  %v2961 = vpop.permute.xlu0 %2960
  %v2963 = vsel %vm120, %v2961, 0
  %2965 = vmatprep.subr.bf16.mxu0 0
  %2966 = vmatpush1.bf16.msra.mxu0 %v108
  %2967 = vmatprep.subr.bf16.mxu0 0
  %2968 = vmatpush1.bf16.msra.mxu0 %v109
  %2969 = vmatprep.subr.bf16.mxu0 0
  %2970 = vmatpush1.bf16.msra.mxu0 0
  %2971 = vmatprep.subr.bf16.mxu0 0
  %2972 = vmatpush1.bf16.msra.mxu0 0
  %2973 = vmatprep.subr.bf16.mxu0 0
  %2974 = vmatpush1.bf16.msra.mxu0 0
  %2975 = vmatprep.subr.bf16.mxu0 0
  %2976 = vmatpush1.bf16.msra.mxu0 0
  %2977 = vmatprep.subr.bf16.mxu0 0
  %2978 = vmatpush1.bf16.msra.mxu0 0
  %2979 = vmatprep.subr.bf16.mxu0 0
  %2980 = vmatpush1.bf16.msra.mxu0 0
  %2981 = vmatprep.subr.bf16.mxu0 0
  %2982 = vmatpush1.bf16.msra.mxu0 0
  %2983 = vmatprep.subr.bf16.mxu0 0
  %2984 = vmatpush1.bf16.msra.mxu0 0
  %2985 = vmatprep.subr.bf16.mxu0 0
  %2986 = vmatpush1.bf16.msra.mxu0 0
  %2987 = vmatprep.subr.bf16.mxu0 0
  %2988 = vmatpush1.bf16.msra.mxu0 0
  %2989 = vmatprep.subr.bf16.mxu0 0
  %2990 = vmatpush1.bf16.msra.mxu0 0
  %2991 = vmatprep.subr.bf16.mxu0 0
  %2992 = vmatpush1.bf16.msra.mxu0 0
  %2993 = vmatprep.subr.bf16.mxu0 0
  %2994 = vmatpush1.bf16.msra.mxu0 0
  %2995 = vmatprep.subr.bf16.mxu0 0
  %2996 = vmatpush1.bf16.msra.mxu0 0
  %2997 = vmatprep.mubr.bf16.mxu0 0
  %2998 = vmatmul.mubr.bf16.gmra.mrb[0].mxu0 %v2963
  %v2999 = vpop.f32.mrb[0].mxu0
  %v3000 = vadd.f32 0.0, %v2999
  %v3001 = vpop.f32.mrb[0].mxu0
  %v3002 = vpop.f32.mrb[0].mxu0
  %v3003 = vpop.f32.mrb[0].mxu0
  %3004 = vdwg.mxu0
  %v3005 = vadd.f32 %v2959, %v3000
  %v3006 = vld [vmem:[%s35] sm:$0x1]
  %v3007 = vunpack.c.l.bf16 %v3006
  %3008 = vrot.lane.b32.xlu0 %v2936, 32
  %v3009 = vpop.permute.xlu0 %3008
  %v3011 = vsel %vm120, %v3009, 0
  %3013 = vmatprep.subr.bf16.mxu0 0
  %3014 = vmatpush1.bf16.msra.mxu0 %v111
  %3015 = vmatprep.subr.bf16.mxu0 0
  %3016 = vmatpush1.bf16.msra.mxu0 %v112
  %3017 = vmatprep.subr.bf16.mxu0 0
  %3018 = vmatpush1.bf16.msra.mxu0 0
  %3019 = vmatprep.subr.bf16.mxu0 0
  %3020 = vmatpush1.bf16.msra.mxu0 0
  %3021 = vmatprep.subr.bf16.mxu0 0
  %3022 = vmatpush1.bf16.msra.mxu0 0
  %3023 = vmatprep.subr.bf16.mxu0 0
  %3024 = vmatpush1.bf16.msra.mxu0 0
  %3025 = vmatprep.subr.bf16.mxu0 0
  %3026 = vmatpush1.bf16.msra.mxu0 0
  %3027 = vmatprep.subr.bf16.mxu0 0
  %3028 = vmatpush1.bf16.msra.mxu0 0
  %3029 = vmatprep.subr.bf16.mxu0 0
  %3030 = vmatpush1.bf16.msra.mxu0 0
  %3031 = vmatprep.subr.bf16.mxu0 0
  %3032 = vmatpush1.bf16.msra.mxu0 0
  %3033 = vmatprep.subr.bf16.mxu0 0
  %3034 = vmatpush1.bf16.msra.mxu0 0
  %3035 = vmatprep.subr.bf16.mxu0 0
  %3036 = vmatpush1.bf16.msra.mxu0 0
  %3037 = vmatprep.subr.bf16.mxu0 0
  %3038 = vmatpush1.bf16.msra.mxu0 0
  %3039 = vmatprep.subr.bf16.mxu0 0
  %3040 = vmatpush1.bf16.msra.mxu0 0
  %3041 = vmatprep.subr.bf16.mxu0 0
  %3042 = vmatpush1.bf16.msra.mxu0 0
  %3043 = vmatprep.subr.bf16.mxu0 0
  %3044 = vmatpush1.bf16.msra.mxu0 0
  %3045 = vmatprep.mubr.bf16.mxu0 0
  %3046 = vmatmul.mubr.bf16.gmra.mrb[0].mxu0 %v3011
  %v3047 = vpop.f32.mrb[0].mxu0
  %v3048 = vadd.f32 0.0, %v3047
  %v3049 = vpop.f32.mrb[0].mxu0
  %v3050 = vpop.f32.mrb[0].mxu0
  %v3051 = vpop.f32.mrb[0].mxu0
  %3052 = vdwg.mxu0
  %v3053 = vadd.f32 %v3007, %v3048
  %v3054 = vxor.u32 %v3005, 2147483648
  %v3055 = vmul.f32 %v3054, 1.442695
  %v3056 = vpow.pop %v3055
  %v3057 = vadd.f32 %v3056, 1.0
  %v3058 = vrcp.pop %v3057
  %v3059 = vmul.f32 1.0, %v3058
  %v3060 = vtanh.pop %v3005
  %v3061 = vmul.f32 %v3059, %v2884
  %3063 = vrot.lane.b32.xlu0 %v3060, 64
  %v3064 = vpop.permute.xlu0 %3063
  %v3066 = vmul.f32 %v3059, %v3064
  %3068 = vrot.lane.b32.xlu0 %v3066, 32
  %v3069 = vpop.permute.xlu0 %3068
  %v3071 = vadd.f32 %v3061, %v3069
  %v3072 = vtanh.pop %v3071
  %3074 = vrot.lane.b32.xlu0 %v3072, 64
  %v3075 = vpop.permute.xlu0 %3074
  %v3077 = vmul.f32 %v3059, %v3075
  %v3078 = vxor.u32 %v3053, 2147483648
  %v3079 = vmul.f32 %v3078, 1.442695
  %v3080 = vpow.pop %v3079
  %v3081 = vadd.f32 %v3080, 1.0
  %v3082 = vrcp.pop %v3081
  %v3083 = vmul.f32 1.0, %v3082
  %v3084 = vtanh.pop %v3053
  %v3085 = vmul.f32 %v3083, %v2908
  %3087 = vrot.lane.b32.xlu0 %v3084, 64
  %v3088 = vpop.permute.xlu0 %3087
  %v3090 = vmul.f32 %v3083, %v3088
  %3092 = vrot.lane.b32.xlu0 %v3090, 32
  %v3093 = vpop.permute.xlu0 %3092
  %v3095 = vadd.f32 %v3085, %v3093
  %v3096 = vtanh.pop %v3095
  %3098 = vrot.lane.b32.xlu0 %v3096, 64
  %v3099 = vpop.permute.xlu0 %3098
  %v3101 = vmul.f32 %v3083, %v3099
  %v3102 = vpack.c.bf16 %v3077, %v3077
  %v3105 = vunpack.c.l.s4 1966171168
  %v3106 = vunpack.c.0.s8 %v3105
  %v3107 = vlaneseq
  %v3108 = vshrl.u32 %v3107, 7
  %v3109 = vsub.s32 %v3106, %v3108
  %v3110 = vrot.slane %v3102, %v3109
  %v3112 = vunpack.c.l.s4 1966171168
  %v3113 = vunpack.c.0.s8 %v3112
  %v3114 = vlaneseq
  %v3115 = vshrl.u32 %v3114, 7
  %v3116 = vsub.s32 %v3113, %v3115
  %v3117 = vrot.slane %v3110, %v3116
  %3118 = vrot.lane.b32.xlu0 %v3117, 32
  %v3119 = vpop.permute.xlu0 %3118
  %s3121 = scalar_lea.vmem %s3, 15
  %3122 = vst.msk [vmem:[%s3121] sm:$0x1] %vm302, %v3119
  %v3123 = vpack.c.bf16 %v3101, %v3101
  %v3126 = vunpack.c.l.s4 1966171168
  %v3127 = vunpack.c.0.s8 %v3126
  %v3128 = vlaneseq
  %v3129 = vshrl.u32 %v3128, 7
  %v3130 = vsub.s32 %v3127, %v3129
  %v3131 = vrot.slane %v3123, %v3130
  %v3133 = vunpack.c.l.s4 1966171168
  %v3134 = vunpack.c.0.s8 %v3133
  %v3135 = vlaneseq
  %v3136 = vshrl.u32 %v3135, 7
  %v3137 = vsub.s32 %v3134, %v3136
  %v3138 = vrot.slane %v3131, %v3137
  %3139 = vrot.lane.b32.xlu0 %v3138, 32
  %v3140 = vpop.permute.xlu0 %3139
  %3142 = vst.msk [vmem:[%s42] sm:$0x1] %vm302, %v3140
  %v3145 = vunpack.c.l.s4 1983009808
  %v3146 = vunpack.c.0.s8 %v3145
  %v3147 = vlaneseq
  %v3148 = vshrl.u32 %v3147, 7
  %v3149 = vsub.s32 %v3146, %v3148
  %v3150 = vrot.slane %v3077, %v3149
  %3151 = vrot.lane.b32.xlu0 %v3150, 32
  %v3152 = vpop.permute.xlu0 %3151
  %vm3154 = vcmask 254976
  %3155 = vst.msk [vmem:[#allocation4] sm:$0x3] %vm3154, %v3152
  %v3158 = vunpack.c.l.s4 1983009808
  %v3159 = vunpack.c.0.s8 %v3158
  %v3160 = vlaneseq
  %v3161 = vshrl.u32 %v3160, 7
  %v3162 = vsub.s32 %v3159, %v3161
  %v3163 = vrot.slane %v3071, %v3162
  %3164 = vrot.lane.b32.xlu0 %v3163, 96
  %v3165 = vpop.permute.xlu0 %3164
  %3167 = vst.msk [vmem:[#allocation5] sm:$0x3] %vm3154, %v3165
  %v3170 = vunpack.c.l.s4 1983009808
  %v3171 = vunpack.c.0.s8 %v3170
  %v3172 = vlaneseq
  %v3173 = vshrl.u32 %v3172, 7
  %v3174 = vsub.s32 %v3171, %v3173
  %v3175 = vrot.slane %v3101, %v3174
  %3176 = vrot.lane.b32.xlu0 %v3175, 32
  %v3177 = vpop.permute.xlu0 %3176
  %3179 = vst.msk [vmem:[#allocation6] sm:$0x3] %vm3154, %v3177
  %v3182 = vunpack.c.l.s4 1983009808
  %v3183 = vunpack.c.0.s8 %v3182
  %v3184 = vlaneseq
  %v3185 = vshrl.u32 %v3184, 7
  %v3186 = vsub.s32 %v3183, %v3185
  %v3187 = vrot.slane %v3095, %v3186
  %3188 = vrot.lane.b32.xlu0 %v3187, 96
  %v3189 = vpop.permute.xlu0 %3188
  %3191 = vst.msk [vmem:[#allocation7] sm:$0x3] %vm3154, %v3189
  %s3192 = ssub.s32 0, 0
  %s3193 = smul.u32 16, %s3192
  %p3194 = scmp.lt.s32.totalorder %s3193, 15
  %s3195 = scalar_select %p3194, %s3193, 15
  %s3196 = scalar_lea.vmem %s4, %s3195
  // Predicated region
  $region48: #{model_forward.2} parent=0 // pred_check
    _
  $region49: #{model_forward.2} parent=0 // pred_check_branch
    %3198 = sbr.rel (0) target = $region51
  $region50: #{model_forward.2} parent=0 // pred_region
    _
  $region51: #{model_forward.2} parent=0 // pred_fallthru
    _
  // Predicated region
  $region52: #{model_forward.2} parent=0 // pred_check
    _
  $region53: #{model_forward.2} parent=0 // pred_check_branch
    %3200 = sbr.rel (0) target = $region55
  $region54: #{model_forward.2} parent=0 // pred_region
    %s3201 = ssub.s32 0, 0
    %s3202 = smul.u32 16, %s3201
  $region55: #{model_forward.2} parent=0 // pred_fallthru
    _
  // Predicated region
  $region56: #{model_forward.2} parent=0 // pred_check
    _
  $region57: #{model_forward.2} parent=0 // pred_check_branch
    %3204 = sbr.rel (0) target = $region59
  $region58: #{model_forward.2} parent=0 // pred_region
    _
  $region59: #{model_forward.2} parent=0 // pred_fallthru
    _
  // Predicated region
  $region60: #{model_forward.2} parent=0 // pred_check
    _
  $region61: #{model_forward.2} parent=0 // pred_check_branch
    %3206 = sbr.rel (0) target = $region63
  $region62: #{model_forward.2} parent=0 // pred_region
    %s3207 = ssub.s32 0, 0
    %s3208 = smul.u32 16, %s3207
    %p3209 = scmp.lt.s32.totalorder %s3208, 15
    %s3210 = scalar_select %p3209, %s3208, 15
    %s3211 = scalar_lea.vmem %s4, %s3210
  $region63: #{model_forward.2} parent=0 // pred_fallthru
    _
  %3212 = vsyncmov [#allocation3]
  %s3213 = vpop.sfrf %3212
  %p3214 = scmp.eq.s32.totalorder %s3213, 0
  %p3215 = pneg %p3214
  %3217 = shalt.err (%p3215)

</llo_original>
